<compile_context>
chip_gen: v5e
topology: v5e:2x2
jax: 0.10.0
libtpu: 0.0.40
codegen_flags: <defaults>
</compile_context>

<pallas_src>
import jax
import jax.numpy as jnp
from jax import lax
from jax.experimental import pallas as pl
from jax.experimental.pallas import tpu as pltpu


# ------------------------------ configuration ------------------------------

_TILE_M = 512                       # rows per grid step for the 1x1 kernels
_COMPILER_PARAMS = pltpu.CompilerParams(
    dimension_semantics=("parallel",),
    vmem_limit_bytes=64 * 1024 * 1024,
)


def _round_up(x, m):
    return (x + m - 1) // m * m


# ------------------------------ Mish variants -------------------------------

def _mish_kernel_f32(y):
    """Cheap Mish (kernel-only): y * tanh(softplus(y)) == y*(e^2+2e)/(e^2+2e+2).

    Single EUP exp + approx reciprocal; clamp + where guard avoids exp overflow
    for large y (where Mish(y) ~= y anyway)."""
    e = jnp.exp(jnp.minimum(y, 20.0))
    n = e * (e + 2.0)
    return jnp.where(y > 20.0, y, y * n * pl.reciprocal(n + 2.0, approx=True))


def _mish_ref(y):
    # Reference (overflow-safe) Mish, used outside Pallas only.
    return y * jnp.tanh(jnp.logaddexp(y, 0.0))


# ------------------------------ 1x1 kernels ---------------------------------
# Activations are 2-D (M, C) matrices (M = N*H*W) in bf16.  The M axis is the
# streamed/parallel grid axis; weights (BN scale pre-folded) and f32 bias stay
# resident (index_map always returns block 0).

def _pw_kernel(x_ref, w_ref, b_ref, o_ref):
    y = jnp.dot(x_ref[...], w_ref[...], preferred_element_type=jnp.float32)
    o_ref[...] = _mish_kernel_f32(y + b_ref[...]).astype(o_ref.dtype)


def _split_kernel(x_ref, w0_ref, b0_ref, w1_ref, b1_ref, o0_ref, o1_ref):
    # split_conv0 and split_conv1 fused: the input tile is read from HBM once.
    x = x_ref[...]
    y0 = jnp.dot(x, w0_ref[...], preferred_element_type=jnp.float32)
    o0_ref[...] = _mish_kernel_f32(y0 + b0_ref[...]).astype(o0_ref.dtype)
    y1 = jnp.dot(x, w1_ref[...], preferred_element_type=jnp.float32)
    o1_ref[...] = _mish_kernel_f32(y1 + b1_ref[...]).astype(o1_ref.dtype)


def _concat_pw_kernel(x1_ref, x0_ref, w1_ref, w0_ref, b_ref, o_ref):
    # concat([x1, x0], C) followed by a 1x1 conv == x1 @ W_top + x0 @ W_bot.
    y = (jnp.dot(x1_ref[...], w1_ref[...], preferred_element_type=jnp.float32)
         + jnp.dot(x0_ref[...], w0_ref[...], preferred_element_type=jnp.float32))
    o_ref[...] = _mish_kernel_f32(y + b_ref[...]).astype(o_ref.dtype)


def _row_tiled_call(kernel, streamed, resident, out_channels, m):
    """Run `kernel` with (m, C) activations tiled over rows.

    streamed : list of (m, C_i) arrays, tiled over the row axis (double-buffered
               by the Pallas pipeline).
    resident : weights / biases whose block == full array (stay in VMEM).
    out_channels : channel count of each bf16 output, shape (m, C_out).
    """
    tm = min(_TILE_M, _round_up(m, 8))
    m_pad = _round_up(m, tm)
    grid = (m_pad // tm,)

    ins, in_specs = [], []
    for a in streamed:
        a = a.astype(jnp.bfloat16)
        if m_pad != m:
            a = jnp.pad(a, ((0, m_pad - m), (0, 0)))
        ins.append(a)
        in_specs.append(pl.BlockSpec((tm, a.shape[1]), lambda i: (i, 0)))
    for r in resident:
        ins.append(r)
        in_specs.append(pl.BlockSpec(r.shape, lambda i, nd=r.ndim: (0,) * nd))

    out_shape = tuple(jax.ShapeDtypeStruct((m_pad, c), jnp.bfloat16)
                      for c in out_channels)
    out_specs = tuple(pl.BlockSpec((tm, c), lambda i: (i, 0))
                      for c in out_channels)

    outs = pl.pallas_call(
        kernel,
        grid=grid,
        in_specs=in_specs,
        out_specs=out_specs,
        out_shape=out_shape,
        compiler_params=_COMPILER_PARAMS,
    )(*ins)
    outs = tuple(o[:m] for o in outs)
    return outs if len(outs) > 1 else outs[0]


# ------------------------------ 3x3 kernels ---------------------------------
# No HBM im2col: grid over images, the nine taps are sliced out of the padded
# (or phase-decomposed) VMEM block and accumulated through nine MXU matmuls.

def conv3x3_stride1_res(x_nhwc, wf, bias, residual_m):
    """3x3 / stride 1 / pad 1 ConvModule followed by residual add (ResBlock)."""
    N, H, W, Cin = x_nhwc.shape
    Cout = wf.shape[-1]
    Ho, Wo = H, W
    Hp, Wp = H + 2, W + 2
    xp = jnp.pad(x_nhwc.astype(jnp.bfloat16), ((0, 0), (1, 1), (1, 1), (0, 0)))
    res = residual_m.reshape(N, Ho * Wo, Cout).astype(jnp.bfloat16)

    def kernel(x_ref, w_ref, b_ref, r_ref, o_ref):
        x = x_ref[0]                                      # (Hp, Wp, Cin) bf16
        acc = jnp.zeros((Ho * Wo, Cout), jnp.float32)
        t = 0
        for dy in range(3):
            for dx in range(3):
                tap = x[dy:dy + Ho, dx:dx + Wo, :].reshape(Ho * Wo, Cin)
                acc += jnp.dot(tap, w_ref[t],
                               preferred_element_type=jnp.float32)
                t += 1
        y = _mish_kernel_f32(acc + b_ref[...])
        o_ref[0] = (r_ref[0].astype(jnp.float32) + y).astype(o_ref.dtype)

    out = pl.pallas_call(
        kernel,
        grid=(N,),
        in_specs=[
            pl.BlockSpec((1, Hp, Wp, Cin), lambda n: (n, 0, 0, 0)),
            pl.BlockSpec(wf.shape, lambda n: (0, 0, 0)),
            pl.BlockSpec(bias.shape, lambda n: (0, 0)),
            pl.BlockSpec((1, Ho * Wo, Cout), lambda n: (n, 0, 0)),
        ],
        out_specs=pl.BlockSpec((1, Ho * Wo, Cout), lambda n: (n, 0, 0)),
        out_shape=jax.ShapeDtypeStruct((N, Ho * Wo, Cout), jnp.bfloat16),
        compiler_params=_COMPILER_PARAMS,
    )(xp, wf, bias, res)
    return out.reshape(N * Ho * Wo, Cout)


def conv3x3_stride2(x_nhwc, wf, bias):
    """3x3 / stride 2 / pad 1 ConvModule (the CSP downsample conv)."""
    N, H, W, Cin = x_nhwc.shape
    Cout = wf.shape[-1]
    Ho = (H - 1) // 2 + 1
    Wo = (W - 1) // 2 + 1
    Hp = _round_up(H + 2, 2)
    Wp = _round_up(W + 2, 2)
    xp = jnp.pad(x_nhwc.astype(jnp.bfloat16),
                 ((0, 0), (1, Hp - H - 1), (1, Wp - W - 1), (0, 0)))
    Hq, Wq = Hp // 2, Wp // 2
    # space-to-depth phase decomposition: every stride-2 tap becomes a
    # unit-stride window on one of the four phase planes.
    phases = xp.reshape(N, Hq, 2, Wq, 2, Cin).transpose(0, 2, 4, 1, 3, 5)

    def kernel(p_ref, w_ref, b_ref, o_ref):
        p = p_ref[0]                                      # (2, 2, Hq, Wq, Cin)
        acc = jnp.zeros((Ho * Wo, Cout), jnp.float32)
        t = 0
        for dy in range(3):
            for dx in range(3):
                tap = p[dy % 2, dx % 2,
                        dy // 2:dy // 2 + Ho,
                        dx // 2:dx // 2 + Wo, :].reshape(Ho * Wo, Cin)
                acc += jnp.dot(tap, w_ref[t],
                               preferred_element_type=jnp.float32)
                t += 1
        o_ref[0] = _mish_kernel_f32(acc + b_ref[...]).astype(o_ref.dtype)

    out = pl.pallas_call(
        kernel,
        grid=(N,),
        in_specs=[
            pl.BlockSpec((1, 2, 2, Hq, Wq, Cin), lambda n: (n, 0, 0, 0, 0, 0)),
            pl.BlockSpec(wf.shape, lambda n: (0, 0, 0)),
            pl.BlockSpec(bias.shape, lambda n: (0, 0)),
        ],
        out_specs=pl.BlockSpec((1, Ho * Wo, Cout), lambda n: (n, 0, 0)),
        out_shape=jax.ShapeDtypeStruct((N, Ho * Wo, Cout), jnp.bfloat16),
        compiler_params=_COMPILER_PARAMS,
    )(phases, wf, bias)
    return out.reshape(N, Ho, Wo, Cout)


# --------------------------- parameter preparation ---------------------------

def _fold_conv(p):
    """Fold the BN scale into the conv weight (done once, offline)."""
    w = p["w"]                                   # (k, k, Cin, Cout), HWIO
    k, _, cin, cout = w.shape
    wf = (w * p["scale"]).reshape(k * k, cin, cout)
    if k == 1:
        wf = wf.reshape(cin, cout)
    bias = p["bias"].reshape(1, cout).astype(jnp.float32)
    return wf.astype(jnp.bfloat16), bias


# ------------------------------- forward pass --------------------------------

def csp_block_forward(x_nchw, params):
    """CSPBlock(first=True) forward. Input/output in NCHW like PyTorch."""
    x = jnp.transpose(x_nchw, (0, 2, 3, 1))                     # -> NHWC

    w_ds, b_ds = _fold_conv(params["down"])
    w_s0, b_s0 = _fold_conv(params["split0"])
    w_s1, b_s1 = _fold_conv(params["split1"])
    w_r1, b_r1 = _fold_conv(params["res_c1"])
    w_r2, b_r2 = _fold_conv(params["res_c2"])
    w_bo, b_bo = _fold_conv(params["blocks_out"])
    w_cc, b_cc = _fold_conv(params["concat"])
    cout = w_ds.shape[-1]
    w_cc1, w_cc0 = w_cc[:cout], w_cc[cout:]      # cat order is [x1, x0]

    # downsample_conv (3x3, stride 2) — taps formed in VMEM
    x_ds = conv3x3_stride2(x, w_ds, b_ds)                        # (N,Ho,Wo,Cout)
    N, Ho, Wo, _ = x_ds.shape
    m = N * Ho * Wo
    xm = x_ds.reshape(m, cout)

    # split_conv0 + split_conv1 fused (input read once)
    x0m, x1m = _row_tiled_call(_split_kernel, [xm],
                               [w_s0, b_s0, w_s1, b_s1], [cout, cout], m)

    # blocks_conv = ResBlock(1x1 -> hidden, 3x3 -> cout, +residual) + 1x1
    hidden = w_r1.shape[-1]
    hm = _row_tiled_call(_pw_kernel, [x1m], [w_r1, b_r1], [hidden], m)
    x1m = conv3x3_stride1_res(hm.reshape(N, Ho, Wo, hidden), w_r2, b_r2, x1m)
    x1m = _row_tiled_call(_pw_kernel, [x1m], [w_bo, b_bo], [cout], m)

    # concat + concat_conv fused via weight split (no HBM concatenate)
    outm = _row_tiled_call(_concat_pw_kernel, [x1m, x0m],
                           [w_cc1, w_cc0, b_cc], [cout], m)

    out = outm.reshape(N, Ho, Wo, cout)
    return jnp.transpose(out, (0, 3, 1, 2)).astype(jnp.float32)  # -> NCHW


# ------------------------- deterministic parameters --------------------------

def init_conv_bn(key, cin, cout, ksize):
    k1, k2, k3, k4, k5 = jax.random.split(key, 5)
    w = 0.1 * jax.random.normal(k1, (ksize, ksize, cin, cout), jnp.float32)
    gamma = 1.0 + 0.1 * jax.random.normal(k2, (cout,), jnp.float32)
    beta = 0.1 * jax.random.normal(k3, (cout,), jnp.float32)
    mean = 0.05 * jax.random.normal(k4, (cout,), jnp.float32)
    var = 1.0 + 0.1 * jnp.abs(jax.random.normal(k5, (cout,), jnp.float32))
    eps = 1e-5
    scale = gamma / jnp.sqrt(var + eps)          # BN folded into affine
    bias = beta - mean * scale
    return {"w": w, "scale": scale, "bias": bias}


def init_csp_params(key, cin, cout):
    ks = jax.random.split(key, 7)
    hidden = cout // 2
    return {
        "down":       init_conv_bn(ks[0], cin, cout, 3),
        "split0":     init_conv_bn(ks[1], cout, cout, 1),
        "split1":     init_conv_bn(ks[2], cout, cout, 1),
        "res_c1":     init_conv_bn(ks[3], cout, hidden, 1),
        "res_c2":     init_conv_bn(ks[4], hidden, cout, 3),
        "blocks_out": init_conv_bn(ks[5], cout, cout, 1),
        "concat":     init_conv_bn(ks[6], 2 * cout, cout, 1),
    }


# ------------------------------ reference (jnp) -------------------------------

def _ref_conv_module(x, p, ksize, stride=1, pad=0, residual=None):
    y = lax.conv_general_dilated(
        x, p["w"], (stride, stride), [(pad, pad), (pad, pad)],
        dimension_numbers=("NHWC", "HWIO", "NHWC"))
    y = _mish_ref(y * p["scale"] + p["bias"])
    return y if residual is None else residual + y


def ref_forward(x_nchw, params):
    x = jnp.transpose(x_nchw, (0, 2, 3, 1))
    x = _ref_conv_module(x, params["down"], 3, stride=2, pad=1)
    x0 = _ref_conv_module(x, params["split0"], 1)
    x1 = _ref_conv_module(x, params["split1"], 1)
    h = _ref_conv_module(x1, params["res_c1"], 1)
    x1 = _ref_conv_module(h, params["res_c2"], 3, stride=1, pad=1, residual=x1)
    x1 = _ref_conv_module(x1, params["blocks_out"], 1)
    xc = jnp.concatenate([x1, x0], axis=-1)
    out = _ref_conv_module(xc, params["concat"], 1)
    return jnp.transpose(out, (0, 3, 1, 2))


# ----------------------------------- main ------------------------------------

if __name__ == "__main__":
    key = jax.random.PRNGKey(0)
    kx, kp = jax.random.split(key)

    batch, in_channels, out_channels, spatial = 2, 4, 8, 16
    x = jax.random.normal(kx, (batch, in_channels, spatial, spatial), jnp.float32)
    params = init_csp_params(kp, in_channels, out_channels)

    fwd = jax.jit(csp_block_forward)
    out = jax.block_until_ready(fwd(x, params))
    assert out.shape == (batch, out_channels, spatial // 2, spatial // 2), out.shape

    ref = jax.block_until_ready(jax.jit(ref_forward)(x, params))
    err = float(jnp.max(jnp.abs(out - ref)))
    # bf16 MXU operands / bf16 inter-stage activations / approx reciprocal ->
    # compare against the f32 reference with loosened tolerances.
    assert jnp.allclose(out, ref, atol=5e-2, rtol=5e-2), f"max|diff|={err}"

    print("KERNEL_OK")
</pallas_src>

<mosaic_0001>
module attributes {stable_mosaic.version = 11 : i64} {
  func.func @_split_kernel(%arg0: i32, %arg1: memref<128x8xbf16, #tpu.memory_space<vmem>>, %arg2: memref<8x8xbf16, #tpu.memory_space<vmem>>, %arg3: memref<1x8xf32, #tpu.memory_space<vmem>>, %arg4: memref<8x8xbf16, #tpu.memory_space<vmem>>, %arg5: memref<1x8xf32, #tpu.memory_space<vmem>>, %arg6: memref<128x8xbf16, #tpu.memory_space<vmem>>, %arg7: memref<128x8xbf16, #tpu.memory_space<vmem>>) attributes {dimension_semantics = [#tpu.dimension_semantics<parallel>], iteration_bounds = array<i64: 1>, scalar_prefetch = 0 : i64, scratch_operands = 0 : i64, tpu.core_type = #tpu.core_type<tc>, window_params = [{transform_indices = @transform_0, window_bounds = array<i64: 128, 8>}, {pipeline_mode = #tpu.pipeline_mode<synchronous>, transform_indices = @transform_1, window_bounds = array<i64: 8, 8>}, {pipeline_mode = #tpu.pipeline_mode<synchronous>, transform_indices = @transform_2, window_bounds = array<i64: 1, 8>}, {pipeline_mode = #tpu.pipeline_mode<synchronous>, transform_indices = @transform_3, window_bounds = array<i64: 8, 8>}, {pipeline_mode = #tpu.pipeline_mode<synchronous>, transform_indices = @transform_4, window_bounds = array<i64: 1, 8>}, {transform_indices = @transform_5, window_bounds = array<i64: 128, 8>}, {transform_indices = @transform_6, window_bounds = array<i64: 128, 8>}]} {
    %c0 = arith.constant 0 : index
    %c0_0 = arith.constant 0 : index
    %0 = vector.load %arg1[%c0, %c0_0] : memref<128x8xbf16, #tpu.memory_space<vmem>>, vector<128x8xbf16>
    %c0_1 = arith.constant 0 : index
    %c0_2 = arith.constant 0 : index
    %1 = vector.load %arg2[%c0_1, %c0_2] : memref<8x8xbf16, #tpu.memory_space<vmem>>, vector<8x8xbf16>
    %cst = arith.constant dense<0.000000e+00> : vector<128x8xf32>
    %2 = tpu.matmul %0, %1, %cst {dimension_numbers = #tpu.dot_dimension_numbers<[1], [0], [0], [1], [0, 0, 1, 1], [], []>} : vector<128x8xbf16>, vector<8x8xbf16>, vector<128x8xf32> -> vector<128x8xf32>
    %c0_3 = arith.constant 0 : index
    %c0_4 = arith.constant 0 : index
    %3 = vector.load %arg3[%c0_3, %c0_4] : memref<1x8xf32, #tpu.memory_space<vmem>>, vector<1x8xf32>
    %4 = vector.broadcast %3 : vector<1x8xf32> to vector<128x8xf32>
    %5 = arith.addf %2, %4 : vector<128x8xf32>
    %cst_5 = arith.constant 2.000000e+01 : f32
    %6 = vector.broadcast %cst_5 : f32 to vector<128x8xf32>
    %7 = arith.minimumf %5, %6 : vector<128x8xf32>
    %8 = math.exp %7 : vector<128x8xf32>
    %cst_6 = arith.constant 2.000000e+00 : f32
    %9 = vector.broadcast %cst_6 : f32 to vector<128x8xf32>
    %10 = arith.addf %8, %9 : vector<128x8xf32>
    %11 = arith.mulf %8, %10 : vector<128x8xf32>
    %cst_7 = arith.constant 2.000000e+01 : f32
    %12 = vector.broadcast %cst_7 : f32 to vector<128x8xf32>
    %13 = arith.cmpf ogt, %5, %12 : vector<128x8xf32>
    %14 = arith.mulf %5, %11 : vector<128x8xf32>
    %cst_8 = arith.constant 2.000000e+00 : f32
    %15 = vector.broadcast %cst_8 : f32 to vector<128x8xf32>
    %16 = arith.addf %11, %15 : vector<128x8xf32>
    %17 = tpu.reciprocal %16 {approx = true} : vector<128x8xf32> -> vector<128x8xf32>
    %18 = arith.mulf %14, %17 : vector<128x8xf32>
    %19 = arith.select %13, %5, %18 : vector<128x8xi1>, vector<128x8xf32>
    %20 = arith.truncf %19 : vector<128x8xf32> to vector<128x8xbf16>
    %c0_9 = arith.constant 0 : index
    %c0_10 = arith.constant 0 : index
    %21 = vector.load %arg6[%c0_9, %c0_10] : memref<128x8xbf16, #tpu.memory_space<vmem>>, vector<128x8xbf16>
    tpu.vector_store %arg6[%c0_9, %c0_10], %20 {strides = array<i32>} : memref<128x8xbf16, #tpu.memory_space<vmem>>, vector<128x8xbf16>,
    %c0_11 = arith.constant 0 : index
    %c0_12 = arith.constant 0 : index
    %22 = vector.load %arg4[%c0_11, %c0_12] : memref<8x8xbf16, #tpu.memory_space<vmem>>, vector<8x8xbf16>
    %cst_13 = arith.constant dense<0.000000e+00> : vector<128x8xf32>
    %23 = tpu.matmul %0, %22, %cst_13 {dimension_numbers = #tpu.dot_dimension_numbers<[1], [0], [0], [1], [0, 0, 1, 1], [], []>} : vector<128x8xbf16>, vector<8x8xbf16>, vector<128x8xf32> -> vector<128x8xf32>
    %c0_14 = arith.constant 0 : index
    %c0_15 = arith.constant 0 : index
    %24 = vector.load %arg5[%c0_14, %c0_15] : memref<1x8xf32, #tpu.memory_space<vmem>>, vector<1x8xf32>
    %25 = vector.broadcast %24 : vector<1x8xf32> to vector<128x8xf32>
    %26 = arith.addf %23, %25 : vector<128x8xf32>
    %cst_16 = arith.constant 2.000000e+01 : f32
    %27 = vector.broadcast %cst_16 : f32 to vector<128x8xf32>
    %28 = arith.minimumf %26, %27 : vector<128x8xf32>
    %29 = math.exp %28 : vector<128x8xf32>
    %cst_17 = arith.constant 2.000000e+00 : f32
    %30 = vector.broadcast %cst_17 : f32 to vector<128x8xf32>
    %31 = arith.addf %29, %30 : vector<128x8xf32>
    %32 = arith.mulf %29, %31 : vector<128x8xf32>
    %cst_18 = arith.constant 2.000000e+01 : f32
    %33 = vector.broadcast %cst_18 : f32 to vector<128x8xf32>
    %34 = arith.cmpf ogt, %26, %33 : vector<128x8xf32>
    %35 = arith.mulf %26, %32 : vector<128x8xf32>
    %cst_19 = arith.constant 2.000000e+00 : f32
    %36 = vector.broadcast %cst_19 : f32 to vector<128x8xf32>
    %37 = arith.addf %32, %36 : vector<128x8xf32>
    %38 = tpu.reciprocal %37 {approx = true} : vector<128x8xf32> -> vector<128x8xf32>
    %39 = arith.mulf %35, %38 : vector<128x8xf32>
    %40 = arith.select %34, %26, %39 : vector<128x8xi1>, vector<128x8xf32>
    %41 = arith.truncf %40 : vector<128x8xf32> to vector<128x8xbf16>
    %c0_20 = arith.constant 0 : index
    %c0_21 = arith.constant 0 : index
    %42 = vector.load %arg7[%c0_20, %c0_21] : memref<128x8xbf16, #tpu.memory_space<vmem>>, vector<128x8xbf16>
    tpu.vector_store %arg7[%c0_20, %c0_21], %41 {strides = array<i32>} : memref<128x8xbf16, #tpu.memory_space<vmem>>, vector<128x8xbf16>,
    return
  }
  func.func @transform_0(%arg0: i32) -> (i32, i32) {
    %c0_i32 = arith.constant 0 : i32
    %c0_i32_0 = arith.constant 0 : i32
    return %arg0, %c0_i32 : i32, i32
  }
  func.func @transform_1(%arg0: i32) -> (i32, i32) {
    %c0_i32 = arith.constant 0 : i32
    %c0_i32_0 = arith.constant 0 : i32
    %c0_i32_1 = arith.constant 0 : i32
    return %c0_i32, %c0_i32_0 : i32, i32
  }
  func.func @transform_2(%arg0: i32) -> (i32, i32) {
    %c0_i32 = arith.constant 0 : i32
    %c0_i32_0 = arith.constant 0 : i32
    %c0_i32_1 = arith.constant 0 : i32
    return %c0_i32, %c0_i32_0 : i32, i32
  }
  func.func @transform_3(%arg0: i32) -> (i32, i32) {
    %c0_i32 = arith.constant 0 : i32
    %c0_i32_0 = arith.constant 0 : i32
    %c0_i32_1 = arith.constant 0 : i32
    return %c0_i32, %c0_i32_0 : i32, i32
  }
  func.func @transform_4(%arg0: i32) -> (i32, i32) {
    %c0_i32 = arith.constant 0 : i32
    %c0_i32_0 = arith.constant 0 : i32
    %c0_i32_1 = arith.constant 0 : i32
    return %c0_i32, %c0_i32_0 : i32, i32
  }
  func.func @transform_5(%arg0: i32) -> (i32, i32) {
    %c0_i32 = arith.constant 0 : i32
    %c0_i32_0 = arith.constant 0 : i32
    return %arg0, %c0_i32 : i32, i32
  }
  func.func @transform_6(%arg0: i32) -> (i32, i32) {
    %c0_i32 = arith.constant 0 : i32
    %c0_i32_0 = arith.constant 0 : i32
    return %arg0, %c0_i32 : i32, i32
  }
}

module attributes {stable_mosaic.version = 11 : i64} {
  func.func @kernel(%arg0: i32, %arg1: memref<1x2x2x9x9x4xbf16, #tpu.memory_space<vmem>>, %arg2: memref<9x4x8xbf16, #tpu.memory_space<vmem>>, %arg3: memref<1x8xf32, #tpu.memory_space<vmem>>, %arg4: memref<1x64x8xbf16, #tpu.memory_space<vmem>>) attributes {dimension_semantics = [#tpu.dimension_semantics<parallel>], iteration_bounds = array<i64: 2>, scalar_prefetch = 0 : i64, scratch_operands = 0 : i64, tpu.core_type = #tpu.core_type<tc>, window_params = [{transform_indices = @transform_0, window_bounds = array<i64: 1, 2, 2, 9, 9, 4>}, {pipeline_mode = #tpu.pipeline_mode<synchronous>, transform_indices = @transform_1, window_bounds = array<i64: 9, 4, 8>}, {pipeline_mode = #tpu.pipeline_mode<synchronous>, transform_indices = @transform_2, window_bounds = array<i64: 1, 8>}, {transform_indices = @transform_3, window_bounds = array<i64: 1, 64, 8>}]} {
    %c0 = arith.constant 0 : index
    %c0_0 = arith.constant 0 : index
    %c0_1 = arith.constant 0 : index
    %c0_2 = arith.constant 0 : index
    %c0_3 = arith.constant 0 : index
    %c0_4 = arith.constant 0 : index
    %0 = vector.load %arg1[%c0, %c0_0, %c0_1, %c0_2, %c0_3, %c0_4] : memref<1x2x2x9x9x4xbf16, #tpu.memory_space<vmem>>, vector<1x2x2x9x9x4xbf16>
    %1 = vector.shape_cast %0 : vector<1x2x2x9x9x4xbf16> to vector<2x2x9x9x4xbf16>
    %cst = arith.constant 0.000000e+00 : f32
    %2 = vector.broadcast %cst : f32 to vector<64x8xf32>
    %3 = vector.extract_strided_slice %1 {offsets = [0, 0, 0, 0, 0], sizes = [1, 1, 8, 8, 4], strides = [1, 1, 1, 1, 1]} : vector<2x2x9x9x4xbf16> to vector<1x1x8x8x4xbf16>
    %4 = vector.shape_cast %3 : vector<1x1x8x8x4xbf16> to vector<8x8x4xbf16>
    %5 = vector.shape_cast %4 : vector<8x8x4xbf16> to vector<64x4xbf16>
    %c0_5 = arith.constant 0 : index
    %c0_6 = arith.constant 0 : index
    %c0_7 = arith.constant 0 : index
    %6 = vector.load %arg2[%c0_5, %c0_6, %c0_7] : memref<9x4x8xbf16, #tpu.memory_space<vmem>>, vector<1x4x8xbf16>
    %7 = vector.shape_cast %6 : vector<1x4x8xbf16> to vector<4x8xbf16>
    %cst_8 = arith.constant dense<0.000000e+00> : vector<64x8xf32>
    %8 = tpu.matmul %5, %7, %cst_8 {dimension_numbers = #tpu.dot_dimension_numbers<[1], [0], [0], [1], [0, 0, 1, 1], [], []>} : vector<64x4xbf16>, vector<4x8xbf16>, vector<64x8xf32> -> vector<64x8xf32>
    %9 = arith.addf %2, %8 : vector<64x8xf32>
    %10 = vector.extract_strided_slice %1 {offsets = [0, 1, 0, 0, 0], sizes = [1, 1, 8, 8, 4], strides = [1, 1, 1, 1, 1]} : vector<2x2x9x9x4xbf16> to vector<1x1x8x8x4xbf16>
    %11 = vector.shape_cast %10 : vector<1x1x8x8x4xbf16> to vector<8x8x4xbf16>
    %12 = vector.shape_cast %11 : vector<8x8x4xbf16> to vector<64x4xbf16>
    %c1 = arith.constant 1 : index
    %c0_9 = arith.constant 0 : index
    %c0_10 = arith.constant 0 : index
    %13 = vector.load %arg2[%c1, %c0_9, %c0_10] : memref<9x4x8xbf16, #tpu.memory_space<vmem>>, vector<1x4x8xbf16>
    %14 = vector.shape_cast %13 : vector<1x4x8xbf16> to vector<4x8xbf16>
    %cst_11 = arith.constant dense<0.000000e+00> : vector<64x8xf32>
    %15 = tpu.matmul %12, %14, %cst_11 {dimension_numbers = #tpu.dot_dimension_numbers<[1], [0], [0], [1], [0, 0, 1, 1], [], []>} : vector<64x4xbf16>, vector<4x8xbf16>, vector<64x8xf32> -> vector<64x8xf32>
    %16 = arith.addf %9, %15 : vector<64x8xf32>
    %17 = vector.extract_strided_slice %1 {offsets = [0, 0, 0, 1, 0], sizes = [1, 1, 8, 8, 4], strides = [1, 1, 1, 1, 1]} : vector<2x2x9x9x4xbf16> to vector<1x1x8x8x4xbf16>
    %18 = vector.shape_cast %17 : vector<1x1x8x8x4xbf16> to vector<8x8x4xbf16>
    %19 = vector.shape_cast %18 : vector<8x8x4xbf16> to vector<64x4xbf16>
    %c2 = arith.constant 2 : index
    %c0_12 = arith.constant 0 : index
    %c0_13 = arith.constant 0 : index
    %20 = vector.load %arg2[%c2, %c0_12, %c0_13] : memref<9x4x8xbf16, #tpu.memory_space<vmem>>, vector<1x4x8xbf16>
    %21 = vector.shape_cast %20 : vector<1x4x8xbf16> to vector<4x8xbf16>
    %cst_14 = arith.constant dense<0.000000e+00> : vector<64x8xf32>
    %22 = tpu.matmul %19, %21, %cst_14 {dimension_numbers = #tpu.dot_dimension_numbers<[1], [0], [0], [1], [0, 0, 1, 1], [], []>} : vector<64x4xbf16>, vector<4x8xbf16>, vector<64x8xf32> -> vector<64x8xf32>
    %23 = arith.addf %16, %22 : vector<64x8xf32>
    %24 = vector.extract_strided_slice %1 {offsets = [1, 0, 0, 0, 0], sizes = [1, 1, 8, 8, 4], strides = [1, 1, 1, 1, 1]} : vector<2x2x9x9x4xbf16> to vector<1x1x8x8x4xbf16>
    %25 = vector.shape_cast %24 : vector<1x1x8x8x4xbf16> to vector<8x8x4xbf16>
    %26 = vector.shape_cast %25 : vector<8x8x4xbf16> to vector<64x4xbf16>
    %c3 = arith.constant 3 : index
    %c0_15 = arith.constant 0 : index
    %c0_16 = arith.constant 0 : index
    %27 = vector.load %arg2[%c3, %c0_15, %c0_16] : memref<9x4x8xbf16, #tpu.memory_space<vmem>>, vector<1x4x8xbf16>
    %28 = vector.shape_cast %27 : vector<1x4x8xbf16> to vector<4x8xbf16>
    %cst_17 = arith.constant dense<0.000000e+00> : vector<64x8xf32>
    %29 = tpu.matmul %26, %28, %cst_17 {dimension_numbers = #tpu.dot_dimension_numbers<[1], [0], [0], [1], [0, 0, 1, 1], [], []>} : vector<64x4xbf16>, vector<4x8xbf16>, vector<64x8xf32> -> vector<64x8xf32>
    %30 = arith.addf %23, %29 : vector<64x8xf32>
    %31 = vector.extract_strided_slice %1 {offsets = [1, 1, 0, 0, 0], sizes = [1, 1, 8, 8, 4], strides = [1, 1, 1, 1, 1]} : vector<2x2x9x9x4xbf16> to vector<1x1x8x8x4xbf16>
    %32 = vector.shape_cast %31 : vector<1x1x8x8x4xbf16> to vector<8x8x4xbf16>
    %33 = vector.shape_cast %32 : vector<8x8x4xbf16> to vector<64x4xbf16>
    %c4 = arith.constant 4 : index
    %c0_18 = arith.constant 0 : index
    %c0_19 = arith.constant 0 : index
    %34 = vector.load %arg2[%c4, %c0_18, %c0_19] : memref<9x4x8xbf16, #tpu.memory_space<vmem>>, vector<1x4x8xbf16>
    %35 = vector.shape_cast %34 : vector<1x4x8xbf16> to vector<4x8xbf16>
    %cst_20 = arith.constant dense<0.000000e+00> : vector<64x8xf32>
    %36 = tpu.matmul %33, %35, %cst_20 {dimension_numbers = #tpu.dot_dimension_numbers<[1], [0], [0], [1], [0, 0, 1, 1], [], []>} : vector<64x4xbf16>, vector<4x8xbf16>, vector<64x8xf32> -> vector<64x8xf32>
    %37 = arith.addf %30, %36 : vector<64x8xf32>
    %38 = vector.extract_strided_slice %1 {offsets = [1, 0, 0, 1, 0], sizes = [1, 1, 8, 8, 4], strides = [1, 1, 1, 1, 1]} : vector<2x2x9x9x4xbf16> to vector<1x1x8x8x4xbf16>
    %39 = vector.shape_cast %38 : vector<1x1x8x8x4xbf16> to vector<8x8x4xbf16>
    %40 = vector.shape_cast %39 : vector<8x8x4xbf16> to vector<64x4xbf16>
    %c5 = arith.constant 5 : index
    %c0_21 = arith.constant 0 : index
    %c0_22 = arith.constant 0 : index
    %41 = vector.load %arg2[%c5, %c0_21, %c0_22] : memref<9x4x8xbf16, #tpu.memory_space<vmem>>, vector<1x4x8xbf16>
    %42 = vector.shape_cast %41 : vector<1x4x8xbf16> to vector<4x8xbf16>
    %cst_23 = arith.constant dense<0.000000e+00> : vector<64x8xf32>
    %43 = tpu.matmul %40, %42, %cst_23 {dimension_numbers = #tpu.dot_dimension_numbers<[1], [0], [0], [1], [0, 0, 1, 1], [], []>} : vector<64x4xbf16>, vector<4x8xbf16>, vector<64x8xf32> -> vector<64x8xf32>
    %44 = arith.addf %37, %43 : vector<64x8xf32>
    %45 = vector.extract_strided_slice %1 {offsets = [0, 0, 1, 0, 0], sizes = [1, 1, 8, 8, 4], strides = [1, 1, 1, 1, 1]} : vector<2x2x9x9x4xbf16> to vector<1x1x8x8x4xbf16>
    %46 = vector.shape_cast %45 : vector<1x1x8x8x4xbf16> to vector<8x8x4xbf16>
    %47 = vector.shape_cast %46 : vector<8x8x4xbf16> to vector<64x4xbf16>
    %c6 = arith.constant 6 : index
    %c0_24 = arith.constant 0 : index
    %c0_25 = arith.constant 0 : index
    %48 = vector.load %arg2[%c6, %c0_24, %c0_25] : memref<9x4x8xbf16, #tpu.memory_space<vmem>>, vector<1x4x8xbf16>
    %49 = vector.shape_cast %48 : vector<1x4x8xbf16> to vector<4x8xbf16>
    %cst_26 = arith.constant dense<0.000000e+00> : vector<64x8xf32>
    %50 = tpu.matmul %47, %49, %cst_26 {dimension_numbers = #tpu.dot_dimension_numbers<[1], [0], [0], [1], [0, 0, 1, 1], [], []>} : vector<64x4xbf16>, vector<4x8xbf16>, vector<64x8xf32> -> vector<64x8xf32>
    %51 = arith.addf %44, %50 : vector<64x8xf32>
    %52 = vector.extract_strided_slice %1 {offsets = [0, 1, 1, 0, 0], sizes = [1, 1, 8, 8, 4], strides = [1, 1, 1, 1, 1]} : vector<2x2x9x9x4xbf16> to vector<1x1x8x8x4xbf16>
    %53 = vector.shape_cast %52 : vector<1x1x8x8x4xbf16> to vector<8x8x4xbf16>
    %54 = vector.shape_cast %53 : vector<8x8x4xbf16> to vector<64x4xbf16>
    %c7 = arith.constant 7 : index
    %c0_27 = arith.constant 0 : index
    %c0_28 = arith.constant 0 : index
    %55 = vector.load %arg2[%c7, %c0_27, %c0_28] : memref<9x4x8xbf16, #tpu.memory_space<vmem>>, vector<1x4x8xbf16>
    %56 = vector.shape_cast %55 : vector<1x4x8xbf16> to vector<4x8xbf16>
    %cst_29 = arith.constant dense<0.000000e+00> : vector<64x8xf32>
    %57 = tpu.matmul %54, %56, %cst_29 {dimension_numbers = #tpu.dot_dimension_numbers<[1], [0], [0], [1], [0, 0, 1, 1], [], []>} : vector<64x4xbf16>, vector<4x8xbf16>, vector<64x8xf32> -> vector<64x8xf32>
    %58 = arith.addf %51, %57 : vector<64x8xf32>
    %59 = vector.extract_strided_slice %1 {offsets = [0, 0, 1, 1, 0], sizes = [1, 1, 8, 8, 4], strides = [1, 1, 1, 1, 1]} : vector<2x2x9x9x4xbf16> to vector<1x1x8x8x4xbf16>
    %60 = vector.shape_cast %59 : vector<1x1x8x8x4xbf16> to vector<8x8x4xbf16>
    %61 = vector.shape_cast %60 : vector<8x8x4xbf16> to vector<64x4xbf16>
    %c8 = arith.constant 8 : index
    %c0_30 = arith.constant 0 : index
    %c0_31 = arith.constant 0 : index
    %62 = vector.load %arg2[%c8, %c0_30, %c0_31] : memref<9x4x8xbf16, #tpu.memory_space<vmem>>, vector<1x4x8xbf16>
    %63 = vector.shape_cast %62 : vector<1x4x8xbf16> to vector<4x8xbf16>
    %cst_32 = arith.constant dense<0.000000e+00> : vector<64x8xf32>
    %64 = tpu.matmul %61, %63, %cst_32 {dimension_numbers = #tpu.dot_dimension_numbers<[1], [0], [0], [1], [0, 0, 1, 1], [], []>} : vector<64x4xbf16>, vector<4x8xbf16>, vector<64x8xf32> -> vector<64x8xf32>
    %65 = arith.addf %58, %64 : vector<64x8xf32>
    %c0_33 = arith.constant 0 : index
    %c0_34 = arith.constant 0 : index
    %66 = vector.load %arg3[%c0_33, %c0_34] : memref<1x8xf32, #tpu.memory_space<vmem>>, vector<1x8xf32>
    %67 = vector.broadcast %66 : vector<1x8xf32> to vector<64x8xf32>
    %68 = arith.addf %65, %67 : vector<64x8xf32>
    %cst_35 = arith.constant 2.000000e+01 : f32
    %69 = vector.broadcast %cst_35 : f32 to vector<64x8xf32>
    %70 = arith.minimumf %68, %69 : vector<64x8xf32>
    %71 = math.exp %70 : vector<64x8xf32>
    %cst_36 = arith.constant 2.000000e+00 : f32
    %72 = vector.broadcast %cst_36 : f32 to vector<64x8xf32>
    %73 = arith.addf %71, %72 : vector<64x8xf32>
    %74 = arith.mulf %71, %73 : vector<64x8xf32>
    %cst_37 = arith.constant 2.000000e+01 : f32
    %75 = vector.broadcast %cst_37 : f32 to vector<64x8xf32>
    %76 = arith.cmpf ogt, %68, %75 : vector<64x8xf32>
    %77 = arith.mulf %68, %74 : vector<64x8xf32>
    %cst_38 = arith.constant 2.000000e+00 : f32
    %78 = vector.broadcast %cst_38 : f32 to vector<64x8xf32>
    %79 = arith.addf %74, %78 : vector<64x8xf32>
    %80 = tpu.reciprocal %79 {approx = true} : vector<64x8xf32> -> vector<64x8xf32>
    %81 = arith.mulf %77, %80 : vector<64x8xf32>
    %82 = arith.select %76, %68, %81 : vector<64x8xi1>, vector<64x8xf32>
    %83 = arith.truncf %82 : vector<64x8xf32> to vector<64x8xbf16>
    %c0_39 = arith.constant 0 : index
    %c0_40 = arith.constant 0 : index
    %c0_41 = arith.constant 0 : index
    %84 = vector.load %arg4[%c0_39, %c0_40, %c0_41] : memref<1x64x8xbf16, #tpu.memory_space<vmem>>, vector<1x64x8xbf16>
    %85 = vector.shape_cast %84 : vector<1x64x8xbf16> to vector<64x8xbf16>
    %86 = vector.shape_cast %83 : vector<64x8xbf16> to vector<1x64x8xbf16>
    tpu.vector_store %arg4[%c0_39, %c0_40, %c0_41], %86 {strides = array<i32>} : memref<1x64x8xbf16, #tpu.memory_space<vmem>>, vector<1x64x8xbf16>,
    return
  }
  func.func @transform_0(%arg0: i32) -> (i32, i32, i32, i32, i32, i32) {
    %c0_i32 = arith.constant 0 : i32
    %c0_i32_0 = arith.constant 0 : i32
    %c0_i32_1 = arith.constant 0 : i32
    %c0_i32_2 = arith.constant 0 : i32
    %c0_i32_3 = arith.constant 0 : i32
    %c0_i32_4 = arith.constant 0 : i32
    return %arg0, %c0_i32, %c0_i32_0, %c0_i32_1, %c0_i32_2, %c0_i32_3 : i32, i32, i32, i32, i32, i32
  }
  func.func @transform_1(%arg0: i32) -> (i32, i32, i32) {
    %c0_i32 = arith.constant 0 : i32
    %c0_i32_0 = arith.constant 0 : i32
    %c0_i32_1 = arith.constant 0 : i32
    %c0_i32_2 = arith.constant 0 : i32
    return %c0_i32, %c0_i32_0, %c0_i32_1 : i32, i32, i32
  }
  func.func @transform_2(%arg0: i32) -> (i32, i32) {
    %c0_i32 = arith.constant 0 : i32
    %c0_i32_0 = arith.constant 0 : i32
    %c0_i32_1 = arith.constant 0 : i32
    return %c0_i32, %c0_i32_0 : i32, i32
  }
  func.func @transform_3(%arg0: i32) -> (i32, i32, i32) {
    %c0_i32 = arith.constant 0 : i32
    %c0_i32_0 = arith.constant 0 : i32
    %c0_i32_1 = arith.constant 0 : i32
    return %arg0, %c0_i32, %c0_i32_0 : i32, i32, i32
  }
}

module attributes {stable_mosaic.version = 11 : i64} {
  func.func @_pw_kernel(%arg0: i32, %arg1: memref<128x8xbf16, #tpu.memory_space<vmem>>, %arg2: memref<8x4xbf16, #tpu.memory_space<vmem>>, %arg3: memref<1x4xf32, #tpu.memory_space<vmem>>, %arg4: memref<128x4xbf16, #tpu.memory_space<vmem>>) attributes {dimension_semantics = [#tpu.dimension_semantics<parallel>], iteration_bounds = array<i64: 1>, scalar_prefetch = 0 : i64, scratch_operands = 0 : i64, tpu.core_type = #tpu.core_type<tc>, window_params = [{transform_indices = @transform_0, window_bounds = array<i64: 128, 8>}, {pipeline_mode = #tpu.pipeline_mode<synchronous>, transform_indices = @transform_1, window_bounds = array<i64: 8, 4>}, {pipeline_mode = #tpu.pipeline_mode<synchronous>, transform_indices = @transform_2, window_bounds = array<i64: 1, 4>}, {transform_indices = @transform_3, window_bounds = array<i64: 128, 4>}]} {
    %c0 = arith.constant 0 : index
    %c0_0 = arith.constant 0 : index
    %0 = vector.load %arg1[%c0, %c0_0] : memref<128x8xbf16, #tpu.memory_space<vmem>>, vector<128x8xbf16>
    %c0_1 = arith.constant 0 : index
    %c0_2 = arith.constant 0 : index
    %1 = vector.load %arg2[%c0_1, %c0_2] : memref<8x4xbf16, #tpu.memory_space<vmem>>, vector<8x4xbf16>
    %cst = arith.constant dense<0.000000e+00> : vector<128x4xf32>
    %2 = tpu.matmul %0, %1, %cst {dimension_numbers = #tpu.dot_dimension_numbers<[1], [0], [0], [1], [0, 0, 1, 1], [], []>} : vector<128x8xbf16>, vector<8x4xbf16>, vector<128x4xf32> -> vector<128x4xf32>
    %c0_3 = arith.constant 0 : index
    %c0_4 = arith.constant 0 : index
    %3 = vector.load %arg3[%c0_3, %c0_4] : memref<1x4xf32, #tpu.memory_space<vmem>>, vector<1x4xf32>
    %4 = vector.broadcast %3 : vector<1x4xf32> to vector<128x4xf32>
    %5 = arith.addf %2, %4 : vector<128x4xf32>
    %cst_5 = arith.constant 2.000000e+01 : f32
    %6 = vector.broadcast %cst_5 : f32 to vector<128x4xf32>
    %7 = arith.minimumf %5, %6 : vector<128x4xf32>
    %8 = math.exp %7 : vector<128x4xf32>
    %cst_6 = arith.constant 2.000000e+00 : f32
    %9 = vector.broadcast %cst_6 : f32 to vector<128x4xf32>
    %10 = arith.addf %8, %9 : vector<128x4xf32>
    %11 = arith.mulf %8, %10 : vector<128x4xf32>
    %cst_7 = arith.constant 2.000000e+01 : f32
    %12 = vector.broadcast %cst_7 : f32 to vector<128x4xf32>
    %13 = arith.cmpf ogt, %5, %12 : vector<128x4xf32>
    %14 = arith.mulf %5, %11 : vector<128x4xf32>
    %cst_8 = arith.constant 2.000000e+00 : f32
    %15 = vector.broadcast %cst_8 : f32 to vector<128x4xf32>
    %16 = arith.addf %11, %15 : vector<128x4xf32>
    %17 = tpu.reciprocal %16 {approx = true} : vector<128x4xf32> -> vector<128x4xf32>
    %18 = arith.mulf %14, %17 : vector<128x4xf32>
    %19 = arith.select %13, %5, %18 : vector<128x4xi1>, vector<128x4xf32>
    %20 = arith.truncf %19 : vector<128x4xf32> to vector<128x4xbf16>
    %c0_9 = arith.constant 0 : index
    %c0_10 = arith.constant 0 : index
    %21 = vector.load %arg4[%c0_9, %c0_10] : memref<128x4xbf16, #tpu.memory_space<vmem>>, vector<128x4xbf16>
    tpu.vector_store %arg4[%c0_9, %c0_10], %20 {strides = array<i32>} : memref<128x4xbf16, #tpu.memory_space<vmem>>, vector<128x4xbf16>,
    return
  }
  func.func @transform_0(%arg0: i32) -> (i32, i32) {
    %c0_i32 = arith.constant 0 : i32
    %c0_i32_0 = arith.constant 0 : i32
    return %arg0, %c0_i32 : i32, i32
  }
  func.func @transform_1(%arg0: i32) -> (i32, i32) {
    %c0_i32 = arith.constant 0 : i32
    %c0_i32_0 = arith.constant 0 : i32
    %c0_i32_1 = arith.constant 0 : i32
    return %c0_i32, %c0_i32_0 : i32, i32
  }
  func.func @transform_2(%arg0: i32) -> (i32, i32) {
    %c0_i32 = arith.constant 0 : i32
    %c0_i32_0 = arith.constant 0 : i32
    %c0_i32_1 = arith.constant 0 : i32
    return %c0_i32, %c0_i32_0 : i32, i32
  }
  func.func @transform_3(%arg0: i32) -> (i32, i32) {
    %c0_i32 = arith.constant 0 : i32
    %c0_i32_0 = arith.constant 0 : i32
    return %arg0, %c0_i32 : i32, i32
  }
}

module attributes {stable_mosaic.version = 11 : i64} {
  func.func @kernel(%arg0: i32, %arg1: memref<1x10x10x4xbf16, #tpu.memory_space<vmem>>, %arg2: memref<9x4x8xbf16, #tpu.memory_space<vmem>>, %arg3: memref<1x8xf32, #tpu.memory_space<vmem>>, %arg4: memref<1x64x8xbf16, #tpu.memory_space<vmem>>, %arg5: memref<1x64x8xbf16, #tpu.memory_space<vmem>>) attributes {dimension_semantics = [#tpu.dimension_semantics<parallel>], iteration_bounds = array<i64: 2>, scalar_prefetch = 0 : i64, scratch_operands = 0 : i64, tpu.core_type = #tpu.core_type<tc>, window_params = [{transform_indices = @transform_0, window_bounds = array<i64: 1, 10, 10, 4>}, {pipeline_mode = #tpu.pipeline_mode<synchronous>, transform_indices = @transform_1, window_bounds = array<i64: 9, 4, 8>}, {pipeline_mode = #tpu.pipeline_mode<synchronous>, transform_indices = @transform_2, window_bounds = array<i64: 1, 8>}, {transform_indices = @transform_3, window_bounds = array<i64: 1, 64, 8>}, {transform_indices = @transform_4, window_bounds = array<i64: 1, 64, 8>}]} {
    %c0 = arith.constant 0 : index
    %c0_0 = arith.constant 0 : index
    %c0_1 = arith.constant 0 : index
    %c0_2 = arith.constant 0 : index
    %0 = vector.load %arg1[%c0, %c0_0, %c0_1, %c0_2] : memref<1x10x10x4xbf16, #tpu.memory_space<vmem>>, vector<1x10x10x4xbf16>
    %1 = vector.shape_cast %0 : vector<1x10x10x4xbf16> to vector<10x10x4xbf16>
    %cst = arith.constant 0.000000e+00 : f32
    %2 = vector.broadcast %cst : f32 to vector<64x8xf32>
    %3 = vector.extract_strided_slice %1 {offsets = [0, 0, 0], sizes = [8, 8, 4], strides = [1, 1, 1]} : vector<10x10x4xbf16> to vector<8x8x4xbf16>
    %4 = vector.shape_cast %3 : vector<8x8x4xbf16> to vector<64x4xbf16>
    %c0_3 = arith.constant 0 : index
    %c0_4 = arith.constant 0 : index
    %c0_5 = arith.constant 0 : index
    %5 = vector.load %arg2[%c0_3, %c0_4, %c0_5] : memref<9x4x8xbf16, #tpu.memory_space<vmem>>, vector<1x4x8xbf16>
    %6 = vector.shape_cast %5 : vector<1x4x8xbf16> to vector<4x8xbf16>
    %cst_6 = arith.constant dense<0.000000e+00> : vector<64x8xf32>
    %7 = tpu.matmul %4, %6, %cst_6 {dimension_numbers = #tpu.dot_dimension_numbers<[1], [0], [0], [1], [0, 0, 1, 1], [], []>} : vector<64x4xbf16>, vector<4x8xbf16>, vector<64x8xf32> -> vector<64x8xf32>
    %8 = arith.addf %2, %7 : vector<64x8xf32>
    %9 = vector.extract_strided_slice %1 {offsets = [0, 1, 0], sizes = [8, 8, 4], strides = [1, 1, 1]} : vector<10x10x4xbf16> to vector<8x8x4xbf16>
    %10 = vector.shape_cast %9 : vector<8x8x4xbf16> to vector<64x4xbf16>
    %c1 = arith.constant 1 : index
    %c0_7 = arith.constant 0 : index
    %c0_8 = arith.constant 0 : index
    %11 = vector.load %arg2[%c1, %c0_7, %c0_8] : memref<9x4x8xbf16, #tpu.memory_space<vmem>>, vector<1x4x8xbf16>
    %12 = vector.shape_cast %11 : vector<1x4x8xbf16> to vector<4x8xbf16>
    %cst_9 = arith.constant dense<0.000000e+00> : vector<64x8xf32>
    %13 = tpu.matmul %10, %12, %cst_9 {dimension_numbers = #tpu.dot_dimension_numbers<[1], [0], [0], [1], [0, 0, 1, 1], [], []>} : vector<64x4xbf16>, vector<4x8xbf16>, vector<64x8xf32> -> vector<64x8xf32>
    %14 = arith.addf %8, %13 : vector<64x8xf32>
    %15 = vector.extract_strided_slice %1 {offsets = [0, 2, 0], sizes = [8, 8, 4], strides = [1, 1, 1]} : vector<10x10x4xbf16> to vector<8x8x4xbf16>
    %16 = vector.shape_cast %15 : vector<8x8x4xbf16> to vector<64x4xbf16>
    %c2 = arith.constant 2 : index
    %c0_10 = arith.constant 0 : index
    %c0_11 = arith.constant 0 : index
    %17 = vector.load %arg2[%c2, %c0_10, %c0_11] : memref<9x4x8xbf16, #tpu.memory_space<vmem>>, vector<1x4x8xbf16>
    %18 = vector.shape_cast %17 : vector<1x4x8xbf16> to vector<4x8xbf16>
    %cst_12 = arith.constant dense<0.000000e+00> : vector<64x8xf32>
    %19 = tpu.matmul %16, %18, %cst_12 {dimension_numbers = #tpu.dot_dimension_numbers<[1], [0], [0], [1], [0, 0, 1, 1], [], []>} : vector<64x4xbf16>, vector<4x8xbf16>, vector<64x8xf32> -> vector<64x8xf32>
    %20 = arith.addf %14, %19 : vector<64x8xf32>
    %21 = vector.extract_strided_slice %1 {offsets = [1, 0, 0], sizes = [8, 8, 4], strides = [1, 1, 1]} : vector<10x10x4xbf16> to vector<8x8x4xbf16>
    %22 = vector.shape_cast %21 : vector<8x8x4xbf16> to vector<64x4xbf16>
    %c3 = arith.constant 3 : index
    %c0_13 = arith.constant 0 : index
    %c0_14 = arith.constant 0 : index
    %23 = vector.load %arg2[%c3, %c0_13, %c0_14] : memref<9x4x8xbf16, #tpu.memory_space<vmem>>, vector<1x4x8xbf16>
    %24 = vector.shape_cast %23 : vector<1x4x8xbf16> to vector<4x8xbf16>
    %cst_15 = arith.constant dense<0.000000e+00> : vector<64x8xf32>
    %25 = tpu.matmul %22, %24, %cst_15 {dimension_numbers = #tpu.dot_dimension_numbers<[1], [0], [0], [1], [0, 0, 1, 1], [], []>} : vector<64x4xbf16>, vector<4x8xbf16>, vector<64x8xf32> -> vector<64x8xf32>
    %26 = arith.addf %20, %25 : vector<64x8xf32>
    %27 = vector.extract_strided_slice %1 {offsets = [1, 1, 0], sizes = [8, 8, 4], strides = [1, 1, 1]} : vector<10x10x4xbf16> to vector<8x8x4xbf16>
    %28 = vector.shape_cast %27 : vector<8x8x4xbf16> to vector<64x4xbf16>
    %c4 = arith.constant 4 : index
    %c0_16 = arith.constant 0 : index
    %c0_17 = arith.constant 0 : index
    %29 = vector.load %arg2[%c4, %c0_16, %c0_17] : memref<9x4x8xbf16, #tpu.memory_space<vmem>>, vector<1x4x8xbf16>
    %30 = vector.shape_cast %29 : vector<1x4x8xbf16> to vector<4x8xbf16>
    %cst_18 = arith.constant dense<0.000000e+00> : vector<64x8xf32>
    %31 = tpu.matmul %28, %30, %cst_18 {dimension_numbers = #tpu.dot_dimension_numbers<[1], [0], [0], [1], [0, 0, 1, 1], [], []>} : vector<64x4xbf16>, vector<4x8xbf16>, vector<64x8xf32> -> vector<64x8xf32>
    %32 = arith.addf %26, %31 : vector<64x8xf32>
    %33 = vector.extract_strided_slice %1 {offsets = [1, 2, 0], sizes = [8, 8, 4], strides = [1, 1, 1]} : vector<10x10x4xbf16> to vector<8x8x4xbf16>
    %34 = vector.shape_cast %33 : vector<8x8x4xbf16> to vector<64x4xbf16>
    %c5 = arith.constant 5 : index
    %c0_19 = arith.constant 0 : index
    %c0_20 = arith.constant 0 : index
    %35 = vector.load %arg2[%c5, %c0_19, %c0_20] : memref<9x4x8xbf16, #tpu.memory_space<vmem>>, vector<1x4x8xbf16>
    %36 = vector.shape_cast %35 : vector<1x4x8xbf16> to vector<4x8xbf16>
    %cst_21 = arith.constant dense<0.000000e+00> : vector<64x8xf32>
    %37 = tpu.matmul %34, %36, %cst_21 {dimension_numbers = #tpu.dot_dimension_numbers<[1], [0], [0], [1], [0, 0, 1, 1], [], []>} : vector<64x4xbf16>, vector<4x8xbf16>, vector<64x8xf32> -> vector<64x8xf32>
    %38 = arith.addf %32, %37 : vector<64x8xf32>
    %39 = vector.extract_strided_slice %1 {offsets = [2, 0, 0], sizes = [8, 8, 4], strides = [1, 1, 1]} : vector<10x10x4xbf16> to vector<8x8x4xbf16>
    %40 = vector.shape_cast %39 : vector<8x8x4xbf16> to vector<64x4xbf16>
    %c6 = arith.constant 6 : index
    %c0_22 = arith.constant 0 : index
    %c0_23 = arith.constant 0 : index
    %41 = vector.load %arg2[%c6, %c0_22, %c0_23] : memref<9x4x8xbf16, #tpu.memory_space<vmem>>, vector<1x4x8xbf16>
    %42 = vector.shape_cast %41 : vector<1x4x8xbf16> to vector<4x8xbf16>
    %cst_24 = arith.constant dense<0.000000e+00> : vector<64x8xf32>
    %43 = tpu.matmul %40, %42, %cst_24 {dimension_numbers = #tpu.dot_dimension_numbers<[1], [0], [0], [1], [0, 0, 1, 1], [], []>} : vector<64x4xbf16>, vector<4x8xbf16>, vector<64x8xf32> -> vector<64x8xf32>
    %44 = arith.addf %38, %43 : vector<64x8xf32>
    %45 = vector.extract_strided_slice %1 {offsets = [2, 1, 0], sizes = [8, 8, 4], strides = [1, 1, 1]} : vector<10x10x4xbf16> to vector<8x8x4xbf16>
    %46 = vector.shape_cast %45 : vector<8x8x4xbf16> to vector<64x4xbf16>
    %c7 = arith.constant 7 : index
    %c0_25 = arith.constant 0 : index
    %c0_26 = arith.constant 0 : index
    %47 = vector.load %arg2[%c7, %c0_25, %c0_26] : memref<9x4x8xbf16, #tpu.memory_space<vmem>>, vector<1x4x8xbf16>
    %48 = vector.shape_cast %47 : vector<1x4x8xbf16> to vector<4x8xbf16>
    %cst_27 = arith.constant dense<0.000000e+00> : vector<64x8xf32>
    %49 = tpu.matmul %46, %48, %cst_27 {dimension_numbers = #tpu.dot_dimension_numbers<[1], [0], [0], [1], [0, 0, 1, 1], [], []>} : vector<64x4xbf16>, vector<4x8xbf16>, vector<64x8xf32> -> vector<64x8xf32>
    %50 = arith.addf %44, %49 : vector<64x8xf32>
    %51 = vector.extract_strided_slice %1 {offsets = [2, 2, 0], sizes = [8, 8, 4], strides = [1, 1, 1]} : vector<10x10x4xbf16> to vector<8x8x4xbf16>
    %52 = vector.shape_cast %51 : vector<8x8x4xbf16> to vector<64x4xbf16>
    %c8 = arith.constant 8 : index
    %c0_28 = arith.constant 0 : index
    %c0_29 = arith.constant 0 : index
    %53 = vector.load %arg2[%c8, %c0_28, %c0_29] : memref<9x4x8xbf16, #tpu.memory_space<vmem>>, vector<1x4x8xbf16>
    %54 = vector.shape_cast %53 : vector<1x4x8xbf16> to vector<4x8xbf16>
    %cst_30 = arith.constant dense<0.000000e+00> : vector<64x8xf32>
    %55 = tpu.matmul %52, %54, %cst_30 {dimension_numbers = #tpu.dot_dimension_numbers<[1], [0], [0], [1], [0, 0, 1, 1], [], []>} : vector<64x4xbf16>, vector<4x8xbf16>, vector<64x8xf32> -> vector<64x8xf32>
    %56 = arith.addf %50, %55 : vector<64x8xf32>
    %c0_31 = arith.constant 0 : index
    %c0_32 = arith.constant 0 : index
    %57 = vector.load %arg3[%c0_31, %c0_32] : memref<1x8xf32, #tpu.memory_space<vmem>>, vector<1x8xf32>
    %58 = vector.broadcast %57 : vector<1x8xf32> to vector<64x8xf32>
    %59 = arith.addf %56, %58 : vector<64x8xf32>
    %cst_33 = arith.constant 2.000000e+01 : f32
    %60 = vector.broadcast %cst_33 : f32 to vector<64x8xf32>
    %61 = arith.minimumf %59, %60 : vector<64x8xf32>
    %62 = math.exp %61 : vector<64x8xf32>
    %cst_34 = arith.constant 2.000000e+00 : f32
    %63 = vector.broadcast %cst_34 : f32 to vector<64x8xf32>
    %64 = arith.addf %62, %63 : vector<64x8xf32>
    %65 = arith.mulf %62, %64 : vector<64x8xf32>
    %cst_35 = arith.constant 2.000000e+01 : f32
    %66 = vector.broadcast %cst_35 : f32 to vector<64x8xf32>
    %67 = arith.cmpf ogt, %59, %66 : vector<64x8xf32>
    %68 = arith.mulf %59, %65 : vector<64x8xf32>
    %cst_36 = arith.constant 2.000000e+00 : f32
    %69 = vector.broadcast %cst_36 : f32 to vector<64x8xf32>
    %70 = arith.addf %65, %69 : vector<64x8xf32>
    %71 = tpu.reciprocal %70 {approx = true} : vector<64x8xf32> -> vector<64x8xf32>
    %72 = arith.mulf %68, %71 : vector<64x8xf32>
    %73 = arith.select %67, %59, %72 : vector<64x8xi1>, vector<64x8xf32>
    %c0_37 = arith.constant 0 : index
    %c0_38 = arith.constant 0 : index
    %c0_39 = arith.constant 0 : index
    %74 = vector.load %arg4[%c0_37, %c0_38, %c0_39] : memref<1x64x8xbf16, #tpu.memory_space<vmem>>, vector<1x64x8xbf16>
    %75 = vector.shape_cast %74 : vector<1x64x8xbf16> to vector<64x8xbf16>
    %76 = arith.extf %75 : vector<64x8xbf16> to vector<64x8xf32>
    %77 = arith.addf %76, %73 : vector<64x8xf32>
    %78 = arith.truncf %77 : vector<64x8xf32> to vector<64x8xbf16>
    %c0_40 = arith.constant 0 : index
    %c0_41 = arith.constant 0 : index
    %c0_42 = arith.constant 0 : index
    %79 = vector.load %arg5[%c0_40, %c0_41, %c0_42] : memref<1x64x8xbf16, #tpu.memory_space<vmem>>, vector<1x64x8xbf16>
    %80 = vector.shape_cast %79 : vector<1x64x8xbf16> to vector<64x8xbf16>
    %81 = vector.shape_cast %78 : vector<64x8xbf16> to vector<1x64x8xbf16>
    tpu.vector_store %arg5[%c0_40, %c0_41, %c0_42], %81 {strides = array<i32>} : memref<1x64x8xbf16, #tpu.memory_space<vmem>>, vector<1x64x8xbf16>,
    return
  }
  func.func @transform_0(%arg0: i32) -> (i32, i32, i32, i32) {
    %c0_i32 = arith.constant 0 : i32
    %c0_i32_0 = arith.constant 0 : i32
    %c0_i32_1 = arith.constant 0 : i32
    %c0_i32_2 = arith.constant 0 : i32
    return %arg0, %c0_i32, %c0_i32_0, %c0_i32_1 : i32, i32, i32, i32
  }
  func.func @transform_1(%arg0: i32) -> (i32, i32, i32) {
    %c0_i32 = arith.constant 0 : i32
    %c0_i32_0 = arith.constant 0 : i32
    %c0_i32_1 = arith.constant 0 : i32
    %c0_i32_2 = arith.constant 0 : i32
    return %c0_i32, %c0_i32_0, %c0_i32_1 : i32, i32, i32
  }
  func.func @transform_2(%arg0: i32) -> (i32, i32) {
    %c0_i32 = arith.constant 0 : i32
    %c0_i32_0 = arith.constant 0 : i32
    %c0_i32_1 = arith.constant 0 : i32
    return %c0_i32, %c0_i32_0 : i32, i32
  }
  func.func @transform_3(%arg0: i32) -> (i32, i32, i32) {
    %c0_i32 = arith.constant 0 : i32
    %c0_i32_0 = arith.constant 0 : i32
    %c0_i32_1 = arith.constant 0 : i32
    return %arg0, %c0_i32, %c0_i32_0 : i32, i32, i32
  }
  func.func @transform_4(%arg0: i32) -> (i32, i32, i32) {
    %c0_i32 = arith.constant 0 : i32
    %c0_i32_0 = arith.constant 0 : i32
    %c0_i32_1 = arith.constant 0 : i32
    return %arg0, %c0_i32, %c0_i32_0 : i32, i32, i32
  }
}

module attributes {stable_mosaic.version = 11 : i64} {
  func.func @_pw_kernel(%arg0: i32, %arg1: memref<128x8xbf16, #tpu.memory_space<vmem>>, %arg2: memref<8x8xbf16, #tpu.memory_space<vmem>>, %arg3: memref<1x8xf32, #tpu.memory_space<vmem>>, %arg4: memref<128x8xbf16, #tpu.memory_space<vmem>>) attributes {dimension_semantics = [#tpu.dimension_semantics<parallel>], iteration_bounds = array<i64: 1>, scalar_prefetch = 0 : i64, scratch_operands = 0 : i64, tpu.core_type = #tpu.core_type<tc>, window_params = [{transform_indices = @transform_0, window_bounds = array<i64: 128, 8>}, {pipeline_mode = #tpu.pipeline_mode<synchronous>, transform_indices = @transform_1, window_bounds = array<i64: 8, 8>}, {pipeline_mode = #tpu.pipeline_mode<synchronous>, transform_indices = @transform_2, window_bounds = array<i64: 1, 8>}, {transform_indices = @transform_3, window_bounds = array<i64: 128, 8>}]} {
    %c0 = arith.constant 0 : index
    %c0_0 = arith.constant 0 : index
    %0 = vector.load %arg1[%c0, %c0_0] : memref<128x8xbf16, #tpu.memory_space<vmem>>, vector<128x8xbf16>
    %c0_1 = arith.constant 0 : index
    %c0_2 = arith.constant 0 : index
    %1 = vector.load %arg2[%c0_1, %c0_2] : memref<8x8xbf16, #tpu.memory_space<vmem>>, vector<8x8xbf16>
    %cst = arith.constant dense<0.000000e+00> : vector<128x8xf32>
    %2 = tpu.matmul %0, %1, %cst {dimension_numbers = #tpu.dot_dimension_numbers<[1], [0], [0], [1], [0, 0, 1, 1], [], []>} : vector<128x8xbf16>, vector<8x8xbf16>, vector<128x8xf32> -> vector<128x8xf32>
    %c0_3 = arith.constant 0 : index
    %c0_4 = arith.constant 0 : index
    %3 = vector.load %arg3[%c0_3, %c0_4] : memref<1x8xf32, #tpu.memory_space<vmem>>, vector<1x8xf32>
    %4 = vector.broadcast %3 : vector<1x8xf32> to vector<128x8xf32>
    %5 = arith.addf %2, %4 : vector<128x8xf32>
    %cst_5 = arith.constant 2.000000e+01 : f32
    %6 = vector.broadcast %cst_5 : f32 to vector<128x8xf32>
    %7 = arith.minimumf %5, %6 : vector<128x8xf32>
    %8 = math.exp %7 : vector<128x8xf32>
    %cst_6 = arith.constant 2.000000e+00 : f32
    %9 = vector.broadcast %cst_6 : f32 to vector<128x8xf32>
    %10 = arith.addf %8, %9 : vector<128x8xf32>
    %11 = arith.mulf %8, %10 : vector<128x8xf32>
    %cst_7 = arith.constant 2.000000e+01 : f32
    %12 = vector.broadcast %cst_7 : f32 to vector<128x8xf32>
    %13 = arith.cmpf ogt, %5, %12 : vector<128x8xf32>
    %14 = arith.mulf %5, %11 : vector<128x8xf32>
    %cst_8 = arith.constant 2.000000e+00 : f32
    %15 = vector.broadcast %cst_8 : f32 to vector<128x8xf32>
    %16 = arith.addf %11, %15 : vector<128x8xf32>
    %17 = tpu.reciprocal %16 {approx = true} : vector<128x8xf32> -> vector<128x8xf32>
    %18 = arith.mulf %14, %17 : vector<128x8xf32>
    %19 = arith.select %13, %5, %18 : vector<128x8xi1>, vector<128x8xf32>
    %20 = arith.truncf %19 : vector<128x8xf32> to vector<128x8xbf16>
    %c0_9 = arith.constant 0 : index
    %c0_10 = arith.constant 0 : index
    %21 = vector.load %arg4[%c0_9, %c0_10] : memref<128x8xbf16, #tpu.memory_space<vmem>>, vector<128x8xbf16>
    tpu.vector_store %arg4[%c0_9, %c0_10], %20 {strides = array<i32>} : memref<128x8xbf16, #tpu.memory_space<vmem>>, vector<128x8xbf16>,
    return
  }
  func.func @transform_0(%arg0: i32) -> (i32, i32) {
    %c0_i32 = arith.constant 0 : i32
    %c0_i32_0 = arith.constant 0 : i32
    return %arg0, %c0_i32 : i32, i32
  }
  func.func @transform_1(%arg0: i32) -> (i32, i32) {
    %c0_i32 = arith.constant 0 : i32
    %c0_i32_0 = arith.constant 0 : i32
    %c0_i32_1 = arith.constant 0 : i32
    return %c0_i32, %c0_i32_0 : i32, i32
  }
  func.func @transform_2(%arg0: i32) -> (i32, i32) {
    %c0_i32 = arith.constant 0 : i32
    %c0_i32_0 = arith.constant 0 : i32
    %c0_i32_1 = arith.constant 0 : i32
    return %c0_i32, %c0_i32_0 : i32, i32
  }
  func.func @transform_3(%arg0: i32) -> (i32, i32) {
    %c0_i32 = arith.constant 0 : i32
    %c0_i32_0 = arith.constant 0 : i32
    return %arg0, %c0_i32 : i32, i32
  }
}

module attributes {stable_mosaic.version = 11 : i64} {
  func.func @_concat_pw_kernel(%arg0: i32, %arg1: memref<128x8xbf16, #tpu.memory_space<vmem>>, %arg2: memref<128x8xbf16, #tpu.memory_space<vmem>>, %arg3: memref<8x8xbf16, #tpu.memory_space<vmem>>, %arg4: memref<8x8xbf16, #tpu.memory_space<vmem>>, %arg5: memref<1x8xf32, #tpu.memory_space<vmem>>, %arg6: memref<128x8xbf16, #tpu.memory_space<vmem>>) attributes {dimension_semantics = [#tpu.dimension_semantics<parallel>], iteration_bounds = array<i64: 1>, scalar_prefetch = 0 : i64, scratch_operands = 0 : i64, tpu.core_type = #tpu.core_type<tc>, window_params = [{transform_indices = @transform_0, window_bounds = array<i64: 128, 8>}, {transform_indices = @transform_1, window_bounds = array<i64: 128, 8>}, {pipeline_mode = #tpu.pipeline_mode<synchronous>, transform_indices = @transform_2, window_bounds = array<i64: 8, 8>}, {pipeline_mode = #tpu.pipeline_mode<synchronous>, transform_indices = @transform_3, window_bounds = array<i64: 8, 8>}, {pipeline_mode = #tpu.pipeline_mode<synchronous>, transform_indices = @transform_4, window_bounds = array<i64: 1, 8>}, {transform_indices = @transform_5, window_bounds = array<i64: 128, 8>}]} {
    %c0 = arith.constant 0 : index
    %c0_0 = arith.constant 0 : index
    %0 = vector.load %arg1[%c0, %c0_0] : memref<128x8xbf16, #tpu.memory_space<vmem>>, vector<128x8xbf16>
    %c0_1 = arith.constant 0 : index
    %c0_2 = arith.constant 0 : index
    %1 = vector.load %arg3[%c0_1, %c0_2] : memref<8x8xbf16, #tpu.memory_space<vmem>>, vector<8x8xbf16>
    %cst = arith.constant dense<0.000000e+00> : vector<128x8xf32>
    %2 = tpu.matmul %0, %1, %cst {dimension_numbers = #tpu.dot_dimension_numbers<[1], [0], [0], [1], [0, 0, 1, 1], [], []>} : vector<128x8xbf16>, vector<8x8xbf16>, vector<128x8xf32> -> vector<128x8xf32>
    %c0_3 = arith.constant 0 : index
    %c0_4 = arith.constant 0 : index
    %3 = vector.load %arg2[%c0_3, %c0_4] : memref<128x8xbf16, #tpu.memory_space<vmem>>, vector<128x8xbf16>
    %c0_5 = arith.constant 0 : index
    %c0_6 = arith.constant 0 : index
    %4 = vector.load %arg4[%c0_5, %c0_6] : memref<8x8xbf16, #tpu.memory_space<vmem>>, vector<8x8xbf16>
    %cst_7 = arith.constant dense<0.000000e+00> : vector<128x8xf32>
    %5 = tpu.matmul %3, %4, %cst_7 {dimension_numbers = #tpu.dot_dimension_numbers<[1], [0], [0], [1], [0, 0, 1, 1], [], []>} : vector<128x8xbf16>, vector<8x8xbf16>, vector<128x8xf32> -> vector<128x8xf32>
    %6 = arith.addf %2, %5 : vector<128x8xf32>
    %c0_8 = arith.constant 0 : index
    %c0_9 = arith.constant 0 : index
    %7 = vector.load %arg5[%c0_8, %c0_9] : memref<1x8xf32, #tpu.memory_space<vmem>>, vector<1x8xf32>
    %8 = vector.broadcast %7 : vector<1x8xf32> to vector<128x8xf32>
    %9 = arith.addf %6, %8 : vector<128x8xf32>
    %cst_10 = arith.constant 2.000000e+01 : f32
    %10 = vector.broadcast %cst_10 : f32 to vector<128x8xf32>
    %11 = arith.minimumf %9, %10 : vector<128x8xf32>
    %12 = math.exp %11 : vector<128x8xf32>
    %cst_11 = arith.constant 2.000000e+00 : f32
    %13 = vector.broadcast %cst_11 : f32 to vector<128x8xf32>
    %14 = arith.addf %12, %13 : vector<128x8xf32>
    %15 = arith.mulf %12, %14 : vector<128x8xf32>
    %cst_12 = arith.constant 2.000000e+01 : f32
    %16 = vector.broadcast %cst_12 : f32 to vector<128x8xf32>
    %17 = arith.cmpf ogt, %9, %16 : vector<128x8xf32>
    %18 = arith.mulf %9, %15 : vector<128x8xf32>
    %cst_13 = arith.constant 2.000000e+00 : f32
    %19 = vector.broadcast %cst_13 : f32 to vector<128x8xf32>
    %20 = arith.addf %15, %19 : vector<128x8xf32>
    %21 = tpu.reciprocal %20 {approx = true} : vector<128x8xf32> -> vector<128x8xf32>
    %22 = arith.mulf %18, %21 : vector<128x8xf32>
    %23 = arith.select %17, %9, %22 : vector<128x8xi1>, vector<128x8xf32>
    %24 = arith.truncf %23 : vector<128x8xf32> to vector<128x8xbf16>
    %c0_14 = arith.constant 0 : index
    %c0_15 = arith.constant 0 : index
    %25 = vector.load %arg6[%c0_14, %c0_15] : memref<128x8xbf16, #tpu.memory_space<vmem>>, vector<128x8xbf16>
    tpu.vector_store %arg6[%c0_14, %c0_15], %24 {strides = array<i32>} : memref<128x8xbf16, #tpu.memory_space<vmem>>, vector<128x8xbf16>,
    return
  }
  func.func @transform_0(%arg0: i32) -> (i32, i32) {
    %c0_i32 = arith.constant 0 : i32
    %c0_i32_0 = arith.constant 0 : i32
    return %arg0, %c0_i32 : i32, i32
  }
  func.func @transform_1(%arg0: i32) -> (i32, i32) {
    %c0_i32 = arith.constant 0 : i32
    %c0_i32_0 = arith.constant 0 : i32
    return %arg0, %c0_i32 : i32, i32
  }
  func.func @transform_2(%arg0: i32) -> (i32, i32) {
    %c0_i32 = arith.constant 0 : i32
    %c0_i32_0 = arith.constant 0 : i32
    %c0_i32_1 = arith.constant 0 : i32
    return %c0_i32, %c0_i32_0 : i32, i32
  }
  func.func @transform_3(%arg0: i32) -> (i32, i32) {
    %c0_i32 = arith.constant 0 : i32
    %c0_i32_0 = arith.constant 0 : i32
    %c0_i32_1 = arith.constant 0 : i32
    return %c0_i32, %c0_i32_0 : i32, i32
  }
  func.func @transform_4(%arg0: i32) -> (i32, i32) {
    %c0_i32 = arith.constant 0 : i32
    %c0_i32_0 = arith.constant 0 : i32
    %c0_i32_1 = arith.constant 0 : i32
    return %c0_i32, %c0_i32_0 : i32, i32
  }
  func.func @transform_5(%arg0: i32) -> (i32, i32) {
    %c0_i32 = arith.constant 0 : i32
    %c0_i32_0 = arith.constant 0 : i32
    return %arg0, %c0_i32 : i32, i32
  }
}

</mosaic_0001>

<llo_original>
// kernel: csp_block_forward.8
$region0: #{csp_block_forward.8}
  #allocation0 [shape = 'u32[]', space=smem, size = 0x4, offset = 0x4, fixed_abs, tag = 'smem constant byte address 0x4 - core index']
  #allocation1 [shape = 'u32[72,128]{1,0:T(1,128)}', space=vmem, size = 0x9000, scoped, tag = 'internal scratch']
  %s0 = inlined_call_operand.vmem [shape: bf16[128,8], index: 0, kind: input, shape index: {}]
  %s1 = inlined_call_operand.vmem [shape: bf16[8,4], index: 1, kind: input, shape index: {}]
  %s2 = inlined_call_operand.vmem [shape: f32[1,4], index: 2, kind: input, shape index: {}]
  %s3 = inlined_call_operand.vmem [shape: bf16[128,4], index: 3, kind: output, shape index: {}]
  %s4 = sld [smem:[#allocation0]]
  $region22: #{csp_block_forward.8} parent=0
    _
  %s6 = ssub.s32 1, %s4
  %s7 = scalar_select 0, %s6, %s4
  // Predicated region
  $region2: #{csp_block_forward.8} parent=0 // pred_check
    _
  $region3: #{csp_block_forward.8} parent=0 // pred_check_branch
    %9 = sbr.rel (0) target = $region5
  $region4: #{csp_block_forward.8} parent=0 // pred_region
    _
  $region5: #{csp_block_forward.8} parent=0 // pred_fallthru
    _
  // Predicated region
  $region6: #{csp_block_forward.8} parent=0 // pred_check
    _
  $region7: #{csp_block_forward.8} parent=0 // pred_check_branch
    %11 = sbr.rel (0) target = $region9
  $region8: #{csp_block_forward.8} parent=0 // pred_region
    _
  $region9: #{csp_block_forward.8} parent=0 // pred_fallthru
    _
  // Predicated region
  $region10: #{csp_block_forward.8} parent=0 // pred_check
    _
  $region11: #{csp_block_forward.8} parent=0 // pred_check_branch
    %13 = sbr.rel (0) target = $region13
  $region12: #{csp_block_forward.8} parent=0 // pred_region
    _
  $region13: #{csp_block_forward.8} parent=0 // pred_fallthru
    _
  %v15 = vld [vmem:[%s0] sm:$0xf]
  %v16 = vld [vmem:[%s0 + $0x4] sm:$0xf]
  %v17 = vld [vmem:[%s0 + $0x8] sm:$0xf]
  %v18 = vld [vmem:[%s0 + $0xc] sm:$0xf]
  %v19 = vld [vmem:[%s0 + $0x10] sm:$0xf]
  %v20 = vld [vmem:[%s0 + $0x14] sm:$0xf]
  %v21 = vld [vmem:[%s0 + $0x18] sm:$0xf]
  %v22 = vld [vmem:[%s0 + $0x1c] sm:$0xf]
  %v23 = vld [vmem:[%s0 + $0x20] sm:$0xf]
  %v24 = vld [vmem:[%s0 + $0x24] sm:$0xf]
  %v25 = vld [vmem:[%s0 + $0x28] sm:$0xf]
  %v26 = vld [vmem:[%s0 + $0x2c] sm:$0xf]
  %v27 = vld [vmem:[%s0 + $0x30] sm:$0xf]
  %v28 = vld [vmem:[%s0 + $0x34] sm:$0xf]
  %v29 = vld [vmem:[%s0 + $0x38] sm:$0xf]
  %v30 = vld [vmem:[%s0 + $0x3c] sm:$0xf]
  %v31 = vld [vmem:[%s1] sm:$0xf]
  %v32 = vld [vmem:[%s2] sm:$0x1]
  %v34 = vperm.slane %v32, 0
  %v52 = vunpack.c.l.b16 %v15
  %v53 = vunpack.c.l.b16 %v16
  %v54 = vunpack.c.l.b16 %v17
  %v55 = vunpack.c.l.b16 %v18
  %v56 = vunpack.c.l.b16 %v19
  %v57 = vunpack.c.l.b16 %v20
  %v58 = vunpack.c.l.b16 %v21
  %v59 = vunpack.c.l.b16 %v22
  %v60 = vunpack.c.l.b16 %v23
  %v61 = vunpack.c.l.b16 %v24
  %v62 = vunpack.c.l.b16 %v25
  %v63 = vunpack.c.l.b16 %v26
  %v64 = vunpack.c.l.b16 %v27
  %v65 = vunpack.c.l.b16 %v28
  %v66 = vunpack.c.l.b16 %v29
  %v67 = vunpack.c.l.b16 %v30
  %v68 = vpack.c.b16 %v53, %v52
  %v69 = vpack.c.b16 %v55, %v54
  %v70 = vpack.c.b16 %v57, %v56
  %v71 = vpack.c.b16 %v59, %v58
  %v72 = vpack.c.b16 %v61, %v60
  %v73 = vpack.c.b16 %v63, %v62
  %v74 = vpack.c.b16 %v65, %v64
  %v75 = vpack.c.b16 %v67, %v66
  %vm76 = vcmask 64512
  %v78 = vsel %vm76, %v68, 0
  %v81 = vsel %vm76, %v69, 0
  %v84 = vsel %vm76, %v70, 0
  %v87 = vsel %vm76, %v71, 0
  %v90 = vsel %vm76, %v72, 0
  %v93 = vsel %vm76, %v73, 0
  %v96 = vsel %vm76, %v74, 0
  %v99 = vsel %vm76, %v75, 0
  %vm101 = vcmask 1043456
  %v103 = vsel %vm101, %v31, 0
  %105 = vmatpush.bf16.msra.mxu0 0
  %106 = vmatpush.bf16.msra.mxu0 0
  %107 = vmatpush.bf16.msra.mxu0 0
  %108 = vmatpush.bf16.msra.mxu0 0
  %109 = vmatpush.bf16.msra.mxu0 0
  %110 = vmatpush.bf16.msra.mxu0 0
  %111 = vmatpush.bf16.msra.mxu0 0
  %112 = vmatpush.bf16.msra.mxu0 %v103
  %113 = vmatmul.bf16.gmra.mxu0 %v78
  %v114 = vpop.f32.mrf.mxu0
  %v115 = vadd.f32 %v34, %v114
  %v116 = vpop.f32.mrf.mxu0
  %v117 = vadd.f32 %v34, %v116
  %118 = vmatmul.bf16.gmra.mxu0 %v81
  %v119 = vpop.f32.mrf.mxu0
  %v120 = vadd.f32 %v34, %v119
  %v121 = vpop.f32.mrf.mxu0
  %v122 = vadd.f32 %v34, %v121
  %123 = vmatmul.bf16.gmra.mxu0 %v84
  %v124 = vpop.f32.mrf.mxu0
  %v125 = vadd.f32 %v34, %v124
  %v126 = vpop.f32.mrf.mxu0
  %v127 = vadd.f32 %v34, %v126
  %128 = vmatmul.bf16.gmra.mxu0 %v87
  %v129 = vpop.f32.mrf.mxu0
  %v130 = vadd.f32 %v34, %v129
  %v131 = vpop.f32.mrf.mxu0
  %v132 = vadd.f32 %v34, %v131
  %133 = vmatmul.bf16.gmra.mxu0 %v90
  %v134 = vpop.f32.mrf.mxu0
  %v135 = vadd.f32 %v34, %v134
  %v136 = vpop.f32.mrf.mxu0
  %v137 = vadd.f32 %v34, %v136
  %138 = vmatmul.bf16.gmra.mxu0 %v93
  %v139 = vpop.f32.mrf.mxu0
  %v140 = vadd.f32 %v34, %v139
  %v141 = vpop.f32.mrf.mxu0
  %v142 = vadd.f32 %v34, %v141
  %143 = vmatmul.bf16.gmra.mxu0 %v96
  %v144 = vpop.f32.mrf.mxu0
  %v145 = vadd.f32 %v34, %v144
  %v146 = vpop.f32.mrf.mxu0
  %v147 = vadd.f32 %v34, %v146
  %148 = vmatmul.bf16.gmra.mxu0 %v99
  %v149 = vpop.f32.mrf.mxu0
  %v150 = vadd.f32 %v34, %v149
  %v151 = vpop.f32.mrf.mxu0
  %v152 = vadd.f32 %v34, %v151
  %153 = vdwg.mxu0
  %v154 = vmin.f32 %v115, 20.0
  %v155 = vmin.f32 %v117, 20.0
  %v156 = vmin.f32 %v120, 20.0
  %v157 = vmin.f32 %v122, 20.0
  %v158 = vmin.f32 %v125, 20.0
  %v159 = vmin.f32 %v127, 20.0
  %v160 = vmin.f32 %v130, 20.0
  %v161 = vmin.f32 %v132, 20.0
  %v162 = vmin.f32 %v135, 20.0
  %v163 = vmin.f32 %v137, 20.0
  %v164 = vmin.f32 %v140, 20.0
  %v165 = vmin.f32 %v142, 20.0
  %v166 = vmin.f32 %v145, 20.0
  %v167 = vmin.f32 %v147, 20.0
  %v168 = vmin.f32 %v150, 20.0
  %v169 = vmin.f32 %v152, 20.0
  %v170 = vmul.f32 %v154, 1.442695
  %v171 = vpow.pop %v170
  %v172 = vmul.f32 %v155, 1.442695
  %v173 = vpow.pop %v172
  %v174 = vmul.f32 %v156, 1.442695
  %v175 = vpow.pop %v174
  %v176 = vmul.f32 %v157, 1.442695
  %v177 = vpow.pop %v176
  %v178 = vmul.f32 %v158, 1.442695
  %v179 = vpow.pop %v178
  %v180 = vmul.f32 %v159, 1.442695
  %v181 = vpow.pop %v180
  %v182 = vmul.f32 %v160, 1.442695
  %v183 = vpow.pop %v182
  %v184 = vmul.f32 %v161, 1.442695
  %v185 = vpow.pop %v184
  %v186 = vmul.f32 %v162, 1.442695
  %v187 = vpow.pop %v186
  %v188 = vmul.f32 %v163, 1.442695
  %v189 = vpow.pop %v188
  %v190 = vmul.f32 %v164, 1.442695
  %v191 = vpow.pop %v190
  %v192 = vmul.f32 %v165, 1.442695
  %v193 = vpow.pop %v192
  %v194 = vmul.f32 %v166, 1.442695
  %v195 = vpow.pop %v194
  %v196 = vmul.f32 %v167, 1.442695
  %v197 = vpow.pop %v196
  %v198 = vmul.f32 %v168, 1.442695
  %v199 = vpow.pop %v198
  %v200 = vmul.f32 %v169, 1.442695
  %v201 = vpow.pop %v200
  %v202 = vadd.f32 %v171, 2.0
  %v203 = vadd.f32 %v173, 2.0
  %v204 = vadd.f32 %v175, 2.0
  %v205 = vadd.f32 %v177, 2.0
  %v206 = vadd.f32 %v179, 2.0
  %v207 = vadd.f32 %v181, 2.0
  %v208 = vadd.f32 %v183, 2.0
  %v209 = vadd.f32 %v185, 2.0
  %v210 = vadd.f32 %v187, 2.0
  %v211 = vadd.f32 %v189, 2.0
  %v212 = vadd.f32 %v191, 2.0
  %v213 = vadd.f32 %v193, 2.0
  %v214 = vadd.f32 %v195, 2.0
  %v215 = vadd.f32 %v197, 2.0
  %v216 = vadd.f32 %v199, 2.0
  %v217 = vadd.f32 %v201, 2.0
  %v218 = vmul.f32 %v171, %v202
  %v219 = vmul.f32 %v173, %v203
  %v220 = vmul.f32 %v175, %v204
  %v221 = vmul.f32 %v177, %v205
  %v222 = vmul.f32 %v179, %v206
  %v223 = vmul.f32 %v181, %v207
  %v224 = vmul.f32 %v183, %v208
  %v225 = vmul.f32 %v185, %v209
  %v226 = vmul.f32 %v187, %v210
  %v227 = vmul.f32 %v189, %v211
  %v228 = vmul.f32 %v191, %v212
  %v229 = vmul.f32 %v193, %v213
  %v230 = vmul.f32 %v195, %v214
  %v231 = vmul.f32 %v197, %v215
  %v232 = vmul.f32 %v199, %v216
  %v233 = vmul.f32 %v201, %v217
  %vm234 = vcmp.gt.f32.partialorder %v115, 20.0
  %vm235 = vcmp.gt.f32.partialorder %v117, 20.0
  %vm236 = vcmp.gt.f32.partialorder %v120, 20.0
  %vm237 = vcmp.gt.f32.partialorder %v122, 20.0
  %vm238 = vcmp.gt.f32.partialorder %v125, 20.0
  %vm239 = vcmp.gt.f32.partialorder %v127, 20.0
  %vm240 = vcmp.gt.f32.partialorder %v130, 20.0
  %vm241 = vcmp.gt.f32.partialorder %v132, 20.0
  %vm242 = vcmp.gt.f32.partialorder %v135, 20.0
  %vm243 = vcmp.gt.f32.partialorder %v137, 20.0
  %vm244 = vcmp.gt.f32.partialorder %v140, 20.0
  %vm245 = vcmp.gt.f32.partialorder %v142, 20.0
  %vm246 = vcmp.gt.f32.partialorder %v145, 20.0
  %vm247 = vcmp.gt.f32.partialorder %v147, 20.0
  %vm248 = vcmp.gt.f32.partialorder %v150, 20.0
  %vm249 = vcmp.gt.f32.partialorder %v152, 20.0
  %v250 = vmul.f32 %v115, %v218
  %v251 = vmul.f32 %v117, %v219
  %v252 = vmul.f32 %v120, %v220
  %v253 = vmul.f32 %v122, %v221
  %v254 = vmul.f32 %v125, %v222
  %v255 = vmul.f32 %v127, %v223
  %v256 = vmul.f32 %v130, %v224
  %v257 = vmul.f32 %v132, %v225
  %v258 = vmul.f32 %v135, %v226
  %v259 = vmul.f32 %v137, %v227
  %v260 = vmul.f32 %v140, %v228
  %v261 = vmul.f32 %v142, %v229
  %v262 = vmul.f32 %v145, %v230
  %v263 = vmul.f32 %v147, %v231
  %v264 = vmul.f32 %v150, %v232
  %v265 = vmul.f32 %v152, %v233
  %v266 = vadd.f32 %v218, 2.0
  %v267 = vadd.f32 %v219, 2.0
  %v268 = vadd.f32 %v220, 2.0
  %v269 = vadd.f32 %v221, 2.0
  %v270 = vadd.f32 %v222, 2.0
  %v271 = vadd.f32 %v223, 2.0
  %v272 = vadd.f32 %v224, 2.0
  %v273 = vadd.f32 %v225, 2.0
  %v274 = vadd.f32 %v226, 2.0
  %v275 = vadd.f32 %v227, 2.0
  %v276 = vadd.f32 %v228, 2.0
  %v277 = vadd.f32 %v229, 2.0
  %v278 = vadd.f32 %v230, 2.0
  %v279 = vadd.f32 %v231, 2.0
  %v280 = vadd.f32 %v232, 2.0
  %v281 = vadd.f32 %v233, 2.0
  %v282 = vrcp.pop %v266
  %v283 = vrcp.pop %v267
  %v284 = vrcp.pop %v268
  %v285 = vrcp.pop %v269
  %v286 = vrcp.pop %v270
  %v287 = vrcp.pop %v271
  %v288 = vrcp.pop %v272
  %v289 = vrcp.pop %v273
  %v290 = vrcp.pop %v274
  %v291 = vrcp.pop %v275
  %v292 = vrcp.pop %v276
  %v293 = vrcp.pop %v277
  %v294 = vrcp.pop %v278
  %v295 = vrcp.pop %v279
  %v296 = vrcp.pop %v280
  %v297 = vrcp.pop %v281
  %v298 = vmul.f32 %v250, %v282
  %v299 = vmul.f32 %v251, %v283
  %v300 = vmul.f32 %v252, %v284
  %v301 = vmul.f32 %v253, %v285
  %v302 = vmul.f32 %v254, %v286
  %v303 = vmul.f32 %v255, %v287
  %v304 = vmul.f32 %v256, %v288
  %v305 = vmul.f32 %v257, %v289
  %v306 = vmul.f32 %v258, %v290
  %v307 = vmul.f32 %v259, %v291
  %v308 = vmul.f32 %v260, %v292
  %v309 = vmul.f32 %v261, %v293
  %v310 = vmul.f32 %v262, %v294
  %v311 = vmul.f32 %v263, %v295
  %v312 = vmul.f32 %v264, %v296
  %v313 = vmul.f32 %v265, %v297
  %v314 = vsel %vm234, %v115, %v298
  %v315 = vsel %vm235, %v117, %v299
  %v316 = vsel %vm236, %v120, %v300
  %v317 = vsel %vm237, %v122, %v301
  %v318 = vsel %vm238, %v125, %v302
  %v319 = vsel %vm239, %v127, %v303
  %v320 = vsel %vm240, %v130, %v304
  %v321 = vsel %vm241, %v132, %v305
  %v322 = vsel %vm242, %v135, %v306
  %v323 = vsel %vm243, %v137, %v307
  %v324 = vsel %vm244, %v140, %v308
  %v325 = vsel %vm245, %v142, %v309
  %v326 = vsel %vm246, %v145, %v310
  %v327 = vsel %vm247, %v147, %v311
  %v328 = vsel %vm248, %v150, %v312
  %v329 = vsel %vm249, %v152, %v313
  %v330 = vpack.c.bf16 %v314, %v314
  %v331 = vpack.c.bf16 %v315, %v315
  %v332 = vpack.c.bf16 %v316, %v316
  %v333 = vpack.c.bf16 %v317, %v317
  %v334 = vpack.c.bf16 %v318, %v318
  %v335 = vpack.c.bf16 %v319, %v319
  %v336 = vpack.c.bf16 %v320, %v320
  %v337 = vpack.c.bf16 %v321, %v321
  %v338 = vpack.c.bf16 %v322, %v322
  %v339 = vpack.c.bf16 %v323, %v323
  %v340 = vpack.c.bf16 %v324, %v324
  %v341 = vpack.c.bf16 %v325, %v325
  %v342 = vpack.c.bf16 %v326, %v326
  %v343 = vpack.c.bf16 %v327, %v327
  %v344 = vpack.c.bf16 %v328, %v328
  %v345 = vpack.c.bf16 %v329, %v329
  %vm346 = vcmask 27648
  %347 = vst.msk [vmem:[%s3] sm:$0xf] %vm346, %v330
  %348 = vst.msk [vmem:[%s3 + $0x4] sm:$0xf] %vm346, %v331
  %349 = vst.msk [vmem:[%s3 + $0x8] sm:$0xf] %vm346, %v332
  %350 = vst.msk [vmem:[%s3 + $0xc] sm:$0xf] %vm346, %v333
  %351 = vst.msk [vmem:[%s3 + $0x10] sm:$0xf] %vm346, %v334
  %352 = vst.msk [vmem:[%s3 + $0x14] sm:$0xf] %vm346, %v335
  %353 = vst.msk [vmem:[%s3 + $0x18] sm:$0xf] %vm346, %v336
  %354 = vst.msk [vmem:[%s3 + $0x1c] sm:$0xf] %vm346, %v337
  %355 = vst.msk [vmem:[%s3 + $0x20] sm:$0xf] %vm346, %v338
  %356 = vst.msk [vmem:[%s3 + $0x24] sm:$0xf] %vm346, %v339
  %357 = vst.msk [vmem:[%s3 + $0x28] sm:$0xf] %vm346, %v340
  %358 = vst.msk [vmem:[%s3 + $0x2c] sm:$0xf] %vm346, %v341
  %359 = vst.msk [vmem:[%s3 + $0x30] sm:$0xf] %vm346, %v342
  %360 = vst.msk [vmem:[%s3 + $0x34] sm:$0xf] %vm346, %v343
  %361 = vst.msk [vmem:[%s3 + $0x38] sm:$0xf] %vm346, %v344
  %362 = vst.msk [vmem:[%s3 + $0x3c] sm:$0xf] %vm346, %v345
  // Predicated region
  $region14: #{csp_block_forward.8} parent=0 // pred_check
    _
  $region15: #{csp_block_forward.8} parent=0 // pred_check_branch
    %364 = sbr.rel (0) target = $region17
  $region16: #{csp_block_forward.8} parent=0 // pred_region
    _
  $region17: #{csp_block_forward.8} parent=0 // pred_fallthru
    _
  // Predicated region
  $region18: #{csp_block_forward.8} parent=0 // pred_check
    _
  $region19: #{csp_block_forward.8} parent=0 // pred_check_branch
    %366 = sbr.rel (0) target = $region21
  $region20: #{csp_block_forward.8} parent=0 // pred_region
    _
  $region21: #{csp_block_forward.8} parent=0 // pred_fallthru
    _

// kernel: csp_block_forward.7
$region0: #{csp_block_forward.7}
  #allocation0 [shape = 'u32[]', space=smem, size = 0x4, offset = 0x4, fixed_abs, tag = 'smem constant byte address 0x4 - core index']
  #allocation1 [shape = 'u32[72,128]{1,0:T(1,128)}', space=vmem, size = 0x9000, scoped, tag = 'internal scratch']
  %s0 = inlined_call_operand.vmem [shape: bf16[128,8], index: 0, kind: input, shape index: {}]
  %s1 = inlined_call_operand.vmem [shape: bf16[8,8], index: 1, kind: input, shape index: {}]
  %s2 = inlined_call_operand.vmem [shape: f32[1,8], index: 2, kind: input, shape index: {}]
  %s3 = inlined_call_operand.vmem [shape: bf16[8,8], index: 3, kind: input, shape index: {}]
  %s4 = inlined_call_operand.vmem [shape: f32[1,8], index: 4, kind: input, shape index: {}]
  %s5 = inlined_call_operand.vmem [shape: bf16[128,8], index: 5, kind: output, shape index: {0}]
  %s6 = inlined_call_operand.vmem [shape: bf16[128,8], index: 6, kind: output, shape index: {1}]
  %7 = xla_tuple %s5, %s6
  %s8 = sld [smem:[#allocation0]]
  $region38: #{csp_block_forward.7} parent=0
    _
  %s10 = ssub.s32 1, %s8
  %s11 = scalar_select 0, %s10, %s8
  // Predicated region
  $region2: #{csp_block_forward.7} parent=0 // pred_check
    _
  $region3: #{csp_block_forward.7} parent=0 // pred_check_branch
    %13 = sbr.rel (0) target = $region5
  $region4: #{csp_block_forward.7} parent=0 // pred_region
    _
  $region5: #{csp_block_forward.7} parent=0 // pred_fallthru
    _
  // Predicated region
  $region6: #{csp_block_forward.7} parent=0 // pred_check
    _
  $region7: #{csp_block_forward.7} parent=0 // pred_check_branch
    %15 = sbr.rel (0) target = $region9
  $region8: #{csp_block_forward.7} parent=0 // pred_region
    _
  $region9: #{csp_block_forward.7} parent=0 // pred_fallthru
    _
  // Predicated region
  $region10: #{csp_block_forward.7} parent=0 // pred_check
    _
  $region11: #{csp_block_forward.7} parent=0 // pred_check_branch
    %17 = sbr.rel (0) target = $region13
  $region12: #{csp_block_forward.7} parent=0 // pred_region
    _
  $region13: #{csp_block_forward.7} parent=0 // pred_fallthru
    _
  // Predicated region
  $region14: #{csp_block_forward.7} parent=0 // pred_check
    _
  $region15: #{csp_block_forward.7} parent=0 // pred_check_branch
    %19 = sbr.rel (0) target = $region17
  $region16: #{csp_block_forward.7} parent=0 // pred_region
    _
  $region17: #{csp_block_forward.7} parent=0 // pred_fallthru
    _
  // Predicated region
  $region18: #{csp_block_forward.7} parent=0 // pred_check
    _
  $region19: #{csp_block_forward.7} parent=0 // pred_check_branch
    %21 = sbr.rel (0) target = $region21
  $region20: #{csp_block_forward.7} parent=0 // pred_region
    _
  $region21: #{csp_block_forward.7} parent=0 // pred_fallthru
    _
  %v23 = vld [vmem:[%s0] sm:$0xf]
  %v24 = vld [vmem:[%s0 + $0x4] sm:$0xf]
  %v25 = vld [vmem:[%s0 + $0x8] sm:$0xf]
  %v26 = vld [vmem:[%s0 + $0xc] sm:$0xf]
  %v27 = vld [vmem:[%s0 + $0x10] sm:$0xf]
  %v28 = vld [vmem:[%s0 + $0x14] sm:$0xf]
  %v29 = vld [vmem:[%s0 + $0x18] sm:$0xf]
  %v30 = vld [vmem:[%s0 + $0x1c] sm:$0xf]
  %v31 = vld [vmem:[%s0 + $0x20] sm:$0xf]
  %v32 = vld [vmem:[%s0 + $0x24] sm:$0xf]
  %v33 = vld [vmem:[%s0 + $0x28] sm:$0xf]
  %v34 = vld [vmem:[%s0 + $0x2c] sm:$0xf]
  %v35 = vld [vmem:[%s0 + $0x30] sm:$0xf]
  %v36 = vld [vmem:[%s0 + $0x34] sm:$0xf]
  %v37 = vld [vmem:[%s0 + $0x38] sm:$0xf]
  %v38 = vld [vmem:[%s0 + $0x3c] sm:$0xf]
  %v39 = vld [vmem:[%s1] sm:$0xf]
  %v40 = vld [vmem:[%s2] sm:$0x1]
  %v42 = vperm.slane %v40, 0
  %v60 = vunpack.c.l.b16 %v23
  %v61 = vunpack.c.l.b16 %v24
  %v62 = vunpack.c.l.b16 %v25
  %v63 = vunpack.c.l.b16 %v26
  %v64 = vunpack.c.l.b16 %v27
  %v65 = vunpack.c.l.b16 %v28
  %v66 = vunpack.c.l.b16 %v29
  %v67 = vunpack.c.l.b16 %v30
  %v68 = vunpack.c.l.b16 %v31
  %v69 = vunpack.c.l.b16 %v32
  %v70 = vunpack.c.l.b16 %v33
  %v71 = vunpack.c.l.b16 %v34
  %v72 = vunpack.c.l.b16 %v35
  %v73 = vunpack.c.l.b16 %v36
  %v74 = vunpack.c.l.b16 %v37
  %v75 = vunpack.c.l.b16 %v38
  %v76 = vpack.c.b16 %v61, %v60
  %v77 = vpack.c.b16 %v63, %v62
  %v78 = vpack.c.b16 %v65, %v64
  %v79 = vpack.c.b16 %v67, %v66
  %v80 = vpack.c.b16 %v69, %v68
  %v81 = vpack.c.b16 %v71, %v70
  %v82 = vpack.c.b16 %v73, %v72
  %v83 = vpack.c.b16 %v75, %v74
  %vm84 = vcmask 64512
  %v86 = vsel %vm84, %v76, 0
  %v89 = vsel %vm84, %v77, 0
  %v92 = vsel %vm84, %v78, 0
  %v95 = vsel %vm84, %v79, 0
  %v98 = vsel %vm84, %v80, 0
  %v101 = vsel %vm84, %v81, 0
  %v104 = vsel %vm84, %v82, 0
  %v107 = vsel %vm84, %v83, 0
  %vm109 = vcmask 1043456
  %v111 = vsel %vm109, %v39, 0
  %113 = vmatpush.bf16.msra.mxu0 0
  %114 = vmatpush.bf16.msra.mxu0 0
  %115 = vmatpush.bf16.msra.mxu0 0
  %116 = vmatpush.bf16.msra.mxu0 0
  %117 = vmatpush.bf16.msra.mxu0 0
  %118 = vmatpush.bf16.msra.mxu0 0
  %119 = vmatpush.bf16.msra.mxu0 0
  %120 = vmatpush.bf16.msra.mxu0 %v111
  %121 = vmatmul.bf16.gmra.mxu0 %v86
  %v122 = vpop.f32.mrf.mxu0
  %v123 = vadd.f32 %v42, %v122
  %v124 = vpop.f32.mrf.mxu0
  %v125 = vadd.f32 %v42, %v124
  %126 = vmatmul.bf16.gmra.mxu0 %v89
  %v127 = vpop.f32.mrf.mxu0
  %v128 = vadd.f32 %v42, %v127
  %v129 = vpop.f32.mrf.mxu0
  %v130 = vadd.f32 %v42, %v129
  %131 = vmatmul.bf16.gmra.mxu0 %v92
  %v132 = vpop.f32.mrf.mxu0
  %v133 = vadd.f32 %v42, %v132
  %v134 = vpop.f32.mrf.mxu0
  %v135 = vadd.f32 %v42, %v134
  %136 = vmatmul.bf16.gmra.mxu0 %v95
  %v137 = vpop.f32.mrf.mxu0
  %v138 = vadd.f32 %v42, %v137
  %v139 = vpop.f32.mrf.mxu0
  %v140 = vadd.f32 %v42, %v139
  %141 = vmatmul.bf16.gmra.mxu0 %v98
  %v142 = vpop.f32.mrf.mxu0
  %v143 = vadd.f32 %v42, %v142
  %v144 = vpop.f32.mrf.mxu0
  %v145 = vadd.f32 %v42, %v144
  %146 = vmatmul.bf16.gmra.mxu0 %v101
  %v147 = vpop.f32.mrf.mxu0
  %v148 = vadd.f32 %v42, %v147
  %v149 = vpop.f32.mrf.mxu0
  %v150 = vadd.f32 %v42, %v149
  %151 = vmatmul.bf16.gmra.mxu0 %v104
  %v152 = vpop.f32.mrf.mxu0
  %v153 = vadd.f32 %v42, %v152
  %v154 = vpop.f32.mrf.mxu0
  %v155 = vadd.f32 %v42, %v154
  %156 = vmatmul.bf16.gmra.mxu0 %v107
  %v157 = vpop.f32.mrf.mxu0
  %v158 = vadd.f32 %v42, %v157
  %v159 = vpop.f32.mrf.mxu0
  %v160 = vadd.f32 %v42, %v159
  %161 = vdwg.mxu0
  %v162 = vmin.f32 %v123, 20.0
  %v163 = vmin.f32 %v125, 20.0
  %v164 = vmin.f32 %v128, 20.0
  %v165 = vmin.f32 %v130, 20.0
  %v166 = vmin.f32 %v133, 20.0
  %v167 = vmin.f32 %v135, 20.0
  %v168 = vmin.f32 %v138, 20.0
  %v169 = vmin.f32 %v140, 20.0
  %v170 = vmin.f32 %v143, 20.0
  %v171 = vmin.f32 %v145, 20.0
  %v172 = vmin.f32 %v148, 20.0
  %v173 = vmin.f32 %v150, 20.0
  %v174 = vmin.f32 %v153, 20.0
  %v175 = vmin.f32 %v155, 20.0
  %v176 = vmin.f32 %v158, 20.0
  %v177 = vmin.f32 %v160, 20.0
  %v178 = vmul.f32 %v162, 1.442695
  %v179 = vpow.pop %v178
  %v180 = vmul.f32 %v163, 1.442695
  %v181 = vpow.pop %v180
  %v182 = vmul.f32 %v164, 1.442695
  %v183 = vpow.pop %v182
  %v184 = vmul.f32 %v165, 1.442695
  %v185 = vpow.pop %v184
  %v186 = vmul.f32 %v166, 1.442695
  %v187 = vpow.pop %v186
  %v188 = vmul.f32 %v167, 1.442695
  %v189 = vpow.pop %v188
  %v190 = vmul.f32 %v168, 1.442695
  %v191 = vpow.pop %v190
  %v192 = vmul.f32 %v169, 1.442695
  %v193 = vpow.pop %v192
  %v194 = vmul.f32 %v170, 1.442695
  %v195 = vpow.pop %v194
  %v196 = vmul.f32 %v171, 1.442695
  %v197 = vpow.pop %v196
  %v198 = vmul.f32 %v172, 1.442695
  %v199 = vpow.pop %v198
  %v200 = vmul.f32 %v173, 1.442695
  %v201 = vpow.pop %v200
  %v202 = vmul.f32 %v174, 1.442695
  %v203 = vpow.pop %v202
  %v204 = vmul.f32 %v175, 1.442695
  %v205 = vpow.pop %v204
  %v206 = vmul.f32 %v176, 1.442695
  %v207 = vpow.pop %v206
  %v208 = vmul.f32 %v177, 1.442695
  %v209 = vpow.pop %v208
  %v210 = vadd.f32 %v179, 2.0
  %v211 = vadd.f32 %v181, 2.0
  %v212 = vadd.f32 %v183, 2.0
  %v213 = vadd.f32 %v185, 2.0
  %v214 = vadd.f32 %v187, 2.0
  %v215 = vadd.f32 %v189, 2.0
  %v216 = vadd.f32 %v191, 2.0
  %v217 = vadd.f32 %v193, 2.0
  %v218 = vadd.f32 %v195, 2.0
  %v219 = vadd.f32 %v197, 2.0
  %v220 = vadd.f32 %v199, 2.0
  %v221 = vadd.f32 %v201, 2.0
  %v222 = vadd.f32 %v203, 2.0
  %v223 = vadd.f32 %v205, 2.0
  %v224 = vadd.f32 %v207, 2.0
  %v225 = vadd.f32 %v209, 2.0
  %v226 = vmul.f32 %v179, %v210
  %v227 = vmul.f32 %v181, %v211
  %v228 = vmul.f32 %v183, %v212
  %v229 = vmul.f32 %v185, %v213
  %v230 = vmul.f32 %v187, %v214
  %v231 = vmul.f32 %v189, %v215
  %v232 = vmul.f32 %v191, %v216
  %v233 = vmul.f32 %v193, %v217
  %v234 = vmul.f32 %v195, %v218
  %v235 = vmul.f32 %v197, %v219
  %v236 = vmul.f32 %v199, %v220
  %v237 = vmul.f32 %v201, %v221
  %v238 = vmul.f32 %v203, %v222
  %v239 = vmul.f32 %v205, %v223
  %v240 = vmul.f32 %v207, %v224
  %v241 = vmul.f32 %v209, %v225
  %vm242 = vcmp.gt.f32.partialorder %v123, 20.0
  %vm243 = vcmp.gt.f32.partialorder %v125, 20.0
  %vm244 = vcmp.gt.f32.partialorder %v128, 20.0
  %vm245 = vcmp.gt.f32.partialorder %v130, 20.0
  %vm246 = vcmp.gt.f32.partialorder %v133, 20.0
  %vm247 = vcmp.gt.f32.partialorder %v135, 20.0
  %vm248 = vcmp.gt.f32.partialorder %v138, 20.0
  %vm249 = vcmp.gt.f32.partialorder %v140, 20.0
  %vm250 = vcmp.gt.f32.partialorder %v143, 20.0
  %vm251 = vcmp.gt.f32.partialorder %v145, 20.0
  %vm252 = vcmp.gt.f32.partialorder %v148, 20.0
  %vm253 = vcmp.gt.f32.partialorder %v150, 20.0
  %vm254 = vcmp.gt.f32.partialorder %v153, 20.0
  %vm255 = vcmp.gt.f32.partialorder %v155, 20.0
  %vm256 = vcmp.gt.f32.partialorder %v158, 20.0
  %vm257 = vcmp.gt.f32.partialorder %v160, 20.0
  %v258 = vmul.f32 %v123, %v226
  %v259 = vmul.f32 %v125, %v227
  %v260 = vmul.f32 %v128, %v228
  %v261 = vmul.f32 %v130, %v229
  %v262 = vmul.f32 %v133, %v230
  %v263 = vmul.f32 %v135, %v231
  %v264 = vmul.f32 %v138, %v232
  %v265 = vmul.f32 %v140, %v233
  %v266 = vmul.f32 %v143, %v234
  %v267 = vmul.f32 %v145, %v235
  %v268 = vmul.f32 %v148, %v236
  %v269 = vmul.f32 %v150, %v237
  %v270 = vmul.f32 %v153, %v238
  %v271 = vmul.f32 %v155, %v239
  %v272 = vmul.f32 %v158, %v240
  %v273 = vmul.f32 %v160, %v241
  %v274 = vadd.f32 %v226, 2.0
  %v275 = vadd.f32 %v227, 2.0
  %v276 = vadd.f32 %v228, 2.0
  %v277 = vadd.f32 %v229, 2.0
  %v278 = vadd.f32 %v230, 2.0
  %v279 = vadd.f32 %v231, 2.0
  %v280 = vadd.f32 %v232, 2.0
  %v281 = vadd.f32 %v233, 2.0
  %v282 = vadd.f32 %v234, 2.0
  %v283 = vadd.f32 %v235, 2.0
  %v284 = vadd.f32 %v236, 2.0
  %v285 = vadd.f32 %v237, 2.0
  %v286 = vadd.f32 %v238, 2.0
  %v287 = vadd.f32 %v239, 2.0
  %v288 = vadd.f32 %v240, 2.0
  %v289 = vadd.f32 %v241, 2.0
  %v290 = vrcp.pop %v274
  %v291 = vrcp.pop %v275
  %v292 = vrcp.pop %v276
  %v293 = vrcp.pop %v277
  %v294 = vrcp.pop %v278
  %v295 = vrcp.pop %v279
  %v296 = vrcp.pop %v280
  %v297 = vrcp.pop %v281
  %v298 = vrcp.pop %v282
  %v299 = vrcp.pop %v283
  %v300 = vrcp.pop %v284
  %v301 = vrcp.pop %v285
  %v302 = vrcp.pop %v286
  %v303 = vrcp.pop %v287
  %v304 = vrcp.pop %v288
  %v305 = vrcp.pop %v289
  %v306 = vmul.f32 %v258, %v290
  %v307 = vmul.f32 %v259, %v291
  %v308 = vmul.f32 %v260, %v292
  %v309 = vmul.f32 %v261, %v293
  %v310 = vmul.f32 %v262, %v294
  %v311 = vmul.f32 %v263, %v295
  %v312 = vmul.f32 %v264, %v296
  %v313 = vmul.f32 %v265, %v297
  %v314 = vmul.f32 %v266, %v298
  %v315 = vmul.f32 %v267, %v299
  %v316 = vmul.f32 %v268, %v300
  %v317 = vmul.f32 %v269, %v301
  %v318 = vmul.f32 %v270, %v302
  %v319 = vmul.f32 %v271, %v303
  %v320 = vmul.f32 %v272, %v304
  %v321 = vmul.f32 %v273, %v305
  %v322 = vsel %vm242, %v123, %v306
  %v323 = vsel %vm243, %v125, %v307
  %v324 = vsel %vm244, %v128, %v308
  %v325 = vsel %vm245, %v130, %v309
  %v326 = vsel %vm246, %v133, %v310
  %v327 = vsel %vm247, %v135, %v311
  %v328 = vsel %vm248, %v138, %v312
  %v329 = vsel %vm249, %v140, %v313
  %v330 = vsel %vm250, %v143, %v314
  %v331 = vsel %vm251, %v145, %v315
  %v332 = vsel %vm252, %v148, %v316
  %v333 = vsel %vm253, %v150, %v317
  %v334 = vsel %vm254, %v153, %v318
  %v335 = vsel %vm255, %v155, %v319
  %v336 = vsel %vm256, %v158, %v320
  %v337 = vsel %vm257, %v160, %v321
  %v338 = vpack.c.bf16 %v322, %v322
  %v339 = vpack.c.bf16 %v323, %v323
  %v340 = vpack.c.bf16 %v324, %v324
  %v341 = vpack.c.bf16 %v325, %v325
  %v342 = vpack.c.bf16 %v326, %v326
  %v343 = vpack.c.bf16 %v327, %v327
  %v344 = vpack.c.bf16 %v328, %v328
  %v345 = vpack.c.bf16 %v329, %v329
  %v346 = vpack.c.bf16 %v330, %v330
  %v347 = vpack.c.bf16 %v331, %v331
  %v348 = vpack.c.bf16 %v332, %v332
  %v349 = vpack.c.bf16 %v333, %v333
  %v350 = vpack.c.bf16 %v334, %v334
  %v351 = vpack.c.bf16 %v335, %v335
  %v352 = vpack.c.bf16 %v336, %v336
  %v353 = vpack.c.bf16 %v337, %v337
  %vm354 = vcmask 60416
  %355 = vst.msk [vmem:[%s5] sm:$0xf] %vm354, %v338
  %356 = vst.msk [vmem:[%s5 + $0x4] sm:$0xf] %vm354, %v339
  %357 = vst.msk [vmem:[%s5 + $0x8] sm:$0xf] %vm354, %v340
  %358 = vst.msk [vmem:[%s5 + $0xc] sm:$0xf] %vm354, %v341
  %359 = vst.msk [vmem:[%s5 + $0x10] sm:$0xf] %vm354, %v342
  %360 = vst.msk [vmem:[%s5 + $0x14] sm:$0xf] %vm354, %v343
  %361 = vst.msk [vmem:[%s5 + $0x18] sm:$0xf] %vm354, %v344
  %362 = vst.msk [vmem:[%s5 + $0x1c] sm:$0xf] %vm354, %v345
  %363 = vst.msk [vmem:[%s5 + $0x20] sm:$0xf] %vm354, %v346
  %364 = vst.msk [vmem:[%s5 + $0x24] sm:$0xf] %vm354, %v347
  %365 = vst.msk [vmem:[%s5 + $0x28] sm:$0xf] %vm354, %v348
  %366 = vst.msk [vmem:[%s5 + $0x2c] sm:$0xf] %vm354, %v349
  %367 = vst.msk [vmem:[%s5 + $0x30] sm:$0xf] %vm354, %v350
  %368 = vst.msk [vmem:[%s5 + $0x34] sm:$0xf] %vm354, %v351
  %369 = vst.msk [vmem:[%s5 + $0x38] sm:$0xf] %vm354, %v352
  %370 = vst.msk [vmem:[%s5 + $0x3c] sm:$0xf] %vm354, %v353
  %v371 = vld [vmem:[%s3] sm:$0xf]
  %v372 = vld [vmem:[%s4] sm:$0x1]
  %v374 = vperm.slane %v372, 0
  %v377 = vsel %vm109, %v371, 0
  %379 = vmatpush.bf16.msra.mxu0 0
  %380 = vmatpush.bf16.msra.mxu0 0
  %381 = vmatpush.bf16.msra.mxu0 0
  %382 = vmatpush.bf16.msra.mxu0 0
  %383 = vmatpush.bf16.msra.mxu0 0
  %384 = vmatpush.bf16.msra.mxu0 0
  %385 = vmatpush.bf16.msra.mxu0 0
  %386 = vmatpush.bf16.msra.mxu0 %v377
  %387 = vmatmul.bf16.gmra.mxu0 %v86
  %v388 = vpop.f32.mrf.mxu0
  %v389 = vadd.f32 %v374, %v388
  %v390 = vpop.f32.mrf.mxu0
  %v391 = vadd.f32 %v374, %v390
  %392 = vmatmul.bf16.gmra.mxu0 %v89
  %v393 = vpop.f32.mrf.mxu0
  %v394 = vadd.f32 %v374, %v393
  %v395 = vpop.f32.mrf.mxu0
  %v396 = vadd.f32 %v374, %v395
  %397 = vmatmul.bf16.gmra.mxu0 %v92
  %v398 = vpop.f32.mrf.mxu0
  %v399 = vadd.f32 %v374, %v398
  %v400 = vpop.f32.mrf.mxu0
  %v401 = vadd.f32 %v374, %v400
  %402 = vmatmul.bf16.gmra.mxu0 %v95
  %v403 = vpop.f32.mrf.mxu0
  %v404 = vadd.f32 %v374, %v403
  %v405 = vpop.f32.mrf.mxu0
  %v406 = vadd.f32 %v374, %v405
  %407 = vmatmul.bf16.gmra.mxu0 %v98
  %v408 = vpop.f32.mrf.mxu0
  %v409 = vadd.f32 %v374, %v408
  %v410 = vpop.f32.mrf.mxu0
  %v411 = vadd.f32 %v374, %v410
  %412 = vmatmul.bf16.gmra.mxu0 %v101
  %v413 = vpop.f32.mrf.mxu0
  %v414 = vadd.f32 %v374, %v413
  %v415 = vpop.f32.mrf.mxu0
  %v416 = vadd.f32 %v374, %v415
  %417 = vmatmul.bf16.gmra.mxu0 %v104
  %v418 = vpop.f32.mrf.mxu0
  %v419 = vadd.f32 %v374, %v418
  %v420 = vpop.f32.mrf.mxu0
  %v421 = vadd.f32 %v374, %v420
  %422 = vmatmul.bf16.gmra.mxu0 %v107
  %v423 = vpop.f32.mrf.mxu0
  %v424 = vadd.f32 %v374, %v423
  %v425 = vpop.f32.mrf.mxu0
  %v426 = vadd.f32 %v374, %v425
  %427 = vdwg.mxu0
  %v428 = vmin.f32 %v389, 20.0
  %v429 = vmin.f32 %v391, 20.0
  %v430 = vmin.f32 %v394, 20.0
  %v431 = vmin.f32 %v396, 20.0
  %v432 = vmin.f32 %v399, 20.0
  %v433 = vmin.f32 %v401, 20.0
  %v434 = vmin.f32 %v404, 20.0
  %v435 = vmin.f32 %v406, 20.0
  %v436 = vmin.f32 %v409, 20.0
  %v437 = vmin.f32 %v411, 20.0
  %v438 = vmin.f32 %v414, 20.0
  %v439 = vmin.f32 %v416, 20.0
  %v440 = vmin.f32 %v419, 20.0
  %v441 = vmin.f32 %v421, 20.0
  %v442 = vmin.f32 %v424, 20.0
  %v443 = vmin.f32 %v426, 20.0
  %v444 = vmul.f32 %v428, 1.442695
  %v445 = vpow.pop %v444
  %v446 = vmul.f32 %v429, 1.442695
  %v447 = vpow.pop %v446
  %v448 = vmul.f32 %v430, 1.442695
  %v449 = vpow.pop %v448
  %v450 = vmul.f32 %v431, 1.442695
  %v451 = vpow.pop %v450
  %v452 = vmul.f32 %v432, 1.442695
  %v453 = vpow.pop %v452
  %v454 = vmul.f32 %v433, 1.442695
  %v455 = vpow.pop %v454
  %v456 = vmul.f32 %v434, 1.442695
  %v457 = vpow.pop %v456
  %v458 = vmul.f32 %v435, 1.442695
  %v459 = vpow.pop %v458
  %v460 = vmul.f32 %v436, 1.442695
  %v461 = vpow.pop %v460
  %v462 = vmul.f32 %v437, 1.442695
  %v463 = vpow.pop %v462
  %v464 = vmul.f32 %v438, 1.442695
  %v465 = vpow.pop %v464
  %v466 = vmul.f32 %v439, 1.442695
  %v467 = vpow.pop %v466
  %v468 = vmul.f32 %v440, 1.442695
  %v469 = vpow.pop %v468
  %v470 = vmul.f32 %v441, 1.442695
  %v471 = vpow.pop %v470
  %v472 = vmul.f32 %v442, 1.442695
  %v473 = vpow.pop %v472
  %v474 = vmul.f32 %v443, 1.442695
  %v475 = vpow.pop %v474
  %v476 = vadd.f32 %v445, 2.0
  %v477 = vadd.f32 %v447, 2.0
  %v478 = vadd.f32 %v449, 2.0
  %v479 = vadd.f32 %v451, 2.0
  %v480 = vadd.f32 %v453, 2.0
  %v481 = vadd.f32 %v455, 2.0
  %v482 = vadd.f32 %v457, 2.0
  %v483 = vadd.f32 %v459, 2.0
  %v484 = vadd.f32 %v461, 2.0
  %v485 = vadd.f32 %v463, 2.0
  %v486 = vadd.f32 %v465, 2.0
  %v487 = vadd.f32 %v467, 2.0
  %v488 = vadd.f32 %v469, 2.0
  %v489 = vadd.f32 %v471, 2.0
  %v490 = vadd.f32 %v473, 2.0
  %v491 = vadd.f32 %v475, 2.0
  %v492 = vmul.f32 %v445, %v476
  %v493 = vmul.f32 %v447, %v477
  %v494 = vmul.f32 %v449, %v478
  %v495 = vmul.f32 %v451, %v479
  %v496 = vmul.f32 %v453, %v480
  %v497 = vmul.f32 %v455, %v481
  %v498 = vmul.f32 %v457, %v482
  %v499 = vmul.f32 %v459, %v483
  %v500 = vmul.f32 %v461, %v484
  %v501 = vmul.f32 %v463, %v485
  %v502 = vmul.f32 %v465, %v486
  %v503 = vmul.f32 %v467, %v487
  %v504 = vmul.f32 %v469, %v488
  %v505 = vmul.f32 %v471, %v489
  %v506 = vmul.f32 %v473, %v490
  %v507 = vmul.f32 %v475, %v491
  %vm508 = vcmp.gt.f32.partialorder %v389, 20.0
  %vm509 = vcmp.gt.f32.partialorder %v391, 20.0
  %vm510 = vcmp.gt.f32.partialorder %v394, 20.0
  %vm511 = vcmp.gt.f32.partialorder %v396, 20.0
  %vm512 = vcmp.gt.f32.partialorder %v399, 20.0
  %vm513 = vcmp.gt.f32.partialorder %v401, 20.0
  %vm514 = vcmp.gt.f32.partialorder %v404, 20.0
  %vm515 = vcmp.gt.f32.partialorder %v406, 20.0
  %vm516 = vcmp.gt.f32.partialorder %v409, 20.0
  %vm517 = vcmp.gt.f32.partialorder %v411, 20.0
  %vm518 = vcmp.gt.f32.partialorder %v414, 20.0
  %vm519 = vcmp.gt.f32.partialorder %v416, 20.0
  %vm520 = vcmp.gt.f32.partialorder %v419, 20.0
  %vm521 = vcmp.gt.f32.partialorder %v421, 20.0
  %vm522 = vcmp.gt.f32.partialorder %v424, 20.0
  %vm523 = vcmp.gt.f32.partialorder %v426, 20.0
  %v524 = vmul.f32 %v389, %v492
  %v525 = vmul.f32 %v391, %v493
  %v526 = vmul.f32 %v394, %v494
  %v527 = vmul.f32 %v396, %v495
  %v528 = vmul.f32 %v399, %v496
  %v529 = vmul.f32 %v401, %v497
  %v530 = vmul.f32 %v404, %v498
  %v531 = vmul.f32 %v406, %v499
  %v532 = vmul.f32 %v409, %v500
  %v533 = vmul.f32 %v411, %v501
  %v534 = vmul.f32 %v414, %v502
  %v535 = vmul.f32 %v416, %v503
  %v536 = vmul.f32 %v419, %v504
  %v537 = vmul.f32 %v421, %v505
  %v538 = vmul.f32 %v424, %v506
  %v539 = vmul.f32 %v426, %v507
  %v540 = vadd.f32 %v492, 2.0
  %v541 = vadd.f32 %v493, 2.0
  %v542 = vadd.f32 %v494, 2.0
  %v543 = vadd.f32 %v495, 2.0
  %v544 = vadd.f32 %v496, 2.0
  %v545 = vadd.f32 %v497, 2.0
  %v546 = vadd.f32 %v498, 2.0
  %v547 = vadd.f32 %v499, 2.0
  %v548 = vadd.f32 %v500, 2.0
  %v549 = vadd.f32 %v501, 2.0
  %v550 = vadd.f32 %v502, 2.0
  %v551 = vadd.f32 %v503, 2.0
  %v552 = vadd.f32 %v504, 2.0
  %v553 = vadd.f32 %v505, 2.0
  %v554 = vadd.f32 %v506, 2.0
  %v555 = vadd.f32 %v507, 2.0
  %v556 = vrcp.pop %v540
  %v557 = vrcp.pop %v541
  %v558 = vrcp.pop %v542
  %v559 = vrcp.pop %v543
  %v560 = vrcp.pop %v544
  %v561 = vrcp.pop %v545
  %v562 = vrcp.pop %v546
  %v563 = vrcp.pop %v547
  %v564 = vrcp.pop %v548
  %v565 = vrcp.pop %v549
  %v566 = vrcp.pop %v550
  %v567 = vrcp.pop %v551
  %v568 = vrcp.pop %v552
  %v569 = vrcp.pop %v553
  %v570 = vrcp.pop %v554
  %v571 = vrcp.pop %v555
  %v572 = vmul.f32 %v524, %v556
  %v573 = vmul.f32 %v525, %v557
  %v574 = vmul.f32 %v526, %v558
  %v575 = vmul.f32 %v527, %v559
  %v576 = vmul.f32 %v528, %v560
  %v577 = vmul.f32 %v529, %v561
  %v578 = vmul.f32 %v530, %v562
  %v579 = vmul.f32 %v531, %v563
  %v580 = vmul.f32 %v532, %v564
  %v581 = vmul.f32 %v533, %v565
  %v582 = vmul.f32 %v534, %v566
  %v583 = vmul.f32 %v535, %v567
  %v584 = vmul.f32 %v536, %v568
  %v585 = vmul.f32 %v537, %v569
  %v586 = vmul.f32 %v538, %v570
  %v587 = vmul.f32 %v539, %v571
  %v588 = vsel %vm508, %v389, %v572
  %v589 = vsel %vm509, %v391, %v573
  %v590 = vsel %vm510, %v394, %v574
  %v591 = vsel %vm511, %v396, %v575
  %v592 = vsel %vm512, %v399, %v576
  %v593 = vsel %vm513, %v401, %v577
  %v594 = vsel %vm514, %v404, %v578
  %v595 = vsel %vm515, %v406, %v579
  %v596 = vsel %vm516, %v409, %v580
  %v597 = vsel %vm517, %v411, %v581
  %v598 = vsel %vm518, %v414, %v582
  %v599 = vsel %vm519, %v416, %v583
  %v600 = vsel %vm520, %v419, %v584
  %v601 = vsel %vm521, %v421, %v585
  %v602 = vsel %vm522, %v424, %v586
  %v603 = vsel %vm523, %v426, %v587
  %v604 = vpack.c.bf16 %v588, %v588
  %v605 = vpack.c.bf16 %v589, %v589
  %v606 = vpack.c.bf16 %v590, %v590
  %v607 = vpack.c.bf16 %v591, %v591
  %v608 = vpack.c.bf16 %v592, %v592
  %v609 = vpack.c.bf16 %v593, %v593
  %v610 = vpack.c.bf16 %v594, %v594
  %v611 = vpack.c.bf16 %v595, %v595
  %v612 = vpack.c.bf16 %v596, %v596
  %v613 = vpack.c.bf16 %v597, %v597
  %v614 = vpack.c.bf16 %v598, %v598
  %v615 = vpack.c.bf16 %v599, %v599
  %v616 = vpack.c.bf16 %v600, %v600
  %v617 = vpack.c.bf16 %v601, %v601
  %v618 = vpack.c.bf16 %v602, %v602
  %v619 = vpack.c.bf16 %v603, %v603
  %620 = vst.msk [vmem:[%s6] sm:$0xf] %vm354, %v604
  %621 = vst.msk [vmem:[%s6 + $0x4] sm:$0xf] %vm354, %v605
  %622 = vst.msk [vmem:[%s6 + $0x8] sm:$0xf] %vm354, %v606
  %623 = vst.msk [vmem:[%s6 + $0xc] sm:$0xf] %vm354, %v607
  %624 = vst.msk [vmem:[%s6 + $0x10] sm:$0xf] %vm354, %v608
  %625 = vst.msk [vmem:[%s6 + $0x14] sm:$0xf] %vm354, %v609
  %626 = vst.msk [vmem:[%s6 + $0x18] sm:$0xf] %vm354, %v610
  %627 = vst.msk [vmem:[%s6 + $0x1c] sm:$0xf] %vm354, %v611
  %628 = vst.msk [vmem:[%s6 + $0x20] sm:$0xf] %vm354, %v612
  %629 = vst.msk [vmem:[%s6 + $0x24] sm:$0xf] %vm354, %v613
  %630 = vst.msk [vmem:[%s6 + $0x28] sm:$0xf] %vm354, %v614
  %631 = vst.msk [vmem:[%s6 + $0x2c] sm:$0xf] %vm354, %v615
  %632 = vst.msk [vmem:[%s6 + $0x30] sm:$0xf] %vm354, %v616
  %633 = vst.msk [vmem:[%s6 + $0x34] sm:$0xf] %vm354, %v617
  %634 = vst.msk [vmem:[%s6 + $0x38] sm:$0xf] %vm354, %v618
  %635 = vst.msk [vmem:[%s6 + $0x3c] sm:$0xf] %vm354, %v619
  // Predicated region
  $region22: #{csp_block_forward.7} parent=0 // pred_check
    _
  $region23: #{csp_block_forward.7} parent=0 // pred_check_branch
    %637 = sbr.rel (0) target = $region25
  $region24: #{csp_block_forward.7} parent=0 // pred_region
    _
  $region25: #{csp_block_forward.7} parent=0 // pred_fallthru
    _
  // Predicated region
  $region26: #{csp_block_forward.7} parent=0 // pred_check
    _
  $region27: #{csp_block_forward.7} parent=0 // pred_check_branch
    %639 = sbr.rel (0) target = $region29
  $region28: #{csp_block_forward.7} parent=0 // pred_region
    _
  $region29: #{csp_block_forward.7} parent=0 // pred_fallthru
    _
  // Predicated region
  $region30: #{csp_block_forward.7} parent=0 // pred_check
    _
  $region31: #{csp_block_forward.7} parent=0 // pred_check_branch
    %641 = sbr.rel (0) target = $region33
  $region32: #{csp_block_forward.7} parent=0 // pred_region
    _
  $region33: #{csp_block_forward.7} parent=0 // pred_fallthru
    _
  // Predicated region
  $region34: #{csp_block_forward.7} parent=0 // pred_check
    _
  $region35: #{csp_block_forward.7} parent=0 // pred_check_branch
    %643 = sbr.rel (0) target = $region37
  $region36: #{csp_block_forward.7} parent=0 // pred_region
    _
  $region37: #{csp_block_forward.7} parent=0 // pred_fallthru
    _

// kernel: csp_block_forward.6
$region0: #{csp_block_forward.6}
  #allocation0 [shape = 'u32[]', space=smem, size = 0x4, offset = 0x4, fixed_abs, tag = 'smem constant byte address 0x4 - core index']
  #allocation1 [shape = 'u32[72,128]{1,0:T(1,128)}', space=vmem, size = 0x9000, scoped, tag = 'internal scratch']
  %s0 = inlined_call_operand.vmem [shape: bf16[2,2,2,9,9,4], index: 0, kind: input, shape index: {}]
  %s1 = inlined_call_operand.vmem [shape: bf16[9,4,8], index: 1, kind: input, shape index: {}]
  %s2 = inlined_call_operand.vmem [shape: f32[1,8], index: 2, kind: input, shape index: {}]
  %s3 = inlined_call_operand.vmem [shape: bf16[2,64,8], index: 3, kind: output, shape index: {}]
  %s4 = sld [smem:[#allocation0]]
  $region45: #{csp_block_forward.6} parent=0
    _
  %s6 = ssub.s32 1, %s4
  %s7 = scalar_select 0, %s6, %s4
  loop: start=0, step=1, limit=4
  $region2: #{csp_block_forward.6} parent=0 // loop_pre_header
    _
  $region3: #{csp_block_forward.6} parent=0 // loop_header
    %s9 = sphi 0, %s13
    %p10 = scmp.ge.s32.totalorder %s9, 4
    %s19 = sphi 0, %s21
    %s22 = sphi 0, %s19
    %s23 = sphi 0, %s22
    %s39 = sphi 0, %s23
    %s43 = sphi 0, %s43
    %s45 = sphi 0, %s43
    %s46 = sphi 0, %s45
    %s60 = sphi 0, %s46
    %s64 = sphi 0, %s64
    %s66 = sphi 0, %s64
    %s67 = sphi 0, %s66
    %s81 = sphi 0, %s67
    %s87 = sphi 0, %s89
    %s90 = sphi 0, %s87
    %s91 = sphi 0, %s90
    %s107 = sphi 0, %s91
  $region4: #{csp_block_forward.6} parent=0 // loop_header_branch
    %12 = sbr.rel (%p10) target = $region8
  $region5: #{csp_block_forward.6} parent=0 // loop_body
    %s14 = ssub.s32 %s9, 1
    %s15 = ssub.s32 %s9, 2
    %s16 = sadd.s32 %s9, 1
    %s17 = ssub.s32 %s9, %s16
    %p18 = scmp.eq.s32.totalorder %s17, 0
    %s20 = sadd.s32 %s19, 1
    %s21 = scalar_select %p18, %s19, %s20
    %p24 = pneg %p18
    %p25 = scmp.eq.s32.totalorder %s9, 1
    %p26 = por %p24, %p25
    %p27 = scmp.ne.s32.totalorder %s19, %s22
    %p28 = scmp.eq.s32.totalorder %s9, 0
    %p29 = por %p27, %p28
    %p30 = scmp.ne.s32.totalorder %s19, %s22
    %p31 = scmp.eq.s32.totalorder %s14, 1
    %p32 = por %p30, %p31
    %p33 = scmp.ne.s32.totalorder %s22, %s23
    %p34 = scmp.eq.s32.totalorder %s14, 0
    %p35 = por %p33, %p34
    %p36 = scmp.ne.s32.totalorder %s22, %s23
    %p37 = scmp.eq.s32.totalorder %s15, 1
    %p38 = por %p36, %p37
    %p40 = scmp.ne.s32.totalorder %s23, %s39
    %p41 = scmp.eq.s32.totalorder %s15, 0
    %p42 = por %p40, %p41
    %s44 = sadd.s32 %s43, 1
    %p47 = scmp.eq.s32.totalorder %s9, 1
    %p48 = scmp.ne.s32.totalorder %s43, %s45
    %p49 = scmp.eq.s32.totalorder %s9, 0
    %p50 = por %p48, %p49
    %p51 = scmp.ne.s32.totalorder %s43, %s45
    %p52 = scmp.eq.s32.totalorder %s14, 1
    %p53 = por %p51, %p52
    %p54 = scmp.ne.s32.totalorder %s45, %s46
    %p55 = scmp.eq.s32.totalorder %s14, 0
    %p56 = por %p54, %p55
    %p57 = scmp.ne.s32.totalorder %s45, %s46
    %p58 = scmp.eq.s32.totalorder %s15, 1
    %p59 = por %p57, %p58
    %p61 = scmp.ne.s32.totalorder %s46, %s60
    %p62 = scmp.eq.s32.totalorder %s15, 0
    %p63 = por %p61, %p62
    %s65 = sadd.s32 %s64, 1
    %p68 = scmp.eq.s32.totalorder %s9, 1
    %p69 = scmp.ne.s32.totalorder %s64, %s66
    %p70 = scmp.eq.s32.totalorder %s9, 0
    %p71 = por %p69, %p70
    %p72 = scmp.ne.s32.totalorder %s64, %s66
    %p73 = scmp.eq.s32.totalorder %s14, 1
    %p74 = por %p72, %p73
    %p75 = scmp.ne.s32.totalorder %s66, %s67
    %p76 = scmp.eq.s32.totalorder %s14, 0
    %p77 = por %p75, %p76
    %p78 = scmp.ne.s32.totalorder %s66, %s67
    %p79 = scmp.eq.s32.totalorder %s15, 1
    %p80 = por %p78, %p79
    %p82 = scmp.ne.s32.totalorder %s67, %s81
    %p83 = scmp.eq.s32.totalorder %s15, 0
    %p84 = por %p82, %p83
    %s85 = ssub.s32 %s9, %s16
    %p86 = scmp.eq.s32.totalorder %s85, 0
    %s88 = sadd.s32 %s87, 1
    %s89 = scalar_select %p86, %s87, %s88
    %p92 = pneg %p86
    %p93 = scmp.eq.s32.totalorder %s9, 1
    %p94 = por %p92, %p93
    %p95 = scmp.ne.s32.totalorder %s87, %s90
    %p96 = scmp.eq.s32.totalorder %s9, 0
    %p97 = por %p95, %p96
    %p98 = scmp.ne.s32.totalorder %s87, %s90
    %p99 = scmp.eq.s32.totalorder %s14, 1
    %p100 = por %p98, %p99
    %p101 = scmp.ne.s32.totalorder %s90, %s91
    %p102 = scmp.eq.s32.totalorder %s14, 0
    %p103 = por %p101, %p102
    %p104 = scmp.ne.s32.totalorder %s90, %s91
    %p105 = scmp.eq.s32.totalorder %s15, 1
    %p106 = por %p104, %p105
    %p108 = scmp.ne.s32.totalorder %s91, %s107
    %p109 = scmp.eq.s32.totalorder %s15, 0
    %p110 = por %p108, %p109
    %p111 = scmp.le.s32.totalorder 1, %s9
    %p112 = scmp.lt.s32.totalorder %s9, 3
    %p113 = pnand %p111, %p112
    %p114 = pneg %p113
    // Predicated region
    $region9: #{csp_block_forward.6} parent=5 // pred_check
      _
    $region10: #{csp_block_forward.6} parent=5 // pred_check_branch
      %116 = sbr.rel (%p113) target = $region12
    $region11: #{csp_block_forward.6} parent=5 // pred_region
      %s117 = ssub.s32 %s9, 1
      // Predicated region
      $region13: #{csp_block_forward.6} parent=11 // pred_check
        %p118 = pneg %p56
      $region14: #{csp_block_forward.6} parent=11 // pred_check_branch
        %120 = sbr.rel (%p118) target = $region16
      $region15: #{csp_block_forward.6} parent=11 // pred_region
        _
      $region16: #{csp_block_forward.6} parent=11 // pred_fallthru
        _
      // Predicated region
      $region17: #{csp_block_forward.6} parent=11 // pred_check
        %p121 = pneg %p77
      $region18: #{csp_block_forward.6} parent=11 // pred_check_branch
        %123 = sbr.rel (%p121) target = $region20
      $region19: #{csp_block_forward.6} parent=11 // pred_region
        _
      $region20: #{csp_block_forward.6} parent=11 // pred_fallthru
        _
    $region12: #{csp_block_forward.6} parent=5 // pred_fallthru
      _
    %p124 = scmp.lt.s32.totalorder %s9, 2
    // Predicated region
    $region21: #{csp_block_forward.6} parent=5 // pred_check
      %p125 = pneg %p124
    $region22: #{csp_block_forward.6} parent=5 // pred_check_branch
      %127 = sbr.rel (%p125) target = $region24
    $region23: #{csp_block_forward.6} parent=5 // pred_region
      // Predicated region
      $region25: #{csp_block_forward.6} parent=23 // pred_check
        %p128 = pneg %p29
      $region26: #{csp_block_forward.6} parent=23 // pred_check_branch
        %130 = sbr.rel (%p128) target = $region28
      $region27: #{csp_block_forward.6} parent=23 // pred_region
        %p131 = scmp.lt.s32.totalorder %s9, 1
        %s132 = scalar_select %p131, %s9, 1
        %s133 = smul.addr %s132, 72
        %s134 = smul.addr %s133, 4
        %s135 = scalar_lea.vmem %s0, %s134
      $region28: #{csp_block_forward.6} parent=23 // pred_fallthru
        _
    $region24: #{csp_block_forward.6} parent=5 // pred_fallthru
      _
    %p136 = scmp.le.s32.totalorder 1, %s9
    %p137 = scmp.lt.s32.totalorder %s9, 3
    %p138 = pnand %p136, %p137
    %p139 = pneg %p138
    // Predicated region
    $region29: #{csp_block_forward.6} parent=5 // pred_check
      _
    $region30: #{csp_block_forward.6} parent=5 // pred_check_branch
      %141 = sbr.rel (%p138) target = $region32
    $region31: #{csp_block_forward.6} parent=5 // pred_region
      %s142 = ssub.s32 %s9, 1
      %p143 = scmp.lt.s32.totalorder %s14, 1
      %s144 = scalar_select %p143, %s14, 1
      %s145 = smul.addr %s144, 72
      %s146 = smul.addr %s145, 4
      %s147 = scalar_lea.vmem %s0, %s146
      %p148 = pneg %p35
      %p149 = pneg %p32
      %p150 = pneg %p56
      %p151 = pneg %p53
      %p152 = pneg %p77
      %p153 = pneg %p74
      %p154 = pneg %p103
      %p155 = pneg %p100
      %p156 = scmp.lt.s32.totalorder %s14, 1
      %s157 = scalar_select %p156, %s14, 1
      %s158 = smul.addr %s157, 8
      %s159 = smul.addr %s158, 4
      %s160 = scalar_lea.vmem %s3, %s159
      %p161 = scmp.lt.s32.totalorder %s14, 1
      %s162 = scalar_select %p161, %s14, 1
      %s163 = smul.addr %s162, 72
      %s164 = smul.addr %s163, 4
      %s165 = scalar_lea.vmem %s0, %s164
      %p166 = scmp.lt.s32.totalorder %s14, 1
      %s167 = scalar_select %p166, %s14, 1
      %s168 = smul.addr %s167, 8
      %s169 = smul.addr %s168, 4
      %s170 = scalar_lea.vmem %s3, %s169
      %v172 = vld [vmem:[%s165] sm:$0xf]
      %v173 = vld [vmem:[%s165 + $0x4] sm:$0x1]
      %v174 = vld [vmem:[%s165 + $0x8] sm:$0xf]
      %v175 = vld [vmem:[%s165 + $0xc] sm:$0x1]
      %v176 = vld [vmem:[%s165 + $0x10] sm:$0xf]
      %v177 = vld [vmem:[%s165 + $0x14] sm:$0x1]
      %v178 = vld [vmem:[%s165 + $0x18] sm:$0xf]
      %v179 = vld [vmem:[%s165 + $0x1c] sm:$0x1]
      %v180 = vld [vmem:[%s165 + $0x20] sm:$0xf]
      %v181 = vld [vmem:[%s165 + $0x24] sm:$0x1]
      %v182 = vld [vmem:[%s165 + $0x28] sm:$0xf]
      %v183 = vld [vmem:[%s165 + $0x2c] sm:$0x1]
      %v184 = vld [vmem:[%s165 + $0x30] sm:$0xf]
      %v185 = vld [vmem:[%s165 + $0x34] sm:$0x1]
      %v186 = vld [vmem:[%s165 + $0x38] sm:$0xf]
      %v187 = vld [vmem:[%s165 + $0x3c] sm:$0x1]
      %v188 = vld [vmem:[%s165 + $0x40] sm:$0xf]
      %v189 = vld [vmem:[%s165 + $0x44] sm:$0x1]
      %v190 = vld [vmem:[%s165 + $0x48] sm:$0xf]
      %v191 = vld [vmem:[%s165 + $0x50] sm:$0xf]
      %v192 = vld [vmem:[%s165 + $0x58] sm:$0xf]
      %v193 = vld [vmem:[%s165 + $0x60] sm:$0xf]
      %v194 = vld [vmem:[%s165 + $0x68] sm:$0xf]
      %v195 = vld [vmem:[%s165 + $0x70] sm:$0xf]
      %v196 = vld [vmem:[%s165 + $0x78] sm:$0xf]
      %v197 = vld [vmem:[%s165 + $0x80] sm:$0xf]
      %v198 = vld [vmem:[%s165 + $0x88] sm:$0xf]
      %v199 = vld [vmem:[%s165 + $0x90] sm:$0xf]
      %v200 = vld [vmem:[%s165 + $0x94] sm:$0x1]
      %v201 = vld [vmem:[%s165 + $0x98] sm:$0xf]
      %v202 = vld [vmem:[%s165 + $0x9c] sm:$0x1]
      %v203 = vld [vmem:[%s165 + $0xa0] sm:$0xf]
      %v204 = vld [vmem:[%s165 + $0xa4] sm:$0x1]
      %v205 = vld [vmem:[%s165 + $0xa8] sm:$0xf]
      %v206 = vld [vmem:[%s165 + $0xac] sm:$0x1]
      %v207 = vld [vmem:[%s165 + $0xb0] sm:$0xf]
      %v208 = vld [vmem:[%s165 + $0xb4] sm:$0x1]
      %v209 = vld [vmem:[%s165 + $0xb8] sm:$0xf]
      %v210 = vld [vmem:[%s165 + $0xbc] sm:$0x1]
      %v211 = vld [vmem:[%s165 + $0xc0] sm:$0xf]
      %v212 = vld [vmem:[%s165 + $0xc4] sm:$0x1]
      %v213 = vld [vmem:[%s165 + $0xc8] sm:$0xf]
      %v214 = vld [vmem:[%s165 + $0xcc] sm:$0x1]
      %v215 = vld [vmem:[%s165 + $0xd8] sm:$0xf]
      %v216 = vld [vmem:[%s165 + $0xe0] sm:$0xf]
      %v217 = vld [vmem:[%s165 + $0xe8] sm:$0xf]
      %v218 = vld [vmem:[%s165 + $0xf0] sm:$0xf]
      %v219 = vld [vmem:[%s165 + $0xf8] sm:$0xf]
      %v220 = vld [vmem:[%s165 + $0x100] sm:$0xf]
      %v221 = vld [vmem:[%s165 + $0x108] sm:$0xf]
      %v222 = vld [vmem:[%s165 + $0x110] sm:$0xf]
      %v223 = vld [vmem:[%s1] sm:$0x3]
      %s224 = scalar_lea.vmem %s1, 2
      %v225 = vld [vmem:[%s224] sm:$0x3]
      %v234 = vunpack.c.l.b16 %v190
      %v235 = vunpack.c.l.b16 %v191
      %v236 = vunpack.c.l.b16 %v192
      %v237 = vunpack.c.l.b16 %v193
      %v238 = vunpack.c.l.b16 %v194
      %v239 = vunpack.c.l.b16 %v195
      %v240 = vunpack.c.l.b16 %v196
      %v241 = vunpack.c.l.b16 %v197
      %v242 = vpack.c.b16 %v235, %v234
      %v243 = vpack.c.b16 %v237, %v236
      %v244 = vpack.c.b16 %v239, %v238
      %v245 = vpack.c.b16 %v241, %v240
      %vm246 = vcmask 31744
      %v248 = vsel %vm246, %v242, 0
      %v251 = vsel %vm246, %v243, 0
      %v254 = vsel %vm246, %v244, 0
      %v257 = vsel %vm246, %v245, 0
      %vm259 = vcmask 1041408
      %v261 = vsel %vm259, %v225, 0
      %263 = vmatpush.bf16.msra.mxu0 0
      %264 = vmatpush.bf16.msra.mxu0 0
      %265 = vmatpush.bf16.msra.mxu0 0
      %266 = vmatpush.bf16.msra.mxu0 0
      %267 = vmatpush.bf16.msra.mxu0 0
      %268 = vmatpush.bf16.msra.mxu0 0
      %269 = vmatpush.bf16.msra.mxu0 0
      %270 = vmatpush.bf16.msra.mxu0 %v261
      %271 = vmatmul.bf16.gmra.mxu0 %v248
      %v272 = vpop.f32.mrf.mxu0
      %v273 = vadd.f32 0.0, %v272
      %v274 = vpop.f32.mrf.mxu0
      %v275 = vadd.f32 0.0, %v274
      %276 = vmatmul.bf16.gmra.mxu0 %v251
      %v277 = vpop.f32.mrf.mxu0
      %v278 = vadd.f32 0.0, %v277
      %v279 = vpop.f32.mrf.mxu0
      %v280 = vadd.f32 0.0, %v279
      %281 = vmatmul.bf16.gmra.mxu0 %v254
      %v282 = vpop.f32.mrf.mxu0
      %v283 = vadd.f32 0.0, %v282
      %v284 = vpop.f32.mrf.mxu0
      %v285 = vadd.f32 0.0, %v284
      %286 = vmatmul.bf16.gmra.mxu0 %v257
      %v287 = vpop.f32.mrf.mxu0
      %v288 = vadd.f32 0.0, %v287
      %v289 = vpop.f32.mrf.mxu0
      %v290 = vadd.f32 0.0, %v289
      %291 = vdwg.mxu0
      %v300 = vunpack.c.l.b16 %v172
      %v301 = vunpack.c.l.b16 %v174
      %v302 = vunpack.c.l.b16 %v176
      %v303 = vunpack.c.l.b16 %v178
      %v304 = vunpack.c.l.b16 %v180
      %v305 = vunpack.c.l.b16 %v182
      %v306 = vunpack.c.l.b16 %v184
      %v307 = vunpack.c.l.b16 %v186
      %v308 = vpack.c.b16 %v301, %v300
      %v309 = vpack.c.b16 %v303, %v302
      %v310 = vpack.c.b16 %v305, %v304
      %v311 = vpack.c.b16 %v307, %v306
      %v313 = vsel %vm246, %v308, 0
      %v316 = vsel %vm246, %v309, 0
      %v319 = vsel %vm246, %v310, 0
      %v322 = vsel %vm246, %v311, 0
      %v325 = vsel %vm259, %v223, 0
      %327 = vmatpush.bf16.msra.mxu0 0
      %328 = vmatpush.bf16.msra.mxu0 0
      %329 = vmatpush.bf16.msra.mxu0 0
      %330 = vmatpush.bf16.msra.mxu0 0
      %331 = vmatpush.bf16.msra.mxu0 0
      %332 = vmatpush.bf16.msra.mxu0 0
      %333 = vmatpush.bf16.msra.mxu0 0
      %334 = vmatpush.bf16.msra.mxu0 %v325
      %335 = vmatmul.bf16.gmra.mxu0 %v313
      %v336 = vpop.f32.mrf.mxu0
      %v337 = vadd.f32 %v273, %v336
      %v338 = vpop.f32.mrf.mxu0
      %v339 = vadd.f32 %v275, %v338
      %340 = vmatmul.bf16.gmra.mxu0 %v316
      %v341 = vpop.f32.mrf.mxu0
      %v342 = vadd.f32 %v278, %v341
      %v343 = vpop.f32.mrf.mxu0
      %v344 = vadd.f32 %v280, %v343
      %345 = vmatmul.bf16.gmra.mxu0 %v319
      %v346 = vpop.f32.mrf.mxu0
      %v347 = vadd.f32 %v283, %v346
      %v348 = vpop.f32.mrf.mxu0
      %v349 = vadd.f32 %v285, %v348
      %350 = vmatmul.bf16.gmra.mxu0 %v322
      %v351 = vpop.f32.mrf.mxu0
      %v352 = vadd.f32 %v288, %v351
      %v353 = vpop.f32.mrf.mxu0
      %v354 = vadd.f32 %v290, %v353
      %355 = vdwg.mxu0
      %vm356 = vsmask.f32 3328
      %vm357 = vsmask.f32 7440
      %vm358 = vmor %vm356, %vm357
      %v360 = vshrl.u32 %v172, 16
      %v362 = vrot.slane %v360, 4
      %v363 = vshll.u32 %v172, 16
      %v365 = vrot.slane %v363, 5
      %v366 = vor.u32 %v362, %v365
      %v367 = vrot.slane %v366, 4
      %v369 = vshll.u32 %v173, 16
      %v371 = vrot.slane %v369, 5
      %v372 = vsel %vm358, %v367, %v371
      %v374 = vshrl.u32 %v174, 16
      %v376 = vrot.slane %v374, 4
      %v377 = vshll.u32 %v174, 16
      %v379 = vrot.slane %v377, 5
      %v380 = vor.u32 %v376, %v379
      %v381 = vrot.slane %v380, 4
      %v383 = vshll.u32 %v175, 16
      %v385 = vrot.slane %v383, 5
      %v386 = vsel %vm358, %v381, %v385
      %v388 = vshrl.u32 %v176, 16
      %v390 = vrot.slane %v388, 4
      %v391 = vshll.u32 %v176, 16
      %v393 = vrot.slane %v391, 5
      %v394 = vor.u32 %v390, %v393
      %v395 = vrot.slane %v394, 4
      %v397 = vshll.u32 %v177, 16
      %v399 = vrot.slane %v397, 5
      %v400 = vsel %vm358, %v395, %v399
      %v402 = vshrl.u32 %v178, 16
      %v404 = vrot.slane %v402, 4
      %v405 = vshll.u32 %v178, 16
      %v407 = vrot.slane %v405, 5
      %v408 = vor.u32 %v404, %v407
      %v409 = vrot.slane %v408, 4
      %v411 = vshll.u32 %v179, 16
      %v413 = vrot.slane %v411, 5
      %v414 = vsel %vm358, %v409, %v413
      %v416 = vshrl.u32 %v180, 16
      %v418 = vrot.slane %v416, 4
      %v419 = vshll.u32 %v180, 16
      %v421 = vrot.slane %v419, 5
      %v422 = vor.u32 %v418, %v421
      %v423 = vrot.slane %v422, 4
      %v425 = vshll.u32 %v181, 16
      %v427 = vrot.slane %v425, 5
      %v428 = vsel %vm358, %v423, %v427
      %v430 = vshrl.u32 %v182, 16
      %v432 = vrot.slane %v430, 4
      %v433 = vshll.u32 %v182, 16
      %v435 = vrot.slane %v433, 5
      %v436 = vor.u32 %v432, %v435
      %v437 = vrot.slane %v436, 4
      %v439 = vshll.u32 %v183, 16
      %v441 = vrot.slane %v439, 5
      %v442 = vsel %vm358, %v437, %v441
      %v444 = vshrl.u32 %v184, 16
      %v446 = vrot.slane %v444, 4
      %v447 = vshll.u32 %v184, 16
      %v449 = vrot.slane %v447, 5
      %v450 = vor.u32 %v446, %v449
      %v451 = vrot.slane %v450, 4
      %v453 = vshll.u32 %v185, 16
      %v455 = vrot.slane %v453, 5
      %v456 = vsel %vm358, %v451, %v455
      %v458 = vshrl.u32 %v186, 16
      %v460 = vrot.slane %v458, 4
      %v461 = vshll.u32 %v186, 16
      %v463 = vrot.slane %v461, 5
      %v464 = vor.u32 %v460, %v463
      %v465 = vrot.slane %v464, 4
      %v467 = vshll.u32 %v187, 16
      %v469 = vrot.slane %v467, 5
      %v470 = vsel %vm358, %v465, %v469
      %s471 = scalar_lea.vmem %s1, 4
      %v472 = vld [vmem:[%s471] sm:$0x3]
      %v473 = vunpack.c.l.b16 %v372
      %v474 = vunpack.c.l.b16 %v386
      %v475 = vunpack.c.l.b16 %v400
      %v476 = vunpack.c.l.b16 %v414
      %v477 = vunpack.c.l.b16 %v428
      %v478 = vunpack.c.l.b16 %v442
      %v479 = vunpack.c.l.b16 %v456
      %v480 = vunpack.c.l.b16 %v470
      %v481 = vpack.c.b16 %v474, %v473
      %v482 = vpack.c.b16 %v476, %v475
      %v483 = vpack.c.b16 %v478, %v477
      %v484 = vpack.c.b16 %v480, %v479
      %v486 = vsel %vm246, %v481, 0
      %v489 = vsel %vm246, %v482, 0
      %v492 = vsel %vm246, %v483, 0
      %v495 = vsel %vm246, %v484, 0
      %v498 = vsel %vm259, %v472, 0
      %500 = vmatpush.bf16.msra.mxu0 0
      %501 = vmatpush.bf16.msra.mxu0 0
      %502 = vmatpush.bf16.msra.mxu0 0
      %503 = vmatpush.bf16.msra.mxu0 0
      %504 = vmatpush.bf16.msra.mxu0 0
      %505 = vmatpush.bf16.msra.mxu0 0
      %506 = vmatpush.bf16.msra.mxu0 0
      %507 = vmatpush.bf16.msra.mxu0 %v498
      %508 = vmatmul.bf16.gmra.mxu0 %v486
      %v509 = vpop.f32.mrf.mxu0
      %v510 = vadd.f32 0.0, %v509
      %v511 = vpop.f32.mrf.mxu0
      %v512 = vadd.f32 0.0, %v511
      %513 = vmatmul.bf16.gmra.mxu0 %v489
      %v514 = vpop.f32.mrf.mxu0
      %v515 = vadd.f32 0.0, %v514
      %v516 = vpop.f32.mrf.mxu0
      %v517 = vadd.f32 0.0, %v516
      %518 = vmatmul.bf16.gmra.mxu0 %v492
      %v519 = vpop.f32.mrf.mxu0
      %v520 = vadd.f32 0.0, %v519
      %v521 = vpop.f32.mrf.mxu0
      %v522 = vadd.f32 0.0, %v521
      %523 = vmatmul.bf16.gmra.mxu0 %v495
      %v524 = vpop.f32.mrf.mxu0
      %v525 = vadd.f32 0.0, %v524
      %v526 = vpop.f32.mrf.mxu0
      %v527 = vadd.f32 0.0, %v526
      %528 = vdwg.mxu0
      %v529 = vadd.f32 %v337, %v510
      %v530 = vadd.f32 %v339, %v512
      %v531 = vadd.f32 %v342, %v515
      %v532 = vadd.f32 %v344, %v517
      %v533 = vadd.f32 %v347, %v520
      %v534 = vadd.f32 %v349, %v522
      %v535 = vadd.f32 %v352, %v525
      %v536 = vadd.f32 %v354, %v527
      %s537 = scalar_lea.vmem %s1, 6
      %v538 = vld [vmem:[%s537] sm:$0x3]
      %v547 = vunpack.c.l.b16 %v199
      %v548 = vunpack.c.l.b16 %v201
      %v549 = vunpack.c.l.b16 %v203
      %v550 = vunpack.c.l.b16 %v205
      %v551 = vunpack.c.l.b16 %v207
      %v552 = vunpack.c.l.b16 %v209
      %v553 = vunpack.c.l.b16 %v211
      %v554 = vunpack.c.l.b16 %v213
      %v555 = vpack.c.b16 %v548, %v547
      %v556 = vpack.c.b16 %v550, %v549
      %v557 = vpack.c.b16 %v552, %v551
      %v558 = vpack.c.b16 %v554, %v553
      %v560 = vsel %vm246, %v555, 0
      %v563 = vsel %vm246, %v556, 0
      %v566 = vsel %vm246, %v557, 0
      %v569 = vsel %vm246, %v558, 0
      %v572 = vsel %vm259, %v538, 0
      %574 = vmatpush.bf16.msra.mxu0 0
      %575 = vmatpush.bf16.msra.mxu0 0
      %576 = vmatpush.bf16.msra.mxu0 0
      %577 = vmatpush.bf16.msra.mxu0 0
      %578 = vmatpush.bf16.msra.mxu0 0
      %579 = vmatpush.bf16.msra.mxu0 0
      %580 = vmatpush.bf16.msra.mxu0 0
      %581 = vmatpush.bf16.msra.mxu0 %v572
      %582 = vmatmul.bf16.gmra.mxu0 %v560
      %v583 = vpop.f32.mrf.mxu0
      %v584 = vadd.f32 0.0, %v583
      %v585 = vpop.f32.mrf.mxu0
      %v586 = vadd.f32 0.0, %v585
      %587 = vmatmul.bf16.gmra.mxu0 %v563
      %v588 = vpop.f32.mrf.mxu0
      %v589 = vadd.f32 0.0, %v588
      %v590 = vpop.f32.mrf.mxu0
      %v591 = vadd.f32 0.0, %v590
      %592 = vmatmul.bf16.gmra.mxu0 %v566
      %v593 = vpop.f32.mrf.mxu0
      %v594 = vadd.f32 0.0, %v593
      %v595 = vpop.f32.mrf.mxu0
      %v596 = vadd.f32 0.0, %v595
      %597 = vmatmul.bf16.gmra.mxu0 %v569
      %v598 = vpop.f32.mrf.mxu0
      %v599 = vadd.f32 0.0, %v598
      %v600 = vpop.f32.mrf.mxu0
      %v601 = vadd.f32 0.0, %v600
      %602 = vdwg.mxu0
      %v603 = vadd.f32 %v529, %v584
      %v604 = vadd.f32 %v530, %v586
      %v605 = vadd.f32 %v531, %v589
      %v606 = vadd.f32 %v532, %v591
      %v607 = vadd.f32 %v533, %v594
      %v608 = vadd.f32 %v534, %v596
      %v609 = vadd.f32 %v535, %v599
      %v610 = vadd.f32 %v536, %v601
      %s611 = scalar_lea.vmem %s1, 8
      %v612 = vld [vmem:[%s611] sm:$0x3]
      %v621 = vunpack.c.l.b16 %v215
      %v622 = vunpack.c.l.b16 %v216
      %v623 = vunpack.c.l.b16 %v217
      %v624 = vunpack.c.l.b16 %v218
      %v625 = vunpack.c.l.b16 %v219
      %v626 = vunpack.c.l.b16 %v220
      %v627 = vunpack.c.l.b16 %v221
      %v628 = vunpack.c.l.b16 %v222
      %v629 = vpack.c.b16 %v622, %v621
      %v630 = vpack.c.b16 %v624, %v623
      %v631 = vpack.c.b16 %v626, %v625
      %v632 = vpack.c.b16 %v628, %v627
      %v634 = vsel %vm246, %v629, 0
      %v637 = vsel %vm246, %v630, 0
      %v640 = vsel %vm246, %v631, 0
      %v643 = vsel %vm246, %v632, 0
      %v646 = vsel %vm259, %v612, 0
      %648 = vmatpush.bf16.msra.mxu0 0
      %649 = vmatpush.bf16.msra.mxu0 0
      %650 = vmatpush.bf16.msra.mxu0 0
      %651 = vmatpush.bf16.msra.mxu0 0
      %652 = vmatpush.bf16.msra.mxu0 0
      %653 = vmatpush.bf16.msra.mxu0 0
      %654 = vmatpush.bf16.msra.mxu0 0
      %655 = vmatpush.bf16.msra.mxu0 %v646
      %656 = vmatmul.bf16.gmra.mxu0 %v634
      %v657 = vpop.f32.mrf.mxu0
      %v658 = vadd.f32 0.0, %v657
      %v659 = vpop.f32.mrf.mxu0
      %v660 = vadd.f32 0.0, %v659
      %661 = vmatmul.bf16.gmra.mxu0 %v637
      %v662 = vpop.f32.mrf.mxu0
      %v663 = vadd.f32 0.0, %v662
      %v664 = vpop.f32.mrf.mxu0
      %v665 = vadd.f32 0.0, %v664
      %666 = vmatmul.bf16.gmra.mxu0 %v640
      %v667 = vpop.f32.mrf.mxu0
      %v668 = vadd.f32 0.0, %v667
      %v669 = vpop.f32.mrf.mxu0
      %v670 = vadd.f32 0.0, %v669
      %671 = vmatmul.bf16.gmra.mxu0 %v643
      %v672 = vpop.f32.mrf.mxu0
      %v673 = vadd.f32 0.0, %v672
      %v674 = vpop.f32.mrf.mxu0
      %v675 = vadd.f32 0.0, %v674
      %676 = vdwg.mxu0
      %v677 = vadd.f32 %v603, %v658
      %v678 = vadd.f32 %v604, %v660
      %v679 = vadd.f32 %v605, %v663
      %v680 = vadd.f32 %v606, %v665
      %v681 = vadd.f32 %v607, %v668
      %v682 = vadd.f32 %v608, %v670
      %v683 = vadd.f32 %v609, %v673
      %v684 = vadd.f32 %v610, %v675
      %v686 = vshrl.u32 %v199, 16
      %v688 = vrot.slane %v686, 4
      %v689 = vshll.u32 %v199, 16
      %v691 = vrot.slane %v689, 5
      %v692 = vor.u32 %v688, %v691
      %v693 = vrot.slane %v692, 4
      %v695 = vshll.u32 %v200, 16
      %v697 = vrot.slane %v695, 5
      %v698 = vsel %vm358, %v693, %v697
      %v700 = vshrl.u32 %v201, 16
      %v702 = vrot.slane %v700, 4
      %v703 = vshll.u32 %v201, 16
      %v705 = vrot.slane %v703, 5
      %v706 = vor.u32 %v702, %v705
      %v707 = vrot.slane %v706, 4
      %v709 = vshll.u32 %v202, 16
      %v711 = vrot.slane %v709, 5
      %v712 = vsel %vm358, %v707, %v711
      %v714 = vshrl.u32 %v203, 16
      %v716 = vrot.slane %v714, 4
      %v717 = vshll.u32 %v203, 16
      %v719 = vrot.slane %v717, 5
      %v720 = vor.u32 %v716, %v719
      %v721 = vrot.slane %v720, 4
      %v723 = vshll.u32 %v204, 16
      %v725 = vrot.slane %v723, 5
      %v726 = vsel %vm358, %v721, %v725
      %v728 = vshrl.u32 %v205, 16
      %v730 = vrot.slane %v728, 4
      %v731 = vshll.u32 %v205, 16
      %v733 = vrot.slane %v731, 5
      %v734 = vor.u32 %v730, %v733
      %v735 = vrot.slane %v734, 4
      %v737 = vshll.u32 %v206, 16
      %v739 = vrot.slane %v737, 5
      %v740 = vsel %vm358, %v735, %v739
      %v742 = vshrl.u32 %v207, 16
      %v744 = vrot.slane %v742, 4
      %v745 = vshll.u32 %v207, 16
      %v747 = vrot.slane %v745, 5
      %v748 = vor.u32 %v744, %v747
      %v749 = vrot.slane %v748, 4
      %v751 = vshll.u32 %v208, 16
      %v753 = vrot.slane %v751, 5
      %v754 = vsel %vm358, %v749, %v753
      %v756 = vshrl.u32 %v209, 16
      %v758 = vrot.slane %v756, 4
      %v759 = vshll.u32 %v209, 16
      %v761 = vrot.slane %v759, 5
      %v762 = vor.u32 %v758, %v761
      %v763 = vrot.slane %v762, 4
      %v765 = vshll.u32 %v210, 16
      %v767 = vrot.slane %v765, 5
      %v768 = vsel %vm358, %v763, %v767
      %v770 = vshrl.u32 %v211, 16
      %v772 = vrot.slane %v770, 4
      %v773 = vshll.u32 %v211, 16
      %v775 = vrot.slane %v773, 5
      %v776 = vor.u32 %v772, %v775
      %v777 = vrot.slane %v776, 4
      %v779 = vshll.u32 %v212, 16
      %v781 = vrot.slane %v779, 5
      %v782 = vsel %vm358, %v777, %v781
      %v784 = vshrl.u32 %v213, 16
      %v786 = vrot.slane %v784, 4
      %v787 = vshll.u32 %v213, 16
      %v789 = vrot.slane %v787, 5
      %v790 = vor.u32 %v786, %v789
      %v791 = vrot.slane %v790, 4
      %v793 = vshll.u32 %v214, 16
      %v795 = vrot.slane %v793, 5
      %v796 = vsel %vm358, %v791, %v795
      %s797 = scalar_lea.vmem %s1, 10
      %v798 = vld [vmem:[%s797] sm:$0x3]
      %v799 = vunpack.c.l.b16 %v698
      %v800 = vunpack.c.l.b16 %v712
      %v801 = vunpack.c.l.b16 %v726
      %v802 = vunpack.c.l.b16 %v740
      %v803 = vunpack.c.l.b16 %v754
      %v804 = vunpack.c.l.b16 %v768
      %v805 = vunpack.c.l.b16 %v782
      %v806 = vunpack.c.l.b16 %v796
      %v807 = vpack.c.b16 %v800, %v799
      %v808 = vpack.c.b16 %v802, %v801
      %v809 = vpack.c.b16 %v804, %v803
      %v810 = vpack.c.b16 %v806, %v805
      %v812 = vsel %vm246, %v807, 0
      %v815 = vsel %vm246, %v808, 0
      %v818 = vsel %vm246, %v809, 0
      %v821 = vsel %vm246, %v810, 0
      %v824 = vsel %vm259, %v798, 0
      %826 = vmatpush.bf16.msra.mxu0 0
      %827 = vmatpush.bf16.msra.mxu0 0
      %828 = vmatpush.bf16.msra.mxu0 0
      %829 = vmatpush.bf16.msra.mxu0 0
      %830 = vmatpush.bf16.msra.mxu0 0
      %831 = vmatpush.bf16.msra.mxu0 0
      %832 = vmatpush.bf16.msra.mxu0 0
      %833 = vmatpush.bf16.msra.mxu0 %v824
      %834 = vmatmul.bf16.gmra.mxu0 %v812
      %v835 = vpop.f32.mrf.mxu0
      %v836 = vadd.f32 0.0, %v835
      %v837 = vpop.f32.mrf.mxu0
      %v838 = vadd.f32 0.0, %v837
      %839 = vmatmul.bf16.gmra.mxu0 %v815
      %v840 = vpop.f32.mrf.mxu0
      %v841 = vadd.f32 0.0, %v840
      %v842 = vpop.f32.mrf.mxu0
      %v843 = vadd.f32 0.0, %v842
      %844 = vmatmul.bf16.gmra.mxu0 %v818
      %v845 = vpop.f32.mrf.mxu0
      %v846 = vadd.f32 0.0, %v845
      %v847 = vpop.f32.mrf.mxu0
      %v848 = vadd.f32 0.0, %v847
      %849 = vmatmul.bf16.gmra.mxu0 %v821
      %v850 = vpop.f32.mrf.mxu0
      %v851 = vadd.f32 0.0, %v850
      %v852 = vpop.f32.mrf.mxu0
      %v853 = vadd.f32 0.0, %v852
      %854 = vdwg.mxu0
      %v855 = vadd.f32 %v677, %v836
      %v856 = vadd.f32 %v678, %v838
      %v857 = vadd.f32 %v679, %v841
      %v858 = vadd.f32 %v680, %v843
      %v859 = vadd.f32 %v681, %v846
      %v860 = vadd.f32 %v682, %v848
      %v861 = vadd.f32 %v683, %v851
      %v862 = vadd.f32 %v684, %v853
      %s863 = scalar_lea.vmem %s1, 12
      %v864 = vld [vmem:[%s863] sm:$0x3]
      %v866 = vunpack.c.l.b16 %v188
      %v867 = vpack.c.b16 %v302, %v301
      %v868 = vpack.c.b16 %v304, %v303
      %v869 = vpack.c.b16 %v306, %v305
      %v870 = vpack.c.b16 %v866, %v307
      %v872 = vsel %vm246, %v867, 0
      %v875 = vsel %vm246, %v868, 0
      %v878 = vsel %vm246, %v869, 0
      %v881 = vsel %vm246, %v870, 0
      %v884 = vsel %vm259, %v864, 0
      %886 = vmatpush.bf16.msra.mxu0 0
      %887 = vmatpush.bf16.msra.mxu0 0
      %888 = vmatpush.bf16.msra.mxu0 0
      %889 = vmatpush.bf16.msra.mxu0 0
      %890 = vmatpush.bf16.msra.mxu0 0
      %891 = vmatpush.bf16.msra.mxu0 0
      %892 = vmatpush.bf16.msra.mxu0 0
      %893 = vmatpush.bf16.msra.mxu0 %v884
      %894 = vmatmul.bf16.gmra.mxu0 %v872
      %v895 = vpop.f32.mrf.mxu0
      %v896 = vadd.f32 0.0, %v895
      %v897 = vpop.f32.mrf.mxu0
      %v898 = vadd.f32 0.0, %v897
      %899 = vmatmul.bf16.gmra.mxu0 %v875
      %v900 = vpop.f32.mrf.mxu0
      %v901 = vadd.f32 0.0, %v900
      %v902 = vpop.f32.mrf.mxu0
      %v903 = vadd.f32 0.0, %v902
      %904 = vmatmul.bf16.gmra.mxu0 %v878
      %v905 = vpop.f32.mrf.mxu0
      %v906 = vadd.f32 0.0, %v905
      %v907 = vpop.f32.mrf.mxu0
      %v908 = vadd.f32 0.0, %v907
      %909 = vmatmul.bf16.gmra.mxu0 %v881
      %v910 = vpop.f32.mrf.mxu0
      %v911 = vadd.f32 0.0, %v910
      %v912 = vpop.f32.mrf.mxu0
      %v913 = vadd.f32 0.0, %v912
      %914 = vdwg.mxu0
      %v915 = vadd.f32 %v855, %v896
      %v916 = vadd.f32 %v856, %v898
      %v917 = vadd.f32 %v857, %v901
      %v918 = vadd.f32 %v858, %v903
      %v919 = vadd.f32 %v859, %v906
      %v920 = vadd.f32 %v860, %v908
      %v921 = vadd.f32 %v861, %v911
      %v922 = vadd.f32 %v862, %v913
      %s923 = scalar_lea.vmem %s1, 14
      %v924 = vld [vmem:[%s923] sm:$0x3]
      %v926 = vunpack.c.l.b16 %v198
      %v927 = vpack.c.b16 %v236, %v235
      %v928 = vpack.c.b16 %v238, %v237
      %v929 = vpack.c.b16 %v240, %v239
      %v930 = vpack.c.b16 %v926, %v241
      %v932 = vsel %vm246, %v927, 0
      %v935 = vsel %vm246, %v928, 0
      %v938 = vsel %vm246, %v929, 0
      %v941 = vsel %vm246, %v930, 0
      %v944 = vsel %vm259, %v924, 0
      %946 = vmatpush.bf16.msra.mxu0 0
      %947 = vmatpush.bf16.msra.mxu0 0
      %948 = vmatpush.bf16.msra.mxu0 0
      %949 = vmatpush.bf16.msra.mxu0 0
      %950 = vmatpush.bf16.msra.mxu0 0
      %951 = vmatpush.bf16.msra.mxu0 0
      %952 = vmatpush.bf16.msra.mxu0 0
      %953 = vmatpush.bf16.msra.mxu0 %v944
      %954 = vmatmul.bf16.gmra.mxu0 %v932
      %v955 = vpop.f32.mrf.mxu0
      %v956 = vadd.f32 0.0, %v955
      %v957 = vpop.f32.mrf.mxu0
      %v958 = vadd.f32 0.0, %v957
      %959 = vmatmul.bf16.gmra.mxu0 %v935
      %v960 = vpop.f32.mrf.mxu0
      %v961 = vadd.f32 0.0, %v960
      %v962 = vpop.f32.mrf.mxu0
      %v963 = vadd.f32 0.0, %v962
      %964 = vmatmul.bf16.gmra.mxu0 %v938
      %v965 = vpop.f32.mrf.mxu0
      %v966 = vadd.f32 0.0, %v965
      %v967 = vpop.f32.mrf.mxu0
      %v968 = vadd.f32 0.0, %v967
      %969 = vmatmul.bf16.gmra.mxu0 %v941
      %v970 = vpop.f32.mrf.mxu0
      %v971 = vadd.f32 0.0, %v970
      %v972 = vpop.f32.mrf.mxu0
      %v973 = vadd.f32 0.0, %v972
      %974 = vdwg.mxu0
      %v975 = vadd.f32 %v915, %v956
      %v976 = vadd.f32 %v916, %v958
      %v977 = vadd.f32 %v917, %v961
      %v978 = vadd.f32 %v918, %v963
      %v979 = vadd.f32 %v919, %v966
      %v980 = vadd.f32 %v920, %v968
      %v981 = vadd.f32 %v921, %v971
      %v982 = vadd.f32 %v922, %v973
      %v984 = vshrl.u32 %v188, 16
      %v986 = vrot.slane %v984, 4
      %v987 = vshll.u32 %v188, 16
      %v989 = vrot.slane %v987, 5
      %v990 = vor.u32 %v986, %v989
      %v991 = vrot.slane %v990, 4
      %v993 = vshll.u32 %v189, 16
      %v995 = vrot.slane %v993, 5
      %v996 = vsel %vm358, %v991, %v995
      %s997 = scalar_lea.vmem %s1, 16
      %v998 = vld [vmem:[%s997] sm:$0x3]
      %v999 = vunpack.c.l.b16 %v996
      %v1000 = vpack.c.b16 %v475, %v474
      %v1001 = vpack.c.b16 %v477, %v476
      %v1002 = vpack.c.b16 %v479, %v478
      %v1003 = vpack.c.b16 %v999, %v480
      %v1005 = vsel %vm246, %v1000, 0
      %v1008 = vsel %vm246, %v1001, 0
      %v1011 = vsel %vm246, %v1002, 0
      %v1014 = vsel %vm246, %v1003, 0
      %v1017 = vsel %vm259, %v998, 0
      %1019 = vmatpush.bf16.msra.mxu0 0
      %1020 = vmatpush.bf16.msra.mxu0 0
      %1021 = vmatpush.bf16.msra.mxu0 0
      %1022 = vmatpush.bf16.msra.mxu0 0
      %1023 = vmatpush.bf16.msra.mxu0 0
      %1024 = vmatpush.bf16.msra.mxu0 0
      %1025 = vmatpush.bf16.msra.mxu0 0
      %1026 = vmatpush.bf16.msra.mxu0 %v1017
      %1027 = vmatmul.bf16.gmra.mxu0 %v1005
      %v1028 = vpop.f32.mrf.mxu0
      %v1029 = vadd.f32 0.0, %v1028
      %v1030 = vpop.f32.mrf.mxu0
      %v1031 = vadd.f32 0.0, %v1030
      %1032 = vmatmul.bf16.gmra.mxu0 %v1008
      %v1033 = vpop.f32.mrf.mxu0
      %v1034 = vadd.f32 0.0, %v1033
      %v1035 = vpop.f32.mrf.mxu0
      %v1036 = vadd.f32 0.0, %v1035
      %1037 = vmatmul.bf16.gmra.mxu0 %v1011
      %v1038 = vpop.f32.mrf.mxu0
      %v1039 = vadd.f32 0.0, %v1038
      %v1040 = vpop.f32.mrf.mxu0
      %v1041 = vadd.f32 0.0, %v1040
      %1042 = vmatmul.bf16.gmra.mxu0 %v1014
      %v1043 = vpop.f32.mrf.mxu0
      %v1044 = vadd.f32 0.0, %v1043
      %v1045 = vpop.f32.mrf.mxu0
      %v1046 = vadd.f32 0.0, %v1045
      %1047 = vdwg.mxu0
      %v1048 = vadd.f32 %v975, %v1029
      %v1049 = vadd.f32 %v976, %v1031
      %v1050 = vadd.f32 %v977, %v1034
      %v1051 = vadd.f32 %v978, %v1036
      %v1052 = vadd.f32 %v979, %v1039
      %v1053 = vadd.f32 %v980, %v1041
      %v1054 = vadd.f32 %v981, %v1044
      %v1055 = vadd.f32 %v982, %v1046
      %v1056 = vld [vmem:[%s2] sm:$0x1]
      %v1058 = vperm.slane %v1056, 0
      %v1060 = vadd.f32 %v1048, %v1058
      %v1061 = vadd.f32 %v1049, %v1058
      %v1062 = vadd.f32 %v1050, %v1058
      %v1063 = vadd.f32 %v1051, %v1058
      %v1064 = vadd.f32 %v1052, %v1058
      %v1065 = vadd.f32 %v1053, %v1058
      %v1066 = vadd.f32 %v1054, %v1058
      %v1067 = vadd.f32 %v1055, %v1058
      %v1068 = vmin.f32 %v1060, 20.0
      %v1069 = vmin.f32 %v1061, 20.0
      %v1070 = vmin.f32 %v1062, 20.0
      %v1071 = vmin.f32 %v1063, 20.0
      %v1072 = vmin.f32 %v1064, 20.0
      %v1073 = vmin.f32 %v1065, 20.0
      %v1074 = vmin.f32 %v1066, 20.0
      %v1075 = vmin.f32 %v1067, 20.0
      %v1076 = vmul.f32 %v1068, 1.442695
      %v1077 = vpow.pop %v1076
      %v1078 = vmul.f32 %v1069, 1.442695
      %v1079 = vpow.pop %v1078
      %v1080 = vmul.f32 %v1070, 1.442695
      %v1081 = vpow.pop %v1080
      %v1082 = vmul.f32 %v1071, 1.442695
      %v1083 = vpow.pop %v1082
      %v1084 = vmul.f32 %v1072, 1.442695
      %v1085 = vpow.pop %v1084
      %v1086 = vmul.f32 %v1073, 1.442695
      %v1087 = vpow.pop %v1086
      %v1088 = vmul.f32 %v1074, 1.442695
      %v1089 = vpow.pop %v1088
      %v1090 = vmul.f32 %v1075, 1.442695
      %v1091 = vpow.pop %v1090
      %v1092 = vadd.f32 %v1077, 2.0
      %v1093 = vadd.f32 %v1079, 2.0
      %v1094 = vadd.f32 %v1081, 2.0
      %v1095 = vadd.f32 %v1083, 2.0
      %v1096 = vadd.f32 %v1085, 2.0
      %v1097 = vadd.f32 %v1087, 2.0
      %v1098 = vadd.f32 %v1089, 2.0
      %v1099 = vadd.f32 %v1091, 2.0
      %v1100 = vmul.f32 %v1077, %v1092
      %v1101 = vmul.f32 %v1079, %v1093
      %v1102 = vmul.f32 %v1081, %v1094
      %v1103 = vmul.f32 %v1083, %v1095
      %v1104 = vmul.f32 %v1085, %v1096
      %v1105 = vmul.f32 %v1087, %v1097
      %v1106 = vmul.f32 %v1089, %v1098
      %v1107 = vmul.f32 %v1091, %v1099
      %vm1108 = vcmp.gt.f32.partialorder %v1060, 20.0
      %vm1109 = vcmp.gt.f32.partialorder %v1061, 20.0
      %vm1110 = vcmp.gt.f32.partialorder %v1062, 20.0
      %vm1111 = vcmp.gt.f32.partialorder %v1063, 20.0
      %vm1112 = vcmp.gt.f32.partialorder %v1064, 20.0
      %vm1113 = vcmp.gt.f32.partialorder %v1065, 20.0
      %vm1114 = vcmp.gt.f32.partialorder %v1066, 20.0
      %vm1115 = vcmp.gt.f32.partialorder %v1067, 20.0
      %v1116 = vmul.f32 %v1060, %v1100
      %v1117 = vmul.f32 %v1061, %v1101
      %v1118 = vmul.f32 %v1062, %v1102
      %v1119 = vmul.f32 %v1063, %v1103
      %v1120 = vmul.f32 %v1064, %v1104
      %v1121 = vmul.f32 %v1065, %v1105
      %v1122 = vmul.f32 %v1066, %v1106
      %v1123 = vmul.f32 %v1067, %v1107
      %v1124 = vadd.f32 %v1100, 2.0
      %v1125 = vadd.f32 %v1101, 2.0
      %v1126 = vadd.f32 %v1102, 2.0
      %v1127 = vadd.f32 %v1103, 2.0
      %v1128 = vadd.f32 %v1104, 2.0
      %v1129 = vadd.f32 %v1105, 2.0
      %v1130 = vadd.f32 %v1106, 2.0
      %v1131 = vadd.f32 %v1107, 2.0
      %v1132 = vrcp.pop %v1124
      %v1133 = vrcp.pop %v1125
      %v1134 = vrcp.pop %v1126
      %v1135 = vrcp.pop %v1127
      %v1136 = vrcp.pop %v1128
      %v1137 = vrcp.pop %v1129
      %v1138 = vrcp.pop %v1130
      %v1139 = vrcp.pop %v1131
      %v1140 = vmul.f32 %v1116, %v1132
      %v1141 = vmul.f32 %v1117, %v1133
      %v1142 = vmul.f32 %v1118, %v1134
      %v1143 = vmul.f32 %v1119, %v1135
      %v1144 = vmul.f32 %v1120, %v1136
      %v1145 = vmul.f32 %v1121, %v1137
      %v1146 = vmul.f32 %v1122, %v1138
      %v1147 = vmul.f32 %v1123, %v1139
      %v1148 = vsel %vm1108, %v1060, %v1140
      %v1149 = vsel %vm1109, %v1061, %v1141
      %v1150 = vsel %vm1110, %v1062, %v1142
      %v1151 = vsel %vm1111, %v1063, %v1143
      %v1152 = vsel %vm1112, %v1064, %v1144
      %v1153 = vsel %vm1113, %v1065, %v1145
      %v1154 = vsel %vm1114, %v1066, %v1146
      %v1155 = vsel %vm1115, %v1067, %v1147
      %v1156 = vpack.c.bf16 %v1148, %v1148
      %v1157 = vpack.c.bf16 %v1149, %v1149
      %v1158 = vpack.c.bf16 %v1150, %v1150
      %v1159 = vpack.c.bf16 %v1151, %v1151
      %v1160 = vpack.c.bf16 %v1152, %v1152
      %v1161 = vpack.c.bf16 %v1153, %v1153
      %v1162 = vpack.c.bf16 %v1154, %v1154
      %v1163 = vpack.c.bf16 %v1155, %v1155
      %vm1164 = vcmask 60416
      %1165 = vst.msk [vmem:[%s170] sm:$0xf] %vm1164, %v1156
      %1166 = vst.msk [vmem:[%s170 + $0x4] sm:$0xf] %vm1164, %v1157
      %1167 = vst.msk [vmem:[%s170 + $0x8] sm:$0xf] %vm1164, %v1158
      %1168 = vst.msk [vmem:[%s170 + $0xc] sm:$0xf] %vm1164, %v1159
      %1169 = vst.msk [vmem:[%s170 + $0x10] sm:$0xf] %vm1164, %v1160
      %1170 = vst.msk [vmem:[%s170 + $0x14] sm:$0xf] %vm1164, %v1161
      %1171 = vst.msk [vmem:[%s170 + $0x18] sm:$0xf] %vm1164, %v1162
      %1172 = vst.msk [vmem:[%s170 + $0x1c] sm:$0xf] %vm1164, %v1163
      %p1173 = scmp.lt.s32.totalorder %s14, 1
      %s1174 = scalar_select %p1173, %s14, 1
      %s1175 = smul.addr %s1174, 8
      %s1176 = smul.addr %s1175, 4
      %s1177 = scalar_lea.vmem %s3, %s1176
      // Predicated region
      $region33: #{csp_block_forward.6} parent=31 // pred_check
        %p1178 = pneg %p100
      $region34: #{csp_block_forward.6} parent=31 // pred_check_branch
        %1180 = sbr.rel (%p1178) target = $region36
      $region35: #{csp_block_forward.6} parent=31 // pred_region
        _
      $region36: #{csp_block_forward.6} parent=31 // pred_fallthru
        _
    $region32: #{csp_block_forward.6} parent=5 // pred_fallthru
      _
    %p1181 = scmp.le.s32.totalorder 2, %s9
    // Predicated region
    $region37: #{csp_block_forward.6} parent=5 // pred_check
      %p1182 = pneg %p1181
    $region38: #{csp_block_forward.6} parent=5 // pred_check_branch
      %1184 = sbr.rel (%p1182) target = $region40
    $region39: #{csp_block_forward.6} parent=5 // pred_region
      %s1185 = ssub.s32 %s9, 2
      // Predicated region
      $region41: #{csp_block_forward.6} parent=39 // pred_check
        %p1186 = pneg %p106
      $region42: #{csp_block_forward.6} parent=39 // pred_check_branch
        %1188 = sbr.rel (%p1186) target = $region44
      $region43: #{csp_block_forward.6} parent=39 // pred_region
        %p1189 = scmp.lt.s32.totalorder %s15, 1
        %s1190 = scalar_select %p1189, %s15, 1
        %s1191 = smul.addr %s1190, 8
        %s1192 = smul.addr %s1191, 4
        %s1193 = scalar_lea.vmem %s3, %s1192
      $region44: #{csp_block_forward.6} parent=39 // pred_fallthru
        _
    $region40: #{csp_block_forward.6} parent=5 // pred_fallthru
      _
  $region6: #{csp_block_forward.6} parent=0 // loop_footer
    %s13 = sadd.s32 1, %s9
  $region7: #{csp_block_forward.6} parent=0 // loop_footer_branch
    %8 = sbr.rel target = $region3
  $region8: #{csp_block_forward.6} parent=0 // loop_exit
    _

// kernel: csp_block_forward.10
$region0: #{csp_block_forward.10}
  #allocation0 [shape = 'u32[]', space=smem, size = 0x4, offset = 0x4, fixed_abs, tag = 'smem constant byte address 0x4 - core index']
  #allocation1 [shape = 'u32[72,128]{1,0:T(1,128)}', space=vmem, size = 0x9000, scoped, tag = 'internal scratch']
  %s0 = inlined_call_operand.vmem [shape: bf16[128,8], index: 0, kind: input, shape index: {}]
  %s1 = inlined_call_operand.vmem [shape: bf16[8,8], index: 1, kind: input, shape index: {}]
  %s2 = inlined_call_operand.vmem [shape: f32[1,8], index: 2, kind: input, shape index: {}]
  %s3 = inlined_call_operand.vmem [shape: bf16[128,8], index: 3, kind: output, shape index: {}]
  %s4 = sld [smem:[#allocation0]]
  $region22: #{csp_block_forward.10} parent=0
    _
  %s6 = ssub.s32 1, %s4
  %s7 = scalar_select 0, %s6, %s4
  // Predicated region
  $region2: #{csp_block_forward.10} parent=0 // pred_check
    _
  $region3: #{csp_block_forward.10} parent=0 // pred_check_branch
    %9 = sbr.rel (0) target = $region5
  $region4: #{csp_block_forward.10} parent=0 // pred_region
    _
  $region5: #{csp_block_forward.10} parent=0 // pred_fallthru
    _
  // Predicated region
  $region6: #{csp_block_forward.10} parent=0 // pred_check
    _
  $region7: #{csp_block_forward.10} parent=0 // pred_check_branch
    %11 = sbr.rel (0) target = $region9
  $region8: #{csp_block_forward.10} parent=0 // pred_region
    _
  $region9: #{csp_block_forward.10} parent=0 // pred_fallthru
    _
  // Predicated region
  $region10: #{csp_block_forward.10} parent=0 // pred_check
    _
  $region11: #{csp_block_forward.10} parent=0 // pred_check_branch
    %13 = sbr.rel (0) target = $region13
  $region12: #{csp_block_forward.10} parent=0 // pred_region
    _
  $region13: #{csp_block_forward.10} parent=0 // pred_fallthru
    _
  %v15 = vld [vmem:[%s0] sm:$0xf]
  %v16 = vld [vmem:[%s0 + $0x4] sm:$0xf]
  %v17 = vld [vmem:[%s0 + $0x8] sm:$0xf]
  %v18 = vld [vmem:[%s0 + $0xc] sm:$0xf]
  %v19 = vld [vmem:[%s0 + $0x10] sm:$0xf]
  %v20 = vld [vmem:[%s0 + $0x14] sm:$0xf]
  %v21 = vld [vmem:[%s0 + $0x18] sm:$0xf]
  %v22 = vld [vmem:[%s0 + $0x1c] sm:$0xf]
  %v23 = vld [vmem:[%s0 + $0x20] sm:$0xf]
  %v24 = vld [vmem:[%s0 + $0x24] sm:$0xf]
  %v25 = vld [vmem:[%s0 + $0x28] sm:$0xf]
  %v26 = vld [vmem:[%s0 + $0x2c] sm:$0xf]
  %v27 = vld [vmem:[%s0 + $0x30] sm:$0xf]
  %v28 = vld [vmem:[%s0 + $0x34] sm:$0xf]
  %v29 = vld [vmem:[%s0 + $0x38] sm:$0xf]
  %v30 = vld [vmem:[%s0 + $0x3c] sm:$0xf]
  %v31 = vld [vmem:[%s1] sm:$0xf]
  %v32 = vld [vmem:[%s2] sm:$0x1]
  %v34 = vperm.slane %v32, 0
  %v52 = vunpack.c.l.b16 %v15
  %v53 = vunpack.c.l.b16 %v16
  %v54 = vunpack.c.l.b16 %v17
  %v55 = vunpack.c.l.b16 %v18
  %v56 = vunpack.c.l.b16 %v19
  %v57 = vunpack.c.l.b16 %v20
  %v58 = vunpack.c.l.b16 %v21
  %v59 = vunpack.c.l.b16 %v22
  %v60 = vunpack.c.l.b16 %v23
  %v61 = vunpack.c.l.b16 %v24
  %v62 = vunpack.c.l.b16 %v25
  %v63 = vunpack.c.l.b16 %v26
  %v64 = vunpack.c.l.b16 %v27
  %v65 = vunpack.c.l.b16 %v28
  %v66 = vunpack.c.l.b16 %v29
  %v67 = vunpack.c.l.b16 %v30
  %v68 = vpack.c.b16 %v53, %v52
  %v69 = vpack.c.b16 %v55, %v54
  %v70 = vpack.c.b16 %v57, %v56
  %v71 = vpack.c.b16 %v59, %v58
  %v72 = vpack.c.b16 %v61, %v60
  %v73 = vpack.c.b16 %v63, %v62
  %v74 = vpack.c.b16 %v65, %v64
  %v75 = vpack.c.b16 %v67, %v66
  %vm76 = vcmask 64512
  %v78 = vsel %vm76, %v68, 0
  %v81 = vsel %vm76, %v69, 0
  %v84 = vsel %vm76, %v70, 0
  %v87 = vsel %vm76, %v71, 0
  %v90 = vsel %vm76, %v72, 0
  %v93 = vsel %vm76, %v73, 0
  %v96 = vsel %vm76, %v74, 0
  %v99 = vsel %vm76, %v75, 0
  %vm101 = vcmask 1043456
  %v103 = vsel %vm101, %v31, 0
  %105 = vmatpush.bf16.msra.mxu0 0
  %106 = vmatpush.bf16.msra.mxu0 0
  %107 = vmatpush.bf16.msra.mxu0 0
  %108 = vmatpush.bf16.msra.mxu0 0
  %109 = vmatpush.bf16.msra.mxu0 0
  %110 = vmatpush.bf16.msra.mxu0 0
  %111 = vmatpush.bf16.msra.mxu0 0
  %112 = vmatpush.bf16.msra.mxu0 %v103
  %113 = vmatmul.bf16.gmra.mxu0 %v78
  %v114 = vpop.f32.mrf.mxu0
  %v115 = vadd.f32 %v34, %v114
  %v116 = vpop.f32.mrf.mxu0
  %v117 = vadd.f32 %v34, %v116
  %118 = vmatmul.bf16.gmra.mxu0 %v81
  %v119 = vpop.f32.mrf.mxu0
  %v120 = vadd.f32 %v34, %v119
  %v121 = vpop.f32.mrf.mxu0
  %v122 = vadd.f32 %v34, %v121
  %123 = vmatmul.bf16.gmra.mxu0 %v84
  %v124 = vpop.f32.mrf.mxu0
  %v125 = vadd.f32 %v34, %v124
  %v126 = vpop.f32.mrf.mxu0
  %v127 = vadd.f32 %v34, %v126
  %128 = vmatmul.bf16.gmra.mxu0 %v87
  %v129 = vpop.f32.mrf.mxu0
  %v130 = vadd.f32 %v34, %v129
  %v131 = vpop.f32.mrf.mxu0
  %v132 = vadd.f32 %v34, %v131
  %133 = vmatmul.bf16.gmra.mxu0 %v90
  %v134 = vpop.f32.mrf.mxu0
  %v135 = vadd.f32 %v34, %v134
  %v136 = vpop.f32.mrf.mxu0
  %v137 = vadd.f32 %v34, %v136
  %138 = vmatmul.bf16.gmra.mxu0 %v93
  %v139 = vpop.f32.mrf.mxu0
  %v140 = vadd.f32 %v34, %v139
  %v141 = vpop.f32.mrf.mxu0
  %v142 = vadd.f32 %v34, %v141
  %143 = vmatmul.bf16.gmra.mxu0 %v96
  %v144 = vpop.f32.mrf.mxu0
  %v145 = vadd.f32 %v34, %v144
  %v146 = vpop.f32.mrf.mxu0
  %v147 = vadd.f32 %v34, %v146
  %148 = vmatmul.bf16.gmra.mxu0 %v99
  %v149 = vpop.f32.mrf.mxu0
  %v150 = vadd.f32 %v34, %v149
  %v151 = vpop.f32.mrf.mxu0
  %v152 = vadd.f32 %v34, %v151
  %153 = vdwg.mxu0
  %v154 = vmin.f32 %v115, 20.0
  %v155 = vmin.f32 %v117, 20.0
  %v156 = vmin.f32 %v120, 20.0
  %v157 = vmin.f32 %v122, 20.0
  %v158 = vmin.f32 %v125, 20.0
  %v159 = vmin.f32 %v127, 20.0
  %v160 = vmin.f32 %v130, 20.0
  %v161 = vmin.f32 %v132, 20.0
  %v162 = vmin.f32 %v135, 20.0
  %v163 = vmin.f32 %v137, 20.0
  %v164 = vmin.f32 %v140, 20.0
  %v165 = vmin.f32 %v142, 20.0
  %v166 = vmin.f32 %v145, 20.0
  %v167 = vmin.f32 %v147, 20.0
  %v168 = vmin.f32 %v150, 20.0
  %v169 = vmin.f32 %v152, 20.0
  %v170 = vmul.f32 %v154, 1.442695
  %v171 = vpow.pop %v170
  %v172 = vmul.f32 %v155, 1.442695
  %v173 = vpow.pop %v172
  %v174 = vmul.f32 %v156, 1.442695
  %v175 = vpow.pop %v174
  %v176 = vmul.f32 %v157, 1.442695
  %v177 = vpow.pop %v176
  %v178 = vmul.f32 %v158, 1.442695
  %v179 = vpow.pop %v178
  %v180 = vmul.f32 %v159, 1.442695
  %v181 = vpow.pop %v180
  %v182 = vmul.f32 %v160, 1.442695
  %v183 = vpow.pop %v182
  %v184 = vmul.f32 %v161, 1.442695
  %v185 = vpow.pop %v184
  %v186 = vmul.f32 %v162, 1.442695
  %v187 = vpow.pop %v186
  %v188 = vmul.f32 %v163, 1.442695
  %v189 = vpow.pop %v188
  %v190 = vmul.f32 %v164, 1.442695
  %v191 = vpow.pop %v190
  %v192 = vmul.f32 %v165, 1.442695
  %v193 = vpow.pop %v192
  %v194 = vmul.f32 %v166, 1.442695
  %v195 = vpow.pop %v194
  %v196 = vmul.f32 %v167, 1.442695
  %v197 = vpow.pop %v196
  %v198 = vmul.f32 %v168, 1.442695
  %v199 = vpow.pop %v198
  %v200 = vmul.f32 %v169, 1.442695
  %v201 = vpow.pop %v200
  %v202 = vadd.f32 %v171, 2.0
  %v203 = vadd.f32 %v173, 2.0
  %v204 = vadd.f32 %v175, 2.0
  %v205 = vadd.f32 %v177, 2.0
  %v206 = vadd.f32 %v179, 2.0
  %v207 = vadd.f32 %v181, 2.0
  %v208 = vadd.f32 %v183, 2.0
  %v209 = vadd.f32 %v185, 2.0
  %v210 = vadd.f32 %v187, 2.0
  %v211 = vadd.f32 %v189, 2.0
  %v212 = vadd.f32 %v191, 2.0
  %v213 = vadd.f32 %v193, 2.0
  %v214 = vadd.f32 %v195, 2.0
  %v215 = vadd.f32 %v197, 2.0
  %v216 = vadd.f32 %v199, 2.0
  %v217 = vadd.f32 %v201, 2.0
  %v218 = vmul.f32 %v171, %v202
  %v219 = vmul.f32 %v173, %v203
  %v220 = vmul.f32 %v175, %v204
  %v221 = vmul.f32 %v177, %v205
  %v222 = vmul.f32 %v179, %v206
  %v223 = vmul.f32 %v181, %v207
  %v224 = vmul.f32 %v183, %v208
  %v225 = vmul.f32 %v185, %v209
  %v226 = vmul.f32 %v187, %v210
  %v227 = vmul.f32 %v189, %v211
  %v228 = vmul.f32 %v191, %v212
  %v229 = vmul.f32 %v193, %v213
  %v230 = vmul.f32 %v195, %v214
  %v231 = vmul.f32 %v197, %v215
  %v232 = vmul.f32 %v199, %v216
  %v233 = vmul.f32 %v201, %v217
  %vm234 = vcmp.gt.f32.partialorder %v115, 20.0
  %vm235 = vcmp.gt.f32.partialorder %v117, 20.0
  %vm236 = vcmp.gt.f32.partialorder %v120, 20.0
  %vm237 = vcmp.gt.f32.partialorder %v122, 20.0
  %vm238 = vcmp.gt.f32.partialorder %v125, 20.0
  %vm239 = vcmp.gt.f32.partialorder %v127, 20.0
  %vm240 = vcmp.gt.f32.partialorder %v130, 20.0
  %vm241 = vcmp.gt.f32.partialorder %v132, 20.0
  %vm242 = vcmp.gt.f32.partialorder %v135, 20.0
  %vm243 = vcmp.gt.f32.partialorder %v137, 20.0
  %vm244 = vcmp.gt.f32.partialorder %v140, 20.0
  %vm245 = vcmp.gt.f32.partialorder %v142, 20.0
  %vm246 = vcmp.gt.f32.partialorder %v145, 20.0
  %vm247 = vcmp.gt.f32.partialorder %v147, 20.0
  %vm248 = vcmp.gt.f32.partialorder %v150, 20.0
  %vm249 = vcmp.gt.f32.partialorder %v152, 20.0
  %v250 = vmul.f32 %v115, %v218
  %v251 = vmul.f32 %v117, %v219
  %v252 = vmul.f32 %v120, %v220
  %v253 = vmul.f32 %v122, %v221
  %v254 = vmul.f32 %v125, %v222
  %v255 = vmul.f32 %v127, %v223
  %v256 = vmul.f32 %v130, %v224
  %v257 = vmul.f32 %v132, %v225
  %v258 = vmul.f32 %v135, %v226
  %v259 = vmul.f32 %v137, %v227
  %v260 = vmul.f32 %v140, %v228
  %v261 = vmul.f32 %v142, %v229
  %v262 = vmul.f32 %v145, %v230
  %v263 = vmul.f32 %v147, %v231
  %v264 = vmul.f32 %v150, %v232
  %v265 = vmul.f32 %v152, %v233
  %v266 = vadd.f32 %v218, 2.0
  %v267 = vadd.f32 %v219, 2.0
  %v268 = vadd.f32 %v220, 2.0
  %v269 = vadd.f32 %v221, 2.0
  %v270 = vadd.f32 %v222, 2.0
  %v271 = vadd.f32 %v223, 2.0
  %v272 = vadd.f32 %v224, 2.0
  %v273 = vadd.f32 %v225, 2.0
  %v274 = vadd.f32 %v226, 2.0
  %v275 = vadd.f32 %v227, 2.0
  %v276 = vadd.f32 %v228, 2.0
  %v277 = vadd.f32 %v229, 2.0
  %v278 = vadd.f32 %v230, 2.0
  %v279 = vadd.f32 %v231, 2.0
  %v280 = vadd.f32 %v232, 2.0
  %v281 = vadd.f32 %v233, 2.0
  %v282 = vrcp.pop %v266
  %v283 = vrcp.pop %v267
  %v284 = vrcp.pop %v268
  %v285 = vrcp.pop %v269
  %v286 = vrcp.pop %v270
  %v287 = vrcp.pop %v271
  %v288 = vrcp.pop %v272
  %v289 = vrcp.pop %v273
  %v290 = vrcp.pop %v274
  %v291 = vrcp.pop %v275
  %v292 = vrcp.pop %v276
  %v293 = vrcp.pop %v277
  %v294 = vrcp.pop %v278
  %v295 = vrcp.pop %v279
  %v296 = vrcp.pop %v280
  %v297 = vrcp.pop %v281
  %v298 = vmul.f32 %v250, %v282
  %v299 = vmul.f32 %v251, %v283
  %v300 = vmul.f32 %v252, %v284
  %v301 = vmul.f32 %v253, %v285
  %v302 = vmul.f32 %v254, %v286
  %v303 = vmul.f32 %v255, %v287
  %v304 = vmul.f32 %v256, %v288
  %v305 = vmul.f32 %v257, %v289
  %v306 = vmul.f32 %v258, %v290
  %v307 = vmul.f32 %v259, %v291
  %v308 = vmul.f32 %v260, %v292
  %v309 = vmul.f32 %v261, %v293
  %v310 = vmul.f32 %v262, %v294
  %v311 = vmul.f32 %v263, %v295
  %v312 = vmul.f32 %v264, %v296
  %v313 = vmul.f32 %v265, %v297
  %v314 = vsel %vm234, %v115, %v298
  %v315 = vsel %vm235, %v117, %v299
  %v316 = vsel %vm236, %v120, %v300
  %v317 = vsel %vm237, %v122, %v301
  %v318 = vsel %vm238, %v125, %v302
  %v319 = vsel %vm239, %v127, %v303
  %v320 = vsel %vm240, %v130, %v304
  %v321 = vsel %vm241, %v132, %v305
  %v322 = vsel %vm242, %v135, %v306
  %v323 = vsel %vm243, %v137, %v307
  %v324 = vsel %vm244, %v140, %v308
  %v325 = vsel %vm245, %v142, %v309
  %v326 = vsel %vm246, %v145, %v310
  %v327 = vsel %vm247, %v147, %v311
  %v328 = vsel %vm248, %v150, %v312
  %v329 = vsel %vm249, %v152, %v313
  %v330 = vpack.c.bf16 %v314, %v314
  %v331 = vpack.c.bf16 %v315, %v315
  %v332 = vpack.c.bf16 %v316, %v316
  %v333 = vpack.c.bf16 %v317, %v317
  %v334 = vpack.c.bf16 %v318, %v318
  %v335 = vpack.c.bf16 %v319, %v319
  %v336 = vpack.c.bf16 %v320, %v320
  %v337 = vpack.c.bf16 %v321, %v321
  %v338 = vpack.c.bf16 %v322, %v322
  %v339 = vpack.c.bf16 %v323, %v323
  %v340 = vpack.c.bf16 %v324, %v324
  %v341 = vpack.c.bf16 %v325, %v325
  %v342 = vpack.c.bf16 %v326, %v326
  %v343 = vpack.c.bf16 %v327, %v327
  %v344 = vpack.c.bf16 %v328, %v328
  %v345 = vpack.c.bf16 %v329, %v329
  %vm346 = vcmask 60416
  %347 = vst.msk [vmem:[%s3] sm:$0xf] %vm346, %v330
  %348 = vst.msk [vmem:[%s3 + $0x4] sm:$0xf] %vm346, %v331
  %349 = vst.msk [vmem:[%s3 + $0x8] sm:$0xf] %vm346, %v332
  %350 = vst.msk [vmem:[%s3 + $0xc] sm:$0xf] %vm346, %v333
  %351 = vst.msk [vmem:[%s3 + $0x10] sm:$0xf] %vm346, %v334
  %352 = vst.msk [vmem:[%s3 + $0x14] sm:$0xf] %vm346, %v335
  %353 = vst.msk [vmem:[%s3 + $0x18] sm:$0xf] %vm346, %v336
  %354 = vst.msk [vmem:[%s3 + $0x1c] sm:$0xf] %vm346, %v337
  %355 = vst.msk [vmem:[%s3 + $0x20] sm:$0xf] %vm346, %v338
  %356 = vst.msk [vmem:[%s3 + $0x24] sm:$0xf] %vm346, %v339
  %357 = vst.msk [vmem:[%s3 + $0x28] sm:$0xf] %vm346, %v340
  %358 = vst.msk [vmem:[%s3 + $0x2c] sm:$0xf] %vm346, %v341
  %359 = vst.msk [vmem:[%s3 + $0x30] sm:$0xf] %vm346, %v342
  %360 = vst.msk [vmem:[%s3 + $0x34] sm:$0xf] %vm346, %v343
  %361 = vst.msk [vmem:[%s3 + $0x38] sm:$0xf] %vm346, %v344
  %362 = vst.msk [vmem:[%s3 + $0x3c] sm:$0xf] %vm346, %v345
  // Predicated region
  $region14: #{csp_block_forward.10} parent=0 // pred_check
    _
  $region15: #{csp_block_forward.10} parent=0 // pred_check_branch
    %364 = sbr.rel (0) target = $region17
  $region16: #{csp_block_forward.10} parent=0 // pred_region
    _
  $region17: #{csp_block_forward.10} parent=0 // pred_fallthru
    _
  // Predicated region
  $region18: #{csp_block_forward.10} parent=0 // pred_check
    _
  $region19: #{csp_block_forward.10} parent=0 // pred_check_branch
    %366 = sbr.rel (0) target = $region21
  $region20: #{csp_block_forward.10} parent=0 // pred_region
    _
  $region21: #{csp_block_forward.10} parent=0 // pred_fallthru
    _

// kernel: csp_block_forward.9
$region0: #{csp_block_forward.9}
  #allocation0 [shape = 'u32[]', space=smem, size = 0x4, offset = 0x4, fixed_abs, tag = 'smem constant byte address 0x4 - core index']
  #allocation1 [shape = 'u32[72,128]{1,0:T(1,128)}', space=vmem, size = 0x9000, scoped, tag = 'internal scratch']
  %s0 = inlined_call_operand.vmem [shape: bf16[2,10,10,4], index: 0, kind: input, shape index: {}]
  %s1 = inlined_call_operand.vmem [shape: bf16[9,4,8], index: 1, kind: input, shape index: {}]
  %s2 = inlined_call_operand.vmem [shape: f32[1,8], index: 2, kind: input, shape index: {}]
  %s3 = inlined_call_operand.vmem [shape: bf16[2,64,8], index: 3, kind: input, shape index: {}]
  %s4 = inlined_call_operand.vmem [shape: bf16[2,64,8], index: 4, kind: output, shape index: {}]
  %s5 = sld [smem:[#allocation0]]
  $region49: #{csp_block_forward.9} parent=0
    _
  %s7 = ssub.s32 1, %s5
  %s8 = scalar_select 0, %s7, %s5
  loop: start=0, step=1, limit=4
  $region2: #{csp_block_forward.9} parent=0 // loop_pre_header
    _
  $region3: #{csp_block_forward.9} parent=0 // loop_header
    %s10 = sphi 0, %s14
    %p11 = scmp.ge.s32.totalorder %s10, 4
    %s20 = sphi 0, %s22
    %s23 = sphi 0, %s20
    %s24 = sphi 0, %s23
    %s40 = sphi 0, %s24
    %s44 = sphi 0, %s44
    %s46 = sphi 0, %s44
    %s47 = sphi 0, %s46
    %s61 = sphi 0, %s47
    %s65 = sphi 0, %s65
    %s67 = sphi 0, %s65
    %s68 = sphi 0, %s67
    %s82 = sphi 0, %s68
    %s88 = sphi 0, %s90
    %s91 = sphi 0, %s88
    %s92 = sphi 0, %s91
    %s108 = sphi 0, %s92
    %s114 = sphi 0, %s116
    %s117 = sphi 0, %s114
    %s118 = sphi 0, %s117
    %s134 = sphi 0, %s118
  $region4: #{csp_block_forward.9} parent=0 // loop_header_branch
    %13 = sbr.rel (%p11) target = $region8
  $region5: #{csp_block_forward.9} parent=0 // loop_body
    %s15 = ssub.s32 %s10, 1
    %s16 = ssub.s32 %s10, 2
    %s17 = sadd.s32 %s10, 1
    %s18 = ssub.s32 %s10, %s17
    %p19 = scmp.eq.s32.totalorder %s18, 0
    %s21 = sadd.s32 %s20, 1
    %s22 = scalar_select %p19, %s20, %s21
    %p25 = pneg %p19
    %p26 = scmp.eq.s32.totalorder %s10, 1
    %p27 = por %p25, %p26
    %p28 = scmp.ne.s32.totalorder %s20, %s23
    %p29 = scmp.eq.s32.totalorder %s10, 0
    %p30 = por %p28, %p29
    %p31 = scmp.ne.s32.totalorder %s20, %s23
    %p32 = scmp.eq.s32.totalorder %s15, 1
    %p33 = por %p31, %p32
    %p34 = scmp.ne.s32.totalorder %s23, %s24
    %p35 = scmp.eq.s32.totalorder %s15, 0
    %p36 = por %p34, %p35
    %p37 = scmp.ne.s32.totalorder %s23, %s24
    %p38 = scmp.eq.s32.totalorder %s16, 1
    %p39 = por %p37, %p38
    %p41 = scmp.ne.s32.totalorder %s24, %s40
    %p42 = scmp.eq.s32.totalorder %s16, 0
    %p43 = por %p41, %p42
    %s45 = sadd.s32 %s44, 1
    %p48 = scmp.eq.s32.totalorder %s10, 1
    %p49 = scmp.ne.s32.totalorder %s44, %s46
    %p50 = scmp.eq.s32.totalorder %s10, 0
    %p51 = por %p49, %p50
    %p52 = scmp.ne.s32.totalorder %s44, %s46
    %p53 = scmp.eq.s32.totalorder %s15, 1
    %p54 = por %p52, %p53
    %p55 = scmp.ne.s32.totalorder %s46, %s47
    %p56 = scmp.eq.s32.totalorder %s15, 0
    %p57 = por %p55, %p56
    %p58 = scmp.ne.s32.totalorder %s46, %s47
    %p59 = scmp.eq.s32.totalorder %s16, 1
    %p60 = por %p58, %p59
    %p62 = scmp.ne.s32.totalorder %s47, %s61
    %p63 = scmp.eq.s32.totalorder %s16, 0
    %p64 = por %p62, %p63
    %s66 = sadd.s32 %s65, 1
    %p69 = scmp.eq.s32.totalorder %s10, 1
    %p70 = scmp.ne.s32.totalorder %s65, %s67
    %p71 = scmp.eq.s32.totalorder %s10, 0
    %p72 = por %p70, %p71
    %p73 = scmp.ne.s32.totalorder %s65, %s67
    %p74 = scmp.eq.s32.totalorder %s15, 1
    %p75 = por %p73, %p74
    %p76 = scmp.ne.s32.totalorder %s67, %s68
    %p77 = scmp.eq.s32.totalorder %s15, 0
    %p78 = por %p76, %p77
    %p79 = scmp.ne.s32.totalorder %s67, %s68
    %p80 = scmp.eq.s32.totalorder %s16, 1
    %p81 = por %p79, %p80
    %p83 = scmp.ne.s32.totalorder %s68, %s82
    %p84 = scmp.eq.s32.totalorder %s16, 0
    %p85 = por %p83, %p84
    %s86 = ssub.s32 %s10, %s17
    %p87 = scmp.eq.s32.totalorder %s86, 0
    %s89 = sadd.s32 %s88, 1
    %s90 = scalar_select %p87, %s88, %s89
    %p93 = pneg %p87
    %p94 = scmp.eq.s32.totalorder %s10, 1
    %p95 = por %p93, %p94
    %p96 = scmp.ne.s32.totalorder %s88, %s91
    %p97 = scmp.eq.s32.totalorder %s10, 0
    %p98 = por %p96, %p97
    %p99 = scmp.ne.s32.totalorder %s88, %s91
    %p100 = scmp.eq.s32.totalorder %s15, 1
    %p101 = por %p99, %p100
    %p102 = scmp.ne.s32.totalorder %s91, %s92
    %p103 = scmp.eq.s32.totalorder %s15, 0
    %p104 = por %p102, %p103
    %p105 = scmp.ne.s32.totalorder %s91, %s92
    %p106 = scmp.eq.s32.totalorder %s16, 1
    %p107 = por %p105, %p106
    %p109 = scmp.ne.s32.totalorder %s92, %s108
    %p110 = scmp.eq.s32.totalorder %s16, 0
    %p111 = por %p109, %p110
    %s112 = ssub.s32 %s10, %s17
    %p113 = scmp.eq.s32.totalorder %s112, 0
    %s115 = sadd.s32 %s114, 1
    %s116 = scalar_select %p113, %s114, %s115
    %p119 = pneg %p113
    %p120 = scmp.eq.s32.totalorder %s10, 1
    %p121 = por %p119, %p120
    %p122 = scmp.ne.s32.totalorder %s114, %s117
    %p123 = scmp.eq.s32.totalorder %s10, 0
    %p124 = por %p122, %p123
    %p125 = scmp.ne.s32.totalorder %s114, %s117
    %p126 = scmp.eq.s32.totalorder %s15, 1
    %p127 = por %p125, %p126
    %p128 = scmp.ne.s32.totalorder %s117, %s118
    %p129 = scmp.eq.s32.totalorder %s15, 0
    %p130 = por %p128, %p129
    %p131 = scmp.ne.s32.totalorder %s117, %s118
    %p132 = scmp.eq.s32.totalorder %s16, 1
    %p133 = por %p131, %p132
    %p135 = scmp.ne.s32.totalorder %s118, %s134
    %p136 = scmp.eq.s32.totalorder %s16, 0
    %p137 = por %p135, %p136
    %p138 = scmp.le.s32.totalorder 1, %s10
    %p139 = scmp.lt.s32.totalorder %s10, 3
    %p140 = pnand %p138, %p139
    %p141 = pneg %p140
    // Predicated region
    $region9: #{csp_block_forward.9} parent=5 // pred_check
      _
    $region10: #{csp_block_forward.9} parent=5 // pred_check_branch
      %143 = sbr.rel (%p140) target = $region12
    $region11: #{csp_block_forward.9} parent=5 // pred_region
      %s144 = ssub.s32 %s10, 1
      // Predicated region
      $region13: #{csp_block_forward.9} parent=11 // pred_check
        %p145 = pneg %p57
      $region14: #{csp_block_forward.9} parent=11 // pred_check_branch
        %147 = sbr.rel (%p145) target = $region16
      $region15: #{csp_block_forward.9} parent=11 // pred_region
        _
      $region16: #{csp_block_forward.9} parent=11 // pred_fallthru
        _
      // Predicated region
      $region17: #{csp_block_forward.9} parent=11 // pred_check
        %p148 = pneg %p78
      $region18: #{csp_block_forward.9} parent=11 // pred_check_branch
        %150 = sbr.rel (%p148) target = $region20
      $region19: #{csp_block_forward.9} parent=11 // pred_region
        _
      $region20: #{csp_block_forward.9} parent=11 // pred_fallthru
        _
    $region12: #{csp_block_forward.9} parent=5 // pred_fallthru
      _
    %p151 = scmp.lt.s32.totalorder %s10, 2
    // Predicated region
    $region21: #{csp_block_forward.9} parent=5 // pred_check
      %p152 = pneg %p151
    $region22: #{csp_block_forward.9} parent=5 // pred_check_branch
      %154 = sbr.rel (%p152) target = $region24
    $region23: #{csp_block_forward.9} parent=5 // pred_region
      // Predicated region
      $region25: #{csp_block_forward.9} parent=23 // pred_check
        %p155 = pneg %p30
      $region26: #{csp_block_forward.9} parent=23 // pred_check_branch
        %157 = sbr.rel (%p155) target = $region28
      $region27: #{csp_block_forward.9} parent=23 // pred_region
        %p158 = scmp.lt.s32.totalorder %s10, 1
        %s159 = scalar_select %p158, %s10, 1
        %s160 = smul.addr %s159, 20
        %s161 = smul.addr %s160, 4
        %s162 = scalar_lea.vmem %s0, %s161
      $region28: #{csp_block_forward.9} parent=23 // pred_fallthru
        _
      // Predicated region
      $region29: #{csp_block_forward.9} parent=23 // pred_check
        %p163 = pneg %p98
      $region30: #{csp_block_forward.9} parent=23 // pred_check_branch
        %165 = sbr.rel (%p163) target = $region32
      $region31: #{csp_block_forward.9} parent=23 // pred_region
        %p166 = scmp.lt.s32.totalorder %s10, 1
        %s167 = scalar_select %p166, %s10, 1
        %s168 = smul.addr %s167, 8
        %s169 = smul.addr %s168, 4
        %s170 = scalar_lea.vmem %s3, %s169
      $region32: #{csp_block_forward.9} parent=23 // pred_fallthru
        _
    $region24: #{csp_block_forward.9} parent=5 // pred_fallthru
      _
    %p171 = scmp.le.s32.totalorder 1, %s10
    %p172 = scmp.lt.s32.totalorder %s10, 3
    %p173 = pnand %p171, %p172
    %p174 = pneg %p173
    // Predicated region
    $region33: #{csp_block_forward.9} parent=5 // pred_check
      _
    $region34: #{csp_block_forward.9} parent=5 // pred_check_branch
      %176 = sbr.rel (%p173) target = $region36
    $region35: #{csp_block_forward.9} parent=5 // pred_region
      %s177 = ssub.s32 %s10, 1
      %p178 = scmp.lt.s32.totalorder %s15, 1
      %s179 = scalar_select %p178, %s15, 1
      %s180 = smul.addr %s179, 20
      %s181 = smul.addr %s180, 4
      %s182 = scalar_lea.vmem %s0, %s181
      %p183 = pneg %p36
      %p184 = pneg %p33
      %p185 = pneg %p57
      %p186 = pneg %p54
      %p187 = pneg %p78
      %p188 = pneg %p75
      %p189 = scmp.lt.s32.totalorder %s15, 1
      %s190 = scalar_select %p189, %s15, 1
      %s191 = smul.addr %s190, 8
      %s192 = smul.addr %s191, 4
      %s193 = scalar_lea.vmem %s3, %s192
      %p194 = pneg %p104
      %p195 = pneg %p101
      %p196 = pneg %p130
      %p197 = pneg %p127
      %p198 = scmp.lt.s32.totalorder %s15, 1
      %s199 = scalar_select %p198, %s15, 1
      %s200 = smul.addr %s199, 8
      %s201 = smul.addr %s200, 4
      %s202 = scalar_lea.vmem %s4, %s201
      %p203 = scmp.lt.s32.totalorder %s15, 1
      %s204 = scalar_select %p203, %s15, 1
      %s205 = smul.addr %s204, 20
      %s206 = smul.addr %s205, 4
      %s207 = scalar_lea.vmem %s0, %s206
      %p208 = scmp.lt.s32.totalorder %s15, 1
      %s209 = scalar_select %p208, %s15, 1
      %s210 = smul.addr %s209, 8
      %s211 = smul.addr %s210, 4
      %s212 = scalar_lea.vmem %s3, %s211
      %p213 = scmp.lt.s32.totalorder %s15, 1
      %s214 = scalar_select %p213, %s15, 1
      %s215 = smul.addr %s214, 8
      %s216 = smul.addr %s215, 4
      %s217 = scalar_lea.vmem %s4, %s216
      %v219 = vld [vmem:[%s207] sm:$0xf]
      %v220 = vld [vmem:[%s207 + $0x4] sm:$0x1]
      %v221 = vld [vmem:[%s207 + $0x8] sm:$0xf]
      %v222 = vld [vmem:[%s207 + $0xc] sm:$0x1]
      %v223 = vld [vmem:[%s207 + $0x10] sm:$0xf]
      %v224 = vld [vmem:[%s207 + $0x14] sm:$0x1]
      %v225 = vld [vmem:[%s207 + $0x18] sm:$0xf]
      %v226 = vld [vmem:[%s207 + $0x1c] sm:$0x1]
      %v227 = vld [vmem:[%s207 + $0x20] sm:$0xf]
      %v228 = vld [vmem:[%s207 + $0x24] sm:$0x1]
      %v229 = vld [vmem:[%s207 + $0x28] sm:$0xf]
      %v230 = vld [vmem:[%s207 + $0x2c] sm:$0x1]
      %v231 = vld [vmem:[%s207 + $0x30] sm:$0xf]
      %v232 = vld [vmem:[%s207 + $0x34] sm:$0x1]
      %v233 = vld [vmem:[%s207 + $0x38] sm:$0xf]
      %v234 = vld [vmem:[%s207 + $0x3c] sm:$0x1]
      %v235 = vld [vmem:[%s207 + $0x40] sm:$0xf]
      %v236 = vld [vmem:[%s207 + $0x44] sm:$0x1]
      %v237 = vld [vmem:[%s207 + $0x48] sm:$0xf]
      %v238 = vld [vmem:[%s207 + $0x4c] sm:$0x1]
      %v239 = vld [vmem:[%s1] sm:$0x3]
      %vm240 = vsmask.f32 3328
      %vm241 = vsmask.f32 7440
      %vm242 = vmor %vm240, %vm241
      %v244 = vshrl.u32 %v219, 16
      %v246 = vrot.slane %v244, 4
      %v247 = vshll.u32 %v219, 16
      %v249 = vrot.slane %v247, 5
      %v250 = vor.u32 %v246, %v249
      %v251 = vrot.slane %v250, 4
      %v253 = vshll.u32 %v220, 16
      %v255 = vrot.slane %v253, 5
      %v256 = vsel %vm242, %v251, %v255
      %v258 = vshrl.u32 %v221, 16
      %v260 = vrot.slane %v258, 4
      %v261 = vshll.u32 %v221, 16
      %v263 = vrot.slane %v261, 5
      %v264 = vor.u32 %v260, %v263
      %v265 = vrot.slane %v264, 4
      %v267 = vshll.u32 %v222, 16
      %v269 = vrot.slane %v267, 5
      %v270 = vsel %vm242, %v265, %v269
      %v272 = vshrl.u32 %v223, 16
      %v274 = vrot.slane %v272, 4
      %v275 = vshll.u32 %v223, 16
      %v277 = vrot.slane %v275, 5
      %v278 = vor.u32 %v274, %v277
      %v279 = vrot.slane %v278, 4
      %v281 = vshll.u32 %v224, 16
      %v283 = vrot.slane %v281, 5
      %v284 = vsel %vm242, %v279, %v283
      %v286 = vshrl.u32 %v225, 16
      %v288 = vrot.slane %v286, 4
      %v289 = vshll.u32 %v225, 16
      %v291 = vrot.slane %v289, 5
      %v292 = vor.u32 %v288, %v291
      %v293 = vrot.slane %v292, 4
      %v295 = vshll.u32 %v226, 16
      %v297 = vrot.slane %v295, 5
      %v298 = vsel %vm242, %v293, %v297
      %v300 = vshrl.u32 %v227, 16
      %v302 = vrot.slane %v300, 4
      %v303 = vshll.u32 %v227, 16
      %v305 = vrot.slane %v303, 5
      %v306 = vor.u32 %v302, %v305
      %v307 = vrot.slane %v306, 4
      %v309 = vshll.u32 %v228, 16
      %v311 = vrot.slane %v309, 5
      %v312 = vsel %vm242, %v307, %v311
      %v314 = vshrl.u32 %v229, 16
      %v316 = vrot.slane %v314, 4
      %v317 = vshll.u32 %v229, 16
      %v319 = vrot.slane %v317, 5
      %v320 = vor.u32 %v316, %v319
      %v321 = vrot.slane %v320, 4
      %v323 = vshll.u32 %v230, 16
      %v325 = vrot.slane %v323, 5
      %v326 = vsel %vm242, %v321, %v325
      %v328 = vshrl.u32 %v231, 16
      %v330 = vrot.slane %v328, 4
      %v331 = vshll.u32 %v231, 16
      %v333 = vrot.slane %v331, 5
      %v334 = vor.u32 %v330, %v333
      %v335 = vrot.slane %v334, 4
      %v337 = vshll.u32 %v232, 16
      %v339 = vrot.slane %v337, 5
      %v340 = vsel %vm242, %v335, %v339
      %v342 = vshrl.u32 %v233, 16
      %v344 = vrot.slane %v342, 4
      %v345 = vshll.u32 %v233, 16
      %v347 = vrot.slane %v345, 5
      %v348 = vor.u32 %v344, %v347
      %v349 = vrot.slane %v348, 4
      %v351 = vshll.u32 %v234, 16
      %v353 = vrot.slane %v351, 5
      %v354 = vsel %vm242, %v349, %v353
      %s355 = scalar_lea.vmem %s1, 2
      %v356 = vld [vmem:[%s355] sm:$0x3]
      %v357 = vunpack.c.l.b16 %v256
      %v358 = vunpack.c.l.b16 %v270
      %v359 = vunpack.c.l.b16 %v284
      %v360 = vunpack.c.l.b16 %v298
      %v361 = vunpack.c.l.b16 %v312
      %v362 = vunpack.c.l.b16 %v326
      %v363 = vunpack.c.l.b16 %v340
      %v364 = vunpack.c.l.b16 %v354
      %v365 = vpack.c.b16 %v358, %v357
      %v366 = vpack.c.b16 %v360, %v359
      %v367 = vpack.c.b16 %v362, %v361
      %v368 = vpack.c.b16 %v364, %v363
      %vm369 = vcmask 31744
      %v371 = vsel %vm369, %v365, 0
      %v374 = vsel %vm369, %v366, 0
      %v377 = vsel %vm369, %v367, 0
      %v380 = vsel %vm369, %v368, 0
      %vm382 = vcmask 1041408
      %v384 = vsel %vm382, %v356, 0
      %386 = vmatpush.bf16.msra.mxu0 0
      %387 = vmatpush.bf16.msra.mxu0 0
      %388 = vmatpush.bf16.msra.mxu0 0
      %389 = vmatpush.bf16.msra.mxu0 0
      %390 = vmatpush.bf16.msra.mxu0 0
      %391 = vmatpush.bf16.msra.mxu0 0
      %392 = vmatpush.bf16.msra.mxu0 0
      %393 = vmatpush.bf16.msra.mxu0 %v384
      %394 = vmatmul.bf16.gmra.mxu0 %v371
      %v395 = vpop.f32.mrf.mxu0
      %v396 = vadd.f32 0.0, %v395
      %v397 = vpop.f32.mrf.mxu0
      %v398 = vadd.f32 0.0, %v397
      %399 = vmatmul.bf16.gmra.mxu0 %v374
      %v400 = vpop.f32.mrf.mxu0
      %v401 = vadd.f32 0.0, %v400
      %v402 = vpop.f32.mrf.mxu0
      %v403 = vadd.f32 0.0, %v402
      %404 = vmatmul.bf16.gmra.mxu0 %v377
      %v405 = vpop.f32.mrf.mxu0
      %v406 = vadd.f32 0.0, %v405
      %v407 = vpop.f32.mrf.mxu0
      %v408 = vadd.f32 0.0, %v407
      %409 = vmatmul.bf16.gmra.mxu0 %v380
      %v410 = vpop.f32.mrf.mxu0
      %v411 = vadd.f32 0.0, %v410
      %v412 = vpop.f32.mrf.mxu0
      %v413 = vadd.f32 0.0, %v412
      %414 = vdwg.mxu0
      %v423 = vunpack.c.l.b16 %v219
      %v424 = vunpack.c.l.b16 %v221
      %v425 = vunpack.c.l.b16 %v223
      %v426 = vunpack.c.l.b16 %v225
      %v427 = vunpack.c.l.b16 %v227
      %v428 = vunpack.c.l.b16 %v229
      %v429 = vunpack.c.l.b16 %v231
      %v430 = vunpack.c.l.b16 %v233
      %v431 = vpack.c.b16 %v424, %v423
      %v432 = vpack.c.b16 %v426, %v425
      %v433 = vpack.c.b16 %v428, %v427
      %v434 = vpack.c.b16 %v430, %v429
      %v436 = vsel %vm369, %v431, 0
      %v439 = vsel %vm369, %v432, 0
      %v442 = vsel %vm369, %v433, 0
      %v445 = vsel %vm369, %v434, 0
      %v448 = vsel %vm382, %v239, 0
      %450 = vmatpush.bf16.msra.mxu0 0
      %451 = vmatpush.bf16.msra.mxu0 0
      %452 = vmatpush.bf16.msra.mxu0 0
      %453 = vmatpush.bf16.msra.mxu0 0
      %454 = vmatpush.bf16.msra.mxu0 0
      %455 = vmatpush.bf16.msra.mxu0 0
      %456 = vmatpush.bf16.msra.mxu0 0
      %457 = vmatpush.bf16.msra.mxu0 %v448
      %458 = vmatmul.bf16.gmra.mxu0 %v436
      %v459 = vpop.f32.mrf.mxu0
      %v460 = vadd.f32 %v396, %v459
      %v461 = vpop.f32.mrf.mxu0
      %v462 = vadd.f32 %v398, %v461
      %463 = vmatmul.bf16.gmra.mxu0 %v439
      %v464 = vpop.f32.mrf.mxu0
      %v465 = vadd.f32 %v401, %v464
      %v466 = vpop.f32.mrf.mxu0
      %v467 = vadd.f32 %v403, %v466
      %468 = vmatmul.bf16.gmra.mxu0 %v442
      %v469 = vpop.f32.mrf.mxu0
      %v470 = vadd.f32 %v406, %v469
      %v471 = vpop.f32.mrf.mxu0
      %v472 = vadd.f32 %v408, %v471
      %473 = vmatmul.bf16.gmra.mxu0 %v445
      %v474 = vpop.f32.mrf.mxu0
      %v475 = vadd.f32 %v411, %v474
      %v476 = vpop.f32.mrf.mxu0
      %v477 = vadd.f32 %v413, %v476
      %478 = vdwg.mxu0
      %vm487 = vcmask 1042432
      %vm488 = vcmask 1046532
      %vm489 = vmor %vm487, %vm488
      %v490 = vrot.slane %v219, 5
      %v491 = vrot.slane %v490, 4
      %v492 = vrot.slane %v220, 5
      %v493 = vsel %vm489, %v491, %v492
      %v494 = vrot.slane %v221, 5
      %v495 = vrot.slane %v494, 4
      %v496 = vrot.slane %v222, 5
      %v497 = vsel %vm489, %v495, %v496
      %v498 = vrot.slane %v223, 5
      %v499 = vrot.slane %v498, 4
      %v500 = vrot.slane %v224, 5
      %v501 = vsel %vm489, %v499, %v500
      %v502 = vrot.slane %v225, 5
      %v503 = vrot.slane %v502, 4
      %v504 = vrot.slane %v226, 5
      %v505 = vsel %vm489, %v503, %v504
      %v506 = vrot.slane %v227, 5
      %v507 = vrot.slane %v506, 4
      %v508 = vrot.slane %v228, 5
      %v509 = vsel %vm489, %v507, %v508
      %v510 = vrot.slane %v229, 5
      %v511 = vrot.slane %v510, 4
      %v512 = vrot.slane %v230, 5
      %v513 = vsel %vm489, %v511, %v512
      %v514 = vrot.slane %v231, 5
      %v515 = vrot.slane %v514, 4
      %v516 = vrot.slane %v232, 5
      %v517 = vsel %vm489, %v515, %v516
      %v518 = vrot.slane %v233, 5
      %v519 = vrot.slane %v518, 4
      %v520 = vrot.slane %v234, 5
      %v521 = vsel %vm489, %v519, %v520
      %s522 = scalar_lea.vmem %s1, 4
      %v523 = vld [vmem:[%s522] sm:$0x3]
      %v524 = vunpack.c.l.b16 %v493
      %v525 = vunpack.c.l.b16 %v497
      %v526 = vunpack.c.l.b16 %v501
      %v527 = vunpack.c.l.b16 %v505
      %v528 = vunpack.c.l.b16 %v509
      %v529 = vunpack.c.l.b16 %v513
      %v530 = vunpack.c.l.b16 %v517
      %v531 = vunpack.c.l.b16 %v521
      %v532 = vpack.c.b16 %v525, %v524
      %v533 = vpack.c.b16 %v527, %v526
      %v534 = vpack.c.b16 %v529, %v528
      %v535 = vpack.c.b16 %v531, %v530
      %v537 = vsel %vm369, %v532, 0
      %v540 = vsel %vm369, %v533, 0
      %v543 = vsel %vm369, %v534, 0
      %v546 = vsel %vm369, %v535, 0
      %v549 = vsel %vm382, %v523, 0
      %551 = vmatpush.bf16.msra.mxu0 0
      %552 = vmatpush.bf16.msra.mxu0 0
      %553 = vmatpush.bf16.msra.mxu0 0
      %554 = vmatpush.bf16.msra.mxu0 0
      %555 = vmatpush.bf16.msra.mxu0 0
      %556 = vmatpush.bf16.msra.mxu0 0
      %557 = vmatpush.bf16.msra.mxu0 0
      %558 = vmatpush.bf16.msra.mxu0 %v549
      %559 = vmatmul.bf16.gmra.mxu0 %v537
      %v560 = vpop.f32.mrf.mxu0
      %v561 = vadd.f32 0.0, %v560
      %v562 = vpop.f32.mrf.mxu0
      %v563 = vadd.f32 0.0, %v562
      %564 = vmatmul.bf16.gmra.mxu0 %v540
      %v565 = vpop.f32.mrf.mxu0
      %v566 = vadd.f32 0.0, %v565
      %v567 = vpop.f32.mrf.mxu0
      %v568 = vadd.f32 0.0, %v567
      %569 = vmatmul.bf16.gmra.mxu0 %v543
      %v570 = vpop.f32.mrf.mxu0
      %v571 = vadd.f32 0.0, %v570
      %v572 = vpop.f32.mrf.mxu0
      %v573 = vadd.f32 0.0, %v572
      %574 = vmatmul.bf16.gmra.mxu0 %v546
      %v575 = vpop.f32.mrf.mxu0
      %v576 = vadd.f32 0.0, %v575
      %v577 = vpop.f32.mrf.mxu0
      %v578 = vadd.f32 0.0, %v577
      %579 = vdwg.mxu0
      %v580 = vadd.f32 %v460, %v561
      %v581 = vadd.f32 %v462, %v563
      %v582 = vadd.f32 %v465, %v566
      %v583 = vadd.f32 %v467, %v568
      %v584 = vadd.f32 %v470, %v571
      %v585 = vadd.f32 %v472, %v573
      %v586 = vadd.f32 %v475, %v576
      %v587 = vadd.f32 %v477, %v578
      %s588 = scalar_lea.vmem %s1, 6
      %v589 = vld [vmem:[%s588] sm:$0x3]
      %v591 = vunpack.c.l.b16 %v235
      %v592 = vpack.c.b16 %v425, %v424
      %v593 = vpack.c.b16 %v427, %v426
      %v594 = vpack.c.b16 %v429, %v428
      %v595 = vpack.c.b16 %v591, %v430
      %v597 = vsel %vm369, %v592, 0
      %v600 = vsel %vm369, %v593, 0
      %v603 = vsel %vm369, %v594, 0
      %v606 = vsel %vm369, %v595, 0
      %v609 = vsel %vm382, %v589, 0
      %611 = vmatpush.bf16.msra.mxu0 0
      %612 = vmatpush.bf16.msra.mxu0 0
      %613 = vmatpush.bf16.msra.mxu0 0
      %614 = vmatpush.bf16.msra.mxu0 0
      %615 = vmatpush.bf16.msra.mxu0 0
      %616 = vmatpush.bf16.msra.mxu0 0
      %617 = vmatpush.bf16.msra.mxu0 0
      %618 = vmatpush.bf16.msra.mxu0 %v609
      %619 = vmatmul.bf16.gmra.mxu0 %v597
      %v620 = vpop.f32.mrf.mxu0
      %v621 = vadd.f32 0.0, %v620
      %v622 = vpop.f32.mrf.mxu0
      %v623 = vadd.f32 0.0, %v622
      %624 = vmatmul.bf16.gmra.mxu0 %v600
      %v625 = vpop.f32.mrf.mxu0
      %v626 = vadd.f32 0.0, %v625
      %v627 = vpop.f32.mrf.mxu0
      %v628 = vadd.f32 0.0, %v627
      %629 = vmatmul.bf16.gmra.mxu0 %v603
      %v630 = vpop.f32.mrf.mxu0
      %v631 = vadd.f32 0.0, %v630
      %v632 = vpop.f32.mrf.mxu0
      %v633 = vadd.f32 0.0, %v632
      %634 = vmatmul.bf16.gmra.mxu0 %v606
      %v635 = vpop.f32.mrf.mxu0
      %v636 = vadd.f32 0.0, %v635
      %v637 = vpop.f32.mrf.mxu0
      %v638 = vadd.f32 0.0, %v637
      %639 = vdwg.mxu0
      %v640 = vadd.f32 %v580, %v621
      %v641 = vadd.f32 %v581, %v623
      %v642 = vadd.f32 %v582, %v626
      %v643 = vadd.f32 %v583, %v628
      %v644 = vadd.f32 %v584, %v631
      %v645 = vadd.f32 %v585, %v633
      %v646 = vadd.f32 %v586, %v636
      %v647 = vadd.f32 %v587, %v638
      %v649 = vshrl.u32 %v235, 16
      %v651 = vrot.slane %v649, 4
      %v652 = vshll.u32 %v235, 16
      %v654 = vrot.slane %v652, 5
      %v655 = vor.u32 %v651, %v654
      %v656 = vrot.slane %v655, 4
      %v658 = vshll.u32 %v236, 16
      %v660 = vrot.slane %v658, 5
      %v661 = vsel %vm242, %v656, %v660
      %s662 = scalar_lea.vmem %s1, 8
      %v663 = vld [vmem:[%s662] sm:$0x3]
      %v664 = vunpack.c.l.b16 %v661
      %v665 = vpack.c.b16 %v359, %v358
      %v666 = vpack.c.b16 %v361, %v360
      %v667 = vpack.c.b16 %v363, %v362
      %v668 = vpack.c.b16 %v664, %v364
      %v670 = vsel %vm369, %v665, 0
      %v673 = vsel %vm369, %v666, 0
      %v676 = vsel %vm369, %v667, 0
      %v679 = vsel %vm369, %v668, 0
      %v682 = vsel %vm382, %v663, 0
      %684 = vmatpush.bf16.msra.mxu0 0
      %685 = vmatpush.bf16.msra.mxu0 0
      %686 = vmatpush.bf16.msra.mxu0 0
      %687 = vmatpush.bf16.msra.mxu0 0
      %688 = vmatpush.bf16.msra.mxu0 0
      %689 = vmatpush.bf16.msra.mxu0 0
      %690 = vmatpush.bf16.msra.mxu0 0
      %691 = vmatpush.bf16.msra.mxu0 %v682
      %692 = vmatmul.bf16.gmra.mxu0 %v670
      %v693 = vpop.f32.mrf.mxu0
      %v694 = vadd.f32 0.0, %v693
      %v695 = vpop.f32.mrf.mxu0
      %v696 = vadd.f32 0.0, %v695
      %697 = vmatmul.bf16.gmra.mxu0 %v673
      %v698 = vpop.f32.mrf.mxu0
      %v699 = vadd.f32 0.0, %v698
      %v700 = vpop.f32.mrf.mxu0
      %v701 = vadd.f32 0.0, %v700
      %702 = vmatmul.bf16.gmra.mxu0 %v676
      %v703 = vpop.f32.mrf.mxu0
      %v704 = vadd.f32 0.0, %v703
      %v705 = vpop.f32.mrf.mxu0
      %v706 = vadd.f32 0.0, %v705
      %707 = vmatmul.bf16.gmra.mxu0 %v679
      %v708 = vpop.f32.mrf.mxu0
      %v709 = vadd.f32 0.0, %v708
      %v710 = vpop.f32.mrf.mxu0
      %v711 = vadd.f32 0.0, %v710
      %712 = vdwg.mxu0
      %v713 = vadd.f32 %v640, %v694
      %v714 = vadd.f32 %v641, %v696
      %v715 = vadd.f32 %v642, %v699
      %v716 = vadd.f32 %v643, %v701
      %v717 = vadd.f32 %v644, %v704
      %v718 = vadd.f32 %v645, %v706
      %v719 = vadd.f32 %v646, %v709
      %v720 = vadd.f32 %v647, %v711
      %v722 = vrot.slane %v235, 5
      %v723 = vrot.slane %v722, 4
      %v724 = vrot.slane %v236, 5
      %v725 = vsel %vm489, %v723, %v724
      %s726 = scalar_lea.vmem %s1, 10
      %v727 = vld [vmem:[%s726] sm:$0x3]
      %v728 = vunpack.c.l.b16 %v725
      %v729 = vpack.c.b16 %v526, %v525
      %v730 = vpack.c.b16 %v528, %v527
      %v731 = vpack.c.b16 %v530, %v529
      %v732 = vpack.c.b16 %v728, %v531
      %v734 = vsel %vm369, %v729, 0
      %v737 = vsel %vm369, %v730, 0
      %v740 = vsel %vm369, %v731, 0
      %v743 = vsel %vm369, %v732, 0
      %v746 = vsel %vm382, %v727, 0
      %748 = vmatpush.bf16.msra.mxu0 0
      %749 = vmatpush.bf16.msra.mxu0 0
      %750 = vmatpush.bf16.msra.mxu0 0
      %751 = vmatpush.bf16.msra.mxu0 0
      %752 = vmatpush.bf16.msra.mxu0 0
      %753 = vmatpush.bf16.msra.mxu0 0
      %754 = vmatpush.bf16.msra.mxu0 0
      %755 = vmatpush.bf16.msra.mxu0 %v746
      %756 = vmatmul.bf16.gmra.mxu0 %v734
      %v757 = vpop.f32.mrf.mxu0
      %v758 = vadd.f32 0.0, %v757
      %v759 = vpop.f32.mrf.mxu0
      %v760 = vadd.f32 0.0, %v759
      %761 = vmatmul.bf16.gmra.mxu0 %v737
      %v762 = vpop.f32.mrf.mxu0
      %v763 = vadd.f32 0.0, %v762
      %v764 = vpop.f32.mrf.mxu0
      %v765 = vadd.f32 0.0, %v764
      %766 = vmatmul.bf16.gmra.mxu0 %v740
      %v767 = vpop.f32.mrf.mxu0
      %v768 = vadd.f32 0.0, %v767
      %v769 = vpop.f32.mrf.mxu0
      %v770 = vadd.f32 0.0, %v769
      %771 = vmatmul.bf16.gmra.mxu0 %v743
      %v772 = vpop.f32.mrf.mxu0
      %v773 = vadd.f32 0.0, %v772
      %v774 = vpop.f32.mrf.mxu0
      %v775 = vadd.f32 0.0, %v774
      %776 = vdwg.mxu0
      %v777 = vadd.f32 %v713, %v758
      %v778 = vadd.f32 %v714, %v760
      %v779 = vadd.f32 %v715, %v763
      %v780 = vadd.f32 %v716, %v765
      %v781 = vadd.f32 %v717, %v768
      %v782 = vadd.f32 %v718, %v770
      %v783 = vadd.f32 %v719, %v773
      %v784 = vadd.f32 %v720, %v775
      %s785 = scalar_lea.vmem %s1, 12
      %v786 = vld [vmem:[%s785] sm:$0x3]
      %v788 = vunpack.c.l.b16 %v237
      %v789 = vpack.c.b16 %v788, %v591
      %v791 = vsel %vm369, %v789, 0
      %v794 = vsel %vm382, %v786, 0
      %796 = vmatpush.bf16.msra.mxu0 0
      %797 = vmatpush.bf16.msra.mxu0 0
      %798 = vmatpush.bf16.msra.mxu0 0
      %799 = vmatpush.bf16.msra.mxu0 0
      %800 = vmatpush.bf16.msra.mxu0 0
      %801 = vmatpush.bf16.msra.mxu0 0
      %802 = vmatpush.bf16.msra.mxu0 0
      %803 = vmatpush.bf16.msra.mxu0 %v794
      %804 = vmatmul.bf16.gmra.mxu0 %v439
      %v805 = vpop.f32.mrf.mxu0
      %v806 = vadd.f32 0.0, %v805
      %v807 = vpop.f32.mrf.mxu0
      %v808 = vadd.f32 0.0, %v807
      %809 = vmatmul.bf16.gmra.mxu0 %v442
      %v810 = vpop.f32.mrf.mxu0
      %v811 = vadd.f32 0.0, %v810
      %v812 = vpop.f32.mrf.mxu0
      %v813 = vadd.f32 0.0, %v812
      %814 = vmatmul.bf16.gmra.mxu0 %v445
      %v815 = vpop.f32.mrf.mxu0
      %v816 = vadd.f32 0.0, %v815
      %v817 = vpop.f32.mrf.mxu0
      %v818 = vadd.f32 0.0, %v817
      %819 = vmatmul.bf16.gmra.mxu0 %v791
      %v820 = vpop.f32.mrf.mxu0
      %v821 = vadd.f32 0.0, %v820
      %v822 = vpop.f32.mrf.mxu0
      %v823 = vadd.f32 0.0, %v822
      %824 = vdwg.mxu0
      %v825 = vadd.f32 %v777, %v806
      %v826 = vadd.f32 %v778, %v808
      %v827 = vadd.f32 %v779, %v811
      %v828 = vadd.f32 %v780, %v813
      %v829 = vadd.f32 %v781, %v816
      %v830 = vadd.f32 %v782, %v818
      %v831 = vadd.f32 %v783, %v821
      %v832 = vadd.f32 %v784, %v823
      %v834 = vshrl.u32 %v237, 16
      %v836 = vrot.slane %v834, 4
      %v837 = vshll.u32 %v237, 16
      %v839 = vrot.slane %v837, 5
      %v840 = vor.u32 %v836, %v839
      %v841 = vrot.slane %v840, 4
      %v843 = vshll.u32 %v238, 16
      %v845 = vrot.slane %v843, 5
      %v846 = vsel %vm242, %v841, %v845
      %s847 = scalar_lea.vmem %s1, 14
      %v848 = vld [vmem:[%s847] sm:$0x3]
      %v849 = vunpack.c.l.b16 %v846
      %v850 = vpack.c.b16 %v849, %v664
      %v852 = vsel %vm369, %v850, 0
      %v855 = vsel %vm382, %v848, 0
      %857 = vmatpush.bf16.msra.mxu0 0
      %858 = vmatpush.bf16.msra.mxu0 0
      %859 = vmatpush.bf16.msra.mxu0 0
      %860 = vmatpush.bf16.msra.mxu0 0
      %861 = vmatpush.bf16.msra.mxu0 0
      %862 = vmatpush.bf16.msra.mxu0 0
      %863 = vmatpush.bf16.msra.mxu0 0
      %864 = vmatpush.bf16.msra.mxu0 %v855
      %865 = vmatmul.bf16.gmra.mxu0 %v374
      %v866 = vpop.f32.mrf.mxu0
      %v867 = vadd.f32 0.0, %v866
      %v868 = vpop.f32.mrf.mxu0
      %v869 = vadd.f32 0.0, %v868
      %870 = vmatmul.bf16.gmra.mxu0 %v377
      %v871 = vpop.f32.mrf.mxu0
      %v872 = vadd.f32 0.0, %v871
      %v873 = vpop.f32.mrf.mxu0
      %v874 = vadd.f32 0.0, %v873
      %875 = vmatmul.bf16.gmra.mxu0 %v380
      %v876 = vpop.f32.mrf.mxu0
      %v877 = vadd.f32 0.0, %v876
      %v878 = vpop.f32.mrf.mxu0
      %v879 = vadd.f32 0.0, %v878
      %880 = vmatmul.bf16.gmra.mxu0 %v852
      %v881 = vpop.f32.mrf.mxu0
      %v882 = vadd.f32 0.0, %v881
      %v883 = vpop.f32.mrf.mxu0
      %v884 = vadd.f32 0.0, %v883
      %885 = vdwg.mxu0
      %v886 = vadd.f32 %v825, %v867
      %v887 = vadd.f32 %v826, %v869
      %v888 = vadd.f32 %v827, %v872
      %v889 = vadd.f32 %v828, %v874
      %v890 = vadd.f32 %v829, %v877
      %v891 = vadd.f32 %v830, %v879
      %v892 = vadd.f32 %v831, %v882
      %v893 = vadd.f32 %v832, %v884
      %v895 = vrot.slane %v237, 5
      %v896 = vrot.slane %v895, 4
      %v897 = vrot.slane %v238, 5
      %v898 = vsel %vm489, %v896, %v897
      %s899 = scalar_lea.vmem %s1, 16
      %v900 = vld [vmem:[%s899] sm:$0x3]
      %v901 = vunpack.c.l.b16 %v898
      %v902 = vpack.c.b16 %v901, %v728
      %v904 = vsel %vm369, %v902, 0
      %v907 = vsel %vm382, %v900, 0
      %909 = vmatpush.bf16.msra.mxu0 0
      %910 = vmatpush.bf16.msra.mxu0 0
      %911 = vmatpush.bf16.msra.mxu0 0
      %912 = vmatpush.bf16.msra.mxu0 0
      %913 = vmatpush.bf16.msra.mxu0 0
      %914 = vmatpush.bf16.msra.mxu0 0
      %915 = vmatpush.bf16.msra.mxu0 0
      %916 = vmatpush.bf16.msra.mxu0 %v907
      %917 = vmatmul.bf16.gmra.mxu0 %v540
      %v918 = vpop.f32.mrf.mxu0
      %v919 = vadd.f32 0.0, %v918
      %v920 = vpop.f32.mrf.mxu0
      %v921 = vadd.f32 0.0, %v920
      %922 = vmatmul.bf16.gmra.mxu0 %v543
      %v923 = vpop.f32.mrf.mxu0
      %v924 = vadd.f32 0.0, %v923
      %v925 = vpop.f32.mrf.mxu0
      %v926 = vadd.f32 0.0, %v925
      %927 = vmatmul.bf16.gmra.mxu0 %v546
      %v928 = vpop.f32.mrf.mxu0
      %v929 = vadd.f32 0.0, %v928
      %v930 = vpop.f32.mrf.mxu0
      %v931 = vadd.f32 0.0, %v930
      %932 = vmatmul.bf16.gmra.mxu0 %v904
      %v933 = vpop.f32.mrf.mxu0
      %v934 = vadd.f32 0.0, %v933
      %v935 = vpop.f32.mrf.mxu0
      %v936 = vadd.f32 0.0, %v935
      %937 = vdwg.mxu0
      %v938 = vadd.f32 %v886, %v919
      %v939 = vadd.f32 %v887, %v921
      %v940 = vadd.f32 %v888, %v924
      %v941 = vadd.f32 %v889, %v926
      %v942 = vadd.f32 %v890, %v929
      %v943 = vadd.f32 %v891, %v931
      %v944 = vadd.f32 %v892, %v934
      %v945 = vadd.f32 %v893, %v936
      %v946 = vld [vmem:[%s2] sm:$0x1]
      %v948 = vperm.slane %v946, 0
      %v950 = vadd.f32 %v938, %v948
      %v951 = vadd.f32 %v939, %v948
      %v952 = vadd.f32 %v940, %v948
      %v953 = vadd.f32 %v941, %v948
      %v954 = vadd.f32 %v942, %v948
      %v955 = vadd.f32 %v943, %v948
      %v956 = vadd.f32 %v944, %v948
      %v957 = vadd.f32 %v945, %v948
      %v958 = vmin.f32 %v950, 20.0
      %v959 = vmin.f32 %v951, 20.0
      %v960 = vmin.f32 %v952, 20.0
      %v961 = vmin.f32 %v953, 20.0
      %v962 = vmin.f32 %v954, 20.0
      %v963 = vmin.f32 %v955, 20.0
      %v964 = vmin.f32 %v956, 20.0
      %v965 = vmin.f32 %v957, 20.0
      %v966 = vmul.f32 %v958, 1.442695
      %v967 = vpow.pop %v966
      %v968 = vmul.f32 %v959, 1.442695
      %v969 = vpow.pop %v968
      %v970 = vmul.f32 %v960, 1.442695
      %v971 = vpow.pop %v970
      %v972 = vmul.f32 %v961, 1.442695
      %v973 = vpow.pop %v972
      %v974 = vmul.f32 %v962, 1.442695
      %v975 = vpow.pop %v974
      %v976 = vmul.f32 %v963, 1.442695
      %v977 = vpow.pop %v976
      %v978 = vmul.f32 %v964, 1.442695
      %v979 = vpow.pop %v978
      %v980 = vmul.f32 %v965, 1.442695
      %v981 = vpow.pop %v980
      %v982 = vadd.f32 %v967, 2.0
      %v983 = vadd.f32 %v969, 2.0
      %v984 = vadd.f32 %v971, 2.0
      %v985 = vadd.f32 %v973, 2.0
      %v986 = vadd.f32 %v975, 2.0
      %v987 = vadd.f32 %v977, 2.0
      %v988 = vadd.f32 %v979, 2.0
      %v989 = vadd.f32 %v981, 2.0
      %v990 = vmul.f32 %v967, %v982
      %v991 = vmul.f32 %v969, %v983
      %v992 = vmul.f32 %v971, %v984
      %v993 = vmul.f32 %v973, %v985
      %v994 = vmul.f32 %v975, %v986
      %v995 = vmul.f32 %v977, %v987
      %v996 = vmul.f32 %v979, %v988
      %v997 = vmul.f32 %v981, %v989
      %vm998 = vcmp.gt.f32.partialorder %v950, 20.0
      %vm999 = vcmp.gt.f32.partialorder %v951, 20.0
      %vm1000 = vcmp.gt.f32.partialorder %v952, 20.0
      %vm1001 = vcmp.gt.f32.partialorder %v953, 20.0
      %vm1002 = vcmp.gt.f32.partialorder %v954, 20.0
      %vm1003 = vcmp.gt.f32.partialorder %v955, 20.0
      %vm1004 = vcmp.gt.f32.partialorder %v956, 20.0
      %vm1005 = vcmp.gt.f32.partialorder %v957, 20.0
      %v1006 = vmul.f32 %v950, %v990
      %v1007 = vmul.f32 %v951, %v991
      %v1008 = vmul.f32 %v952, %v992
      %v1009 = vmul.f32 %v953, %v993
      %v1010 = vmul.f32 %v954, %v994
      %v1011 = vmul.f32 %v955, %v995
      %v1012 = vmul.f32 %v956, %v996
      %v1013 = vmul.f32 %v957, %v997
      %v1014 = vadd.f32 %v990, 2.0
      %v1015 = vadd.f32 %v991, 2.0
      %v1016 = vadd.f32 %v992, 2.0
      %v1017 = vadd.f32 %v993, 2.0
      %v1018 = vadd.f32 %v994, 2.0
      %v1019 = vadd.f32 %v995, 2.0
      %v1020 = vadd.f32 %v996, 2.0
      %v1021 = vadd.f32 %v997, 2.0
      %v1022 = vrcp.pop %v1014
      %v1023 = vrcp.pop %v1015
      %v1024 = vrcp.pop %v1016
      %v1025 = vrcp.pop %v1017
      %v1026 = vrcp.pop %v1018
      %v1027 = vrcp.pop %v1019
      %v1028 = vrcp.pop %v1020
      %v1029 = vrcp.pop %v1021
      %v1030 = vmul.f32 %v1006, %v1022
      %v1031 = vmul.f32 %v1007, %v1023
      %v1032 = vmul.f32 %v1008, %v1024
      %v1033 = vmul.f32 %v1009, %v1025
      %v1034 = vmul.f32 %v1010, %v1026
      %v1035 = vmul.f32 %v1011, %v1027
      %v1036 = vmul.f32 %v1012, %v1028
      %v1037 = vmul.f32 %v1013, %v1029
      %v1038 = vsel %vm998, %v950, %v1030
      %v1039 = vsel %vm999, %v951, %v1031
      %v1040 = vsel %vm1000, %v952, %v1032
      %v1041 = vsel %vm1001, %v953, %v1033
      %v1042 = vsel %vm1002, %v954, %v1034
      %v1043 = vsel %vm1003, %v955, %v1035
      %v1044 = vsel %vm1004, %v956, %v1036
      %v1045 = vsel %vm1005, %v957, %v1037
      %v1046 = vld [vmem:[%s212] sm:$0xf]
      %v1047 = vld [vmem:[%s212 + $0x4] sm:$0xf]
      %v1048 = vld [vmem:[%s212 + $0x8] sm:$0xf]
      %v1049 = vld [vmem:[%s212 + $0xc] sm:$0xf]
      %v1050 = vld [vmem:[%s212 + $0x10] sm:$0xf]
      %v1051 = vld [vmem:[%s212 + $0x14] sm:$0xf]
      %v1052 = vld [vmem:[%s212 + $0x18] sm:$0xf]
      %v1053 = vld [vmem:[%s212 + $0x1c] sm:$0xf]
      %v1054 = vunpack.c.l.bf16 %v1046
      %v1055 = vunpack.c.l.bf16 %v1047
      %v1056 = vunpack.c.l.bf16 %v1048
      %v1057 = vunpack.c.l.bf16 %v1049
      %v1058 = vunpack.c.l.bf16 %v1050
      %v1059 = vunpack.c.l.bf16 %v1051
      %v1060 = vunpack.c.l.bf16 %v1052
      %v1061 = vunpack.c.l.bf16 %v1053
      %v1062 = vadd.f32 %v1054, %v1038
      %v1063 = vadd.f32 %v1055, %v1039
      %v1064 = vadd.f32 %v1056, %v1040
      %v1065 = vadd.f32 %v1057, %v1041
      %v1066 = vadd.f32 %v1058, %v1042
      %v1067 = vadd.f32 %v1059, %v1043
      %v1068 = vadd.f32 %v1060, %v1044
      %v1069 = vadd.f32 %v1061, %v1045
      %v1070 = vpack.c.bf16 %v1062, %v1062
      %v1071 = vpack.c.bf16 %v1063, %v1063
      %v1072 = vpack.c.bf16 %v1064, %v1064
      %v1073 = vpack.c.bf16 %v1065, %v1065
      %v1074 = vpack.c.bf16 %v1066, %v1066
      %v1075 = vpack.c.bf16 %v1067, %v1067
      %v1076 = vpack.c.bf16 %v1068, %v1068
      %v1077 = vpack.c.bf16 %v1069, %v1069
      %vm1078 = vcmask 60416
      %1079 = vst.msk [vmem:[%s217] sm:$0xf] %vm1078, %v1070
      %1080 = vst.msk [vmem:[%s217 + $0x4] sm:$0xf] %vm1078, %v1071
      %1081 = vst.msk [vmem:[%s217 + $0x8] sm:$0xf] %vm1078, %v1072
      %1082 = vst.msk [vmem:[%s217 + $0xc] sm:$0xf] %vm1078, %v1073
      %1083 = vst.msk [vmem:[%s217 + $0x10] sm:$0xf] %vm1078, %v1074
      %1084 = vst.msk [vmem:[%s217 + $0x14] sm:$0xf] %vm1078, %v1075
      %1085 = vst.msk [vmem:[%s217 + $0x18] sm:$0xf] %vm1078, %v1076
      %1086 = vst.msk [vmem:[%s217 + $0x1c] sm:$0xf] %vm1078, %v1077
      %p1087 = scmp.lt.s32.totalorder %s15, 1
      %s1088 = scalar_select %p1087, %s15, 1
      %s1089 = smul.addr %s1088, 8
      %s1090 = smul.addr %s1089, 4
      %s1091 = scalar_lea.vmem %s4, %s1090
      // Predicated region
      $region37: #{csp_block_forward.9} parent=35 // pred_check
        %p1092 = pneg %p127
      $region38: #{csp_block_forward.9} parent=35 // pred_check_branch
        %1094 = sbr.rel (%p1092) target = $region40
      $region39: #{csp_block_forward.9} parent=35 // pred_region
        _
      $region40: #{csp_block_forward.9} parent=35 // pred_fallthru
        _
    $region36: #{csp_block_forward.9} parent=5 // pred_fallthru
      _
    %p1095 = scmp.le.s32.totalorder 2, %s10
    // Predicated region
    $region41: #{csp_block_forward.9} parent=5 // pred_check
      %p1096 = pneg %p1095
    $region42: #{csp_block_forward.9} parent=5 // pred_check_branch
      %1098 = sbr.rel (%p1096) target = $region44
    $region43: #{csp_block_forward.9} parent=5 // pred_region
      %s1099 = ssub.s32 %s10, 2
      // Predicated region
      $region45: #{csp_block_forward.9} parent=43 // pred_check
        %p1100 = pneg %p133
      $region46: #{csp_block_forward.9} parent=43 // pred_check_branch
        %1102 = sbr.rel (%p1100) target = $region48
      $region47: #{csp_block_forward.9} parent=43 // pred_region
        %p1103 = scmp.lt.s32.totalorder %s16, 1
        %s1104 = scalar_select %p1103, %s16, 1
        %s1105 = smul.addr %s1104, 8
        %s1106 = smul.addr %s1105, 4
        %s1107 = scalar_lea.vmem %s4, %s1106
      $region48: #{csp_block_forward.9} parent=43 // pred_fallthru
        _
    $region44: #{csp_block_forward.9} parent=5 // pred_fallthru
      _
  $region6: #{csp_block_forward.9} parent=0 // loop_footer
    %s14 = sadd.s32 1, %s10
  $region7: #{csp_block_forward.9} parent=0 // loop_footer_branch
    %9 = sbr.rel target = $region3
  $region8: #{csp_block_forward.9} parent=0 // loop_exit
    _

// kernel: csp_block_forward.11
$region0: #{csp_block_forward.11}
  #allocation0 [shape = 'u32[]', space=smem, size = 0x4, offset = 0x4, fixed_abs, tag = 'smem constant byte address 0x4 - core index']
  #allocation1 [shape = 'u32[72,128]{1,0:T(1,128)}', space=vmem, size = 0x9000, scoped, tag = 'internal scratch']
  %s0 = inlined_call_operand.vmem [shape: bf16[128,8], index: 0, kind: input, shape index: {}]
  %s1 = inlined_call_operand.vmem [shape: bf16[128,8], index: 1, kind: input, shape index: {}]
  %s2 = inlined_call_operand.vmem [shape: bf16[8,8], index: 2, kind: input, shape index: {}]
  %s3 = inlined_call_operand.vmem [shape: bf16[8,8], index: 3, kind: input, shape index: {}]
  %s4 = inlined_call_operand.vmem [shape: f32[1,8], index: 4, kind: input, shape index: {}]
  %s5 = inlined_call_operand.vmem [shape: bf16[128,8], index: 5, kind: output, shape index: {}]
  %s6 = sld [smem:[#allocation0]]
  $region30: #{csp_block_forward.11} parent=0
    _
  %s8 = ssub.s32 1, %s6
  %s9 = scalar_select 0, %s8, %s6
  // Predicated region
  $region2: #{csp_block_forward.11} parent=0 // pred_check
    _
  $region3: #{csp_block_forward.11} parent=0 // pred_check_branch
    %11 = sbr.rel (0) target = $region5
  $region4: #{csp_block_forward.11} parent=0 // pred_region
    _
  $region5: #{csp_block_forward.11} parent=0 // pred_fallthru
    _
  // Predicated region
  $region6: #{csp_block_forward.11} parent=0 // pred_check
    _
  $region7: #{csp_block_forward.11} parent=0 // pred_check_branch
    %13 = sbr.rel (0) target = $region9
  $region8: #{csp_block_forward.11} parent=0 // pred_region
    _
  $region9: #{csp_block_forward.11} parent=0 // pred_fallthru
    _
  // Predicated region
  $region10: #{csp_block_forward.11} parent=0 // pred_check
    _
  $region11: #{csp_block_forward.11} parent=0 // pred_check_branch
    %15 = sbr.rel (0) target = $region13
  $region12: #{csp_block_forward.11} parent=0 // pred_region
    _
  $region13: #{csp_block_forward.11} parent=0 // pred_fallthru
    _
  // Predicated region
  $region14: #{csp_block_forward.11} parent=0 // pred_check
    _
  $region15: #{csp_block_forward.11} parent=0 // pred_check_branch
    %17 = sbr.rel (0) target = $region17
  $region16: #{csp_block_forward.11} parent=0 // pred_region
    _
  $region17: #{csp_block_forward.11} parent=0 // pred_fallthru
    _
  // Predicated region
  $region18: #{csp_block_forward.11} parent=0 // pred_check
    _
  $region19: #{csp_block_forward.11} parent=0 // pred_check_branch
    %19 = sbr.rel (0) target = $region21
  $region20: #{csp_block_forward.11} parent=0 // pred_region
    _
  $region21: #{csp_block_forward.11} parent=0 // pred_fallthru
    _
  %v21 = vld [vmem:[%s0] sm:$0xf]
  %v22 = vld [vmem:[%s0 + $0x4] sm:$0xf]
  %v23 = vld [vmem:[%s0 + $0x8] sm:$0xf]
  %v24 = vld [vmem:[%s0 + $0xc] sm:$0xf]
  %v25 = vld [vmem:[%s0 + $0x10] sm:$0xf]
  %v26 = vld [vmem:[%s0 + $0x14] sm:$0xf]
  %v27 = vld [vmem:[%s0 + $0x18] sm:$0xf]
  %v28 = vld [vmem:[%s0 + $0x1c] sm:$0xf]
  %v29 = vld [vmem:[%s0 + $0x20] sm:$0xf]
  %v30 = vld [vmem:[%s0 + $0x24] sm:$0xf]
  %v31 = vld [vmem:[%s0 + $0x28] sm:$0xf]
  %v32 = vld [vmem:[%s0 + $0x2c] sm:$0xf]
  %v33 = vld [vmem:[%s0 + $0x30] sm:$0xf]
  %v34 = vld [vmem:[%s0 + $0x34] sm:$0xf]
  %v35 = vld [vmem:[%s0 + $0x38] sm:$0xf]
  %v36 = vld [vmem:[%s0 + $0x3c] sm:$0xf]
  %v37 = vld [vmem:[%s2] sm:$0xf]
  %v38 = vld [vmem:[%s1] sm:$0xf]
  %v39 = vld [vmem:[%s1 + $0x4] sm:$0xf]
  %v40 = vld [vmem:[%s1 + $0x8] sm:$0xf]
  %v41 = vld [vmem:[%s1 + $0xc] sm:$0xf]
  %v42 = vld [vmem:[%s1 + $0x10] sm:$0xf]
  %v43 = vld [vmem:[%s1 + $0x14] sm:$0xf]
  %v44 = vld [vmem:[%s1 + $0x18] sm:$0xf]
  %v45 = vld [vmem:[%s1 + $0x1c] sm:$0xf]
  %v46 = vld [vmem:[%s1 + $0x20] sm:$0xf]
  %v47 = vld [vmem:[%s1 + $0x24] sm:$0xf]
  %v48 = vld [vmem:[%s1 + $0x28] sm:$0xf]
  %v49 = vld [vmem:[%s1 + $0x2c] sm:$0xf]
  %v50 = vld [vmem:[%s1 + $0x30] sm:$0xf]
  %v51 = vld [vmem:[%s1 + $0x34] sm:$0xf]
  %v52 = vld [vmem:[%s1 + $0x38] sm:$0xf]
  %v53 = vld [vmem:[%s1 + $0x3c] sm:$0xf]
  %v54 = vld [vmem:[%s3] sm:$0xf]
  %v71 = vunpack.c.l.b16 %v38
  %v72 = vunpack.c.l.b16 %v39
  %v73 = vunpack.c.l.b16 %v40
  %v74 = vunpack.c.l.b16 %v41
  %v75 = vunpack.c.l.b16 %v42
  %v76 = vunpack.c.l.b16 %v43
  %v77 = vunpack.c.l.b16 %v44
  %v78 = vunpack.c.l.b16 %v45
  %v79 = vunpack.c.l.b16 %v46
  %v80 = vunpack.c.l.b16 %v47
  %v81 = vunpack.c.l.b16 %v48
  %v82 = vunpack.c.l.b16 %v49
  %v83 = vunpack.c.l.b16 %v50
  %v84 = vunpack.c.l.b16 %v51
  %v85 = vunpack.c.l.b16 %v52
  %v86 = vunpack.c.l.b16 %v53
  %v87 = vpack.c.b16 %v72, %v71
  %v88 = vpack.c.b16 %v74, %v73
  %v89 = vpack.c.b16 %v76, %v75
  %v90 = vpack.c.b16 %v78, %v77
  %v91 = vpack.c.b16 %v80, %v79
  %v92 = vpack.c.b16 %v82, %v81
  %v93 = vpack.c.b16 %v84, %v83
  %v94 = vpack.c.b16 %v86, %v85
  %vm95 = vcmask 64512
  %v97 = vsel %vm95, %v87, 0
  %v100 = vsel %vm95, %v88, 0
  %v103 = vsel %vm95, %v89, 0
  %v106 = vsel %vm95, %v90, 0
  %v109 = vsel %vm95, %v91, 0
  %v112 = vsel %vm95, %v92, 0
  %v115 = vsel %vm95, %v93, 0
  %v118 = vsel %vm95, %v94, 0
  %vm120 = vcmask 1043456
  %v122 = vsel %vm120, %v54, 0
  %124 = vmatpush.bf16.msra.mxu0 0
  %125 = vmatpush.bf16.msra.mxu0 0
  %126 = vmatpush.bf16.msra.mxu0 0
  %127 = vmatpush.bf16.msra.mxu0 0
  %128 = vmatpush.bf16.msra.mxu0 0
  %129 = vmatpush.bf16.msra.mxu0 0
  %130 = vmatpush.bf16.msra.mxu0 0
  %131 = vmatpush.bf16.msra.mxu0 %v122
  %132 = vmatmul.bf16.gmra.mxu0 %v97
  %v133 = vpop.f32.mrf.mxu0
  %v134 = vadd.f32 0.0, %v133
  %v135 = vpop.f32.mrf.mxu0
  %v136 = vadd.f32 0.0, %v135
  %137 = vmatmul.bf16.gmra.mxu0 %v100
  %v138 = vpop.f32.mrf.mxu0
  %v139 = vadd.f32 0.0, %v138
  %v140 = vpop.f32.mrf.mxu0
  %v141 = vadd.f32 0.0, %v140
  %142 = vmatmul.bf16.gmra.mxu0 %v103
  %v143 = vpop.f32.mrf.mxu0
  %v144 = vadd.f32 0.0, %v143
  %v145 = vpop.f32.mrf.mxu0
  %v146 = vadd.f32 0.0, %v145
  %147 = vmatmul.bf16.gmra.mxu0 %v106
  %v148 = vpop.f32.mrf.mxu0
  %v149 = vadd.f32 0.0, %v148
  %v150 = vpop.f32.mrf.mxu0
  %v151 = vadd.f32 0.0, %v150
  %152 = vmatmul.bf16.gmra.mxu0 %v109
  %v153 = vpop.f32.mrf.mxu0
  %v154 = vadd.f32 0.0, %v153
  %v155 = vpop.f32.mrf.mxu0
  %v156 = vadd.f32 0.0, %v155
  %157 = vmatmul.bf16.gmra.mxu0 %v112
  %v158 = vpop.f32.mrf.mxu0
  %v159 = vadd.f32 0.0, %v158
  %v160 = vpop.f32.mrf.mxu0
  %v161 = vadd.f32 0.0, %v160
  %162 = vmatmul.bf16.gmra.mxu0 %v115
  %v163 = vpop.f32.mrf.mxu0
  %v164 = vadd.f32 0.0, %v163
  %v165 = vpop.f32.mrf.mxu0
  %v166 = vadd.f32 0.0, %v165
  %167 = vmatmul.bf16.gmra.mxu0 %v118
  %v168 = vpop.f32.mrf.mxu0
  %v169 = vadd.f32 0.0, %v168
  %v170 = vpop.f32.mrf.mxu0
  %v171 = vadd.f32 0.0, %v170
  %172 = vdwg.mxu0
  %v189 = vunpack.c.l.b16 %v21
  %v190 = vunpack.c.l.b16 %v22
  %v191 = vunpack.c.l.b16 %v23
  %v192 = vunpack.c.l.b16 %v24
  %v193 = vunpack.c.l.b16 %v25
  %v194 = vunpack.c.l.b16 %v26
  %v195 = vunpack.c.l.b16 %v27
  %v196 = vunpack.c.l.b16 %v28
  %v197 = vunpack.c.l.b16 %v29
  %v198 = vunpack.c.l.b16 %v30
  %v199 = vunpack.c.l.b16 %v31
  %v200 = vunpack.c.l.b16 %v32
  %v201 = vunpack.c.l.b16 %v33
  %v202 = vunpack.c.l.b16 %v34
  %v203 = vunpack.c.l.b16 %v35
  %v204 = vunpack.c.l.b16 %v36
  %v205 = vpack.c.b16 %v190, %v189
  %v206 = vpack.c.b16 %v192, %v191
  %v207 = vpack.c.b16 %v194, %v193
  %v208 = vpack.c.b16 %v196, %v195
  %v209 = vpack.c.b16 %v198, %v197
  %v210 = vpack.c.b16 %v200, %v199
  %v211 = vpack.c.b16 %v202, %v201
  %v212 = vpack.c.b16 %v204, %v203
  %v214 = vsel %vm95, %v205, 0
  %v217 = vsel %vm95, %v206, 0
  %v220 = vsel %vm95, %v207, 0
  %v223 = vsel %vm95, %v208, 0
  %v226 = vsel %vm95, %v209, 0
  %v229 = vsel %vm95, %v210, 0
  %v232 = vsel %vm95, %v211, 0
  %v235 = vsel %vm95, %v212, 0
  %v238 = vsel %vm120, %v37, 0
  %240 = vmatpush.bf16.msra.mxu0 0
  %241 = vmatpush.bf16.msra.mxu0 0
  %242 = vmatpush.bf16.msra.mxu0 0
  %243 = vmatpush.bf16.msra.mxu0 0
  %244 = vmatpush.bf16.msra.mxu0 0
  %245 = vmatpush.bf16.msra.mxu0 0
  %246 = vmatpush.bf16.msra.mxu0 0
  %247 = vmatpush.bf16.msra.mxu0 %v238
  %248 = vmatmul.bf16.gmra.mxu0 %v214
  %v249 = vpop.f32.mrf.mxu0
  %v250 = vadd.f32 %v134, %v249
  %v251 = vpop.f32.mrf.mxu0
  %v252 = vadd.f32 %v136, %v251
  %253 = vmatmul.bf16.gmra.mxu0 %v217
  %v254 = vpop.f32.mrf.mxu0
  %v255 = vadd.f32 %v139, %v254
  %v256 = vpop.f32.mrf.mxu0
  %v257 = vadd.f32 %v141, %v256
  %258 = vmatmul.bf16.gmra.mxu0 %v220
  %v259 = vpop.f32.mrf.mxu0
  %v260 = vadd.f32 %v144, %v259
  %v261 = vpop.f32.mrf.mxu0
  %v262 = vadd.f32 %v146, %v261
  %263 = vmatmul.bf16.gmra.mxu0 %v223
  %v264 = vpop.f32.mrf.mxu0
  %v265 = vadd.f32 %v149, %v264
  %v266 = vpop.f32.mrf.mxu0
  %v267 = vadd.f32 %v151, %v266
  %268 = vmatmul.bf16.gmra.mxu0 %v226
  %v269 = vpop.f32.mrf.mxu0
  %v270 = vadd.f32 %v154, %v269
  %v271 = vpop.f32.mrf.mxu0
  %v272 = vadd.f32 %v156, %v271
  %273 = vmatmul.bf16.gmra.mxu0 %v229
  %v274 = vpop.f32.mrf.mxu0
  %v275 = vadd.f32 %v159, %v274
  %v276 = vpop.f32.mrf.mxu0
  %v277 = vadd.f32 %v161, %v276
  %278 = vmatmul.bf16.gmra.mxu0 %v232
  %v279 = vpop.f32.mrf.mxu0
  %v280 = vadd.f32 %v164, %v279
  %v281 = vpop.f32.mrf.mxu0
  %v282 = vadd.f32 %v166, %v281
  %283 = vmatmul.bf16.gmra.mxu0 %v235
  %v284 = vpop.f32.mrf.mxu0
  %v285 = vadd.f32 %v169, %v284
  %v286 = vpop.f32.mrf.mxu0
  %v287 = vadd.f32 %v171, %v286
  %288 = vdwg.mxu0
  %v289 = vld [vmem:[%s4] sm:$0x1]
  %v291 = vperm.slane %v289, 0
  %v293 = vadd.f32 %v250, %v291
  %v294 = vadd.f32 %v252, %v291
  %v295 = vadd.f32 %v255, %v291
  %v296 = vadd.f32 %v257, %v291
  %v297 = vadd.f32 %v260, %v291
  %v298 = vadd.f32 %v262, %v291
  %v299 = vadd.f32 %v265, %v291
  %v300 = vadd.f32 %v267, %v291
  %v301 = vadd.f32 %v270, %v291
  %v302 = vadd.f32 %v272, %v291
  %v303 = vadd.f32 %v275, %v291
  %v304 = vadd.f32 %v277, %v291
  %v305 = vadd.f32 %v280, %v291
  %v306 = vadd.f32 %v282, %v291
  %v307 = vadd.f32 %v285, %v291
  %v308 = vadd.f32 %v287, %v291
  %v309 = vmin.f32 %v293, 20.0
  %v310 = vmin.f32 %v294, 20.0
  %v311 = vmin.f32 %v295, 20.0
  %v312 = vmin.f32 %v296, 20.0
  %v313 = vmin.f32 %v297, 20.0
  %v314 = vmin.f32 %v298, 20.0
  %v315 = vmin.f32 %v299, 20.0
  %v316 = vmin.f32 %v300, 20.0
  %v317 = vmin.f32 %v301, 20.0
  %v318 = vmin.f32 %v302, 20.0
  %v319 = vmin.f32 %v303, 20.0
  %v320 = vmin.f32 %v304, 20.0
  %v321 = vmin.f32 %v305, 20.0
  %v322 = vmin.f32 %v306, 20.0
  %v323 = vmin.f32 %v307, 20.0
  %v324 = vmin.f32 %v308, 20.0
  %v325 = vmul.f32 %v309, 1.442695
  %v326 = vpow.pop %v325
  %v327 = vmul.f32 %v310, 1.442695
  %v328 = vpow.pop %v327
  %v329 = vmul.f32 %v311, 1.442695
  %v330 = vpow.pop %v329
  %v331 = vmul.f32 %v312, 1.442695
  %v332 = vpow.pop %v331
  %v333 = vmul.f32 %v313, 1.442695
  %v334 = vpow.pop %v333
  %v335 = vmul.f32 %v314, 1.442695
  %v336 = vpow.pop %v335
  %v337 = vmul.f32 %v315, 1.442695
  %v338 = vpow.pop %v337
  %v339 = vmul.f32 %v316, 1.442695
  %v340 = vpow.pop %v339
  %v341 = vmul.f32 %v317, 1.442695
  %v342 = vpow.pop %v341
  %v343 = vmul.f32 %v318, 1.442695
  %v344 = vpow.pop %v343
  %v345 = vmul.f32 %v319, 1.442695
  %v346 = vpow.pop %v345
  %v347 = vmul.f32 %v320, 1.442695
  %v348 = vpow.pop %v347
  %v349 = vmul.f32 %v321, 1.442695
  %v350 = vpow.pop %v349
  %v351 = vmul.f32 %v322, 1.442695
  %v352 = vpow.pop %v351
  %v353 = vmul.f32 %v323, 1.442695
  %v354 = vpow.pop %v353
  %v355 = vmul.f32 %v324, 1.442695
  %v356 = vpow.pop %v355
  %v357 = vadd.f32 %v326, 2.0
  %v358 = vadd.f32 %v328, 2.0
  %v359 = vadd.f32 %v330, 2.0
  %v360 = vadd.f32 %v332, 2.0
  %v361 = vadd.f32 %v334, 2.0
  %v362 = vadd.f32 %v336, 2.0
  %v363 = vadd.f32 %v338, 2.0
  %v364 = vadd.f32 %v340, 2.0
  %v365 = vadd.f32 %v342, 2.0
  %v366 = vadd.f32 %v344, 2.0
  %v367 = vadd.f32 %v346, 2.0
  %v368 = vadd.f32 %v348, 2.0
  %v369 = vadd.f32 %v350, 2.0
  %v370 = vadd.f32 %v352, 2.0
  %v371 = vadd.f32 %v354, 2.0
  %v372 = vadd.f32 %v356, 2.0
  %v373 = vmul.f32 %v326, %v357
  %v374 = vmul.f32 %v328, %v358
  %v375 = vmul.f32 %v330, %v359
  %v376 = vmul.f32 %v332, %v360
  %v377 = vmul.f32 %v334, %v361
  %v378 = vmul.f32 %v336, %v362
  %v379 = vmul.f32 %v338, %v363
  %v380 = vmul.f32 %v340, %v364
  %v381 = vmul.f32 %v342, %v365
  %v382 = vmul.f32 %v344, %v366
  %v383 = vmul.f32 %v346, %v367
  %v384 = vmul.f32 %v348, %v368
  %v385 = vmul.f32 %v350, %v369
  %v386 = vmul.f32 %v352, %v370
  %v387 = vmul.f32 %v354, %v371
  %v388 = vmul.f32 %v356, %v372
  %vm389 = vcmp.gt.f32.partialorder %v293, 20.0
  %vm390 = vcmp.gt.f32.partialorder %v294, 20.0
  %vm391 = vcmp.gt.f32.partialorder %v295, 20.0
  %vm392 = vcmp.gt.f32.partialorder %v296, 20.0
  %vm393 = vcmp.gt.f32.partialorder %v297, 20.0
  %vm394 = vcmp.gt.f32.partialorder %v298, 20.0
  %vm395 = vcmp.gt.f32.partialorder %v299, 20.0
  %vm396 = vcmp.gt.f32.partialorder %v300, 20.0
  %vm397 = vcmp.gt.f32.partialorder %v301, 20.0
  %vm398 = vcmp.gt.f32.partialorder %v302, 20.0
  %vm399 = vcmp.gt.f32.partialorder %v303, 20.0
  %vm400 = vcmp.gt.f32.partialorder %v304, 20.0
  %vm401 = vcmp.gt.f32.partialorder %v305, 20.0
  %vm402 = vcmp.gt.f32.partialorder %v306, 20.0
  %vm403 = vcmp.gt.f32.partialorder %v307, 20.0
  %vm404 = vcmp.gt.f32.partialorder %v308, 20.0
  %v405 = vmul.f32 %v293, %v373
  %v406 = vmul.f32 %v294, %v374
  %v407 = vmul.f32 %v295, %v375
  %v408 = vmul.f32 %v296, %v376
  %v409 = vmul.f32 %v297, %v377
  %v410 = vmul.f32 %v298, %v378
  %v411 = vmul.f32 %v299, %v379
  %v412 = vmul.f32 %v300, %v380
  %v413 = vmul.f32 %v301, %v381
  %v414 = vmul.f32 %v302, %v382
  %v415 = vmul.f32 %v303, %v383
  %v416 = vmul.f32 %v304, %v384
  %v417 = vmul.f32 %v305, %v385
  %v418 = vmul.f32 %v306, %v386
  %v419 = vmul.f32 %v307, %v387
  %v420 = vmul.f32 %v308, %v388
  %v421 = vadd.f32 %v373, 2.0
  %v422 = vadd.f32 %v374, 2.0
  %v423 = vadd.f32 %v375, 2.0
  %v424 = vadd.f32 %v376, 2.0
  %v425 = vadd.f32 %v377, 2.0
  %v426 = vadd.f32 %v378, 2.0
  %v427 = vadd.f32 %v379, 2.0
  %v428 = vadd.f32 %v380, 2.0
  %v429 = vadd.f32 %v381, 2.0
  %v430 = vadd.f32 %v382, 2.0
  %v431 = vadd.f32 %v383, 2.0
  %v432 = vadd.f32 %v384, 2.0
  %v433 = vadd.f32 %v385, 2.0
  %v434 = vadd.f32 %v386, 2.0
  %v435 = vadd.f32 %v387, 2.0
  %v436 = vadd.f32 %v388, 2.0
  %v437 = vrcp.pop %v421
  %v438 = vrcp.pop %v422
  %v439 = vrcp.pop %v423
  %v440 = vrcp.pop %v424
  %v441 = vrcp.pop %v425
  %v442 = vrcp.pop %v426
  %v443 = vrcp.pop %v427
  %v444 = vrcp.pop %v428
  %v445 = vrcp.pop %v429
  %v446 = vrcp.pop %v430
  %v447 = vrcp.pop %v431
  %v448 = vrcp.pop %v432
  %v449 = vrcp.pop %v433
  %v450 = vrcp.pop %v434
  %v451 = vrcp.pop %v435
  %v452 = vrcp.pop %v436
  %v453 = vmul.f32 %v405, %v437
  %v454 = vmul.f32 %v406, %v438
  %v455 = vmul.f32 %v407, %v439
  %v456 = vmul.f32 %v408, %v440
  %v457 = vmul.f32 %v409, %v441
  %v458 = vmul.f32 %v410, %v442
  %v459 = vmul.f32 %v411, %v443
  %v460 = vmul.f32 %v412, %v444
  %v461 = vmul.f32 %v413, %v445
  %v462 = vmul.f32 %v414, %v446
  %v463 = vmul.f32 %v415, %v447
  %v464 = vmul.f32 %v416, %v448
  %v465 = vmul.f32 %v417, %v449
  %v466 = vmul.f32 %v418, %v450
  %v467 = vmul.f32 %v419, %v451
  %v468 = vmul.f32 %v420, %v452
  %v469 = vsel %vm389, %v293, %v453
  %v470 = vsel %vm390, %v294, %v454
  %v471 = vsel %vm391, %v295, %v455
  %v472 = vsel %vm392, %v296, %v456
  %v473 = vsel %vm393, %v297, %v457
  %v474 = vsel %vm394, %v298, %v458
  %v475 = vsel %vm395, %v299, %v459
  %v476 = vsel %vm396, %v300, %v460
  %v477 = vsel %vm397, %v301, %v461
  %v478 = vsel %vm398, %v302, %v462
  %v479 = vsel %vm399, %v303, %v463
  %v480 = vsel %vm400, %v304, %v464
  %v481 = vsel %vm401, %v305, %v465
  %v482 = vsel %vm402, %v306, %v466
  %v483 = vsel %vm403, %v307, %v467
  %v484 = vsel %vm404, %v308, %v468
  %v485 = vpack.c.bf16 %v469, %v469
  %v486 = vpack.c.bf16 %v470, %v470
  %v487 = vpack.c.bf16 %v471, %v471
  %v488 = vpack.c.bf16 %v472, %v472
  %v489 = vpack.c.bf16 %v473, %v473
  %v490 = vpack.c.bf16 %v474, %v474
  %v491 = vpack.c.bf16 %v475, %v475
  %v492 = vpack.c.bf16 %v476, %v476
  %v493 = vpack.c.bf16 %v477, %v477
  %v494 = vpack.c.bf16 %v478, %v478
  %v495 = vpack.c.bf16 %v479, %v479
  %v496 = vpack.c.bf16 %v480, %v480
  %v497 = vpack.c.bf16 %v481, %v481
  %v498 = vpack.c.bf16 %v482, %v482
  %v499 = vpack.c.bf16 %v483, %v483
  %v500 = vpack.c.bf16 %v484, %v484
  %vm501 = vcmask 60416
  %502 = vst.msk [vmem:[%s5] sm:$0xf] %vm501, %v485
  %503 = vst.msk [vmem:[%s5 + $0x4] sm:$0xf] %vm501, %v486
  %504 = vst.msk [vmem:[%s5 + $0x8] sm:$0xf] %vm501, %v487
  %505 = vst.msk [vmem:[%s5 + $0xc] sm:$0xf] %vm501, %v488
  %506 = vst.msk [vmem:[%s5 + $0x10] sm:$0xf] %vm501, %v489
  %507 = vst.msk [vmem:[%s5 + $0x14] sm:$0xf] %vm501, %v490
  %508 = vst.msk [vmem:[%s5 + $0x18] sm:$0xf] %vm501, %v491
  %509 = vst.msk [vmem:[%s5 + $0x1c] sm:$0xf] %vm501, %v492
  %510 = vst.msk [vmem:[%s5 + $0x20] sm:$0xf] %vm501, %v493
  %511 = vst.msk [vmem:[%s5 + $0x24] sm:$0xf] %vm501, %v494
  %512 = vst.msk [vmem:[%s5 + $0x28] sm:$0xf] %vm501, %v495
  %513 = vst.msk [vmem:[%s5 + $0x2c] sm:$0xf] %vm501, %v496
  %514 = vst.msk [vmem:[%s5 + $0x30] sm:$0xf] %vm501, %v497
  %515 = vst.msk [vmem:[%s5 + $0x34] sm:$0xf] %vm501, %v498
  %516 = vst.msk [vmem:[%s5 + $0x38] sm:$0xf] %vm501, %v499
  %517 = vst.msk [vmem:[%s5 + $0x3c] sm:$0xf] %vm501, %v500
  // Predicated region
  $region22: #{csp_block_forward.11} parent=0 // pred_check
    _
  $region23: #{csp_block_forward.11} parent=0 // pred_check_branch
    %519 = sbr.rel (0) target = $region25
  $region24: #{csp_block_forward.11} parent=0 // pred_region
    _
  $region25: #{csp_block_forward.11} parent=0 // pred_fallthru
    _
  // Predicated region
  $region26: #{csp_block_forward.11} parent=0 // pred_check
    _
  $region27: #{csp_block_forward.11} parent=0 // pred_check_branch
    %521 = sbr.rel (0) target = $region29
  $region28: #{csp_block_forward.11} parent=0 // pred_region
    _
  $region29: #{csp_block_forward.11} parent=0 // pred_fallthru
    _

</llo_original>
